<compile_context>
chip_gen: v6e
topology: v6e:2x2x1
jax: 0.10.0
libtpu: 0.0.40
codegen_flags: <defaults>
</compile_context>

<pallas_src>
import functools

import jax
import jax.numpy as jnp
import numpy as np
from jax.experimental import pallas as pl
from jax.experimental.pallas import tpu as pltpu

NEG_SLOPE = 0.01  # PyTorch nn.LeakyReLU default


# ------------------------------ fused kernel --------------------------------

def _qnet_fused_kernel(x_ref, m_ref, w1_ref, b1_ref, w2_ref, b2_ref,
                       selg_ref, w3_ref, const_ref, o_ref, *, offs, pad):
    """Fused QNet forward.

    x_ref    : (BP, Cin)        f32   NHWC pixels, batch folded into rows (BP=B*H*W)
    m_ref    : (9, BP, 1)       f32   0/1 border-validity mask per 3x3 tap
    w1_ref   : (9, Cin, 128)    bf16  conv1 weights, tap-major
    b1_ref   : (1, 128)         f32
    w2_ref   : (9*128, 256)     bf16  conv2 weights, tap-major im2col layout
    b2_ref   : (1, 256)         f32
    selg_ref : (9, B, BP)       bf16  wq-weighted pixel selection per tap (conv3+gather+Linear fold)
    w3_ref   : (9, 1, 256)      f32   conv3 weights, tap-major (Cout=1 folded away)
    const_ref: (1, 1)           f32   bq + b3 * sum(wq)
    o_ref    : (B, 1)           f32   Q values
    """
    f32, bf16 = jnp.float32, jnp.bfloat16

    def shifted_taps(h):
        # h: (BP, C) f32 -> 9 bf16 (BP, C) arrays with tap_t[r] = h[r + off_t]
        # for spatially-valid rows and 0 otherwise (masks kill border rows).
        bp, c = h.shape
        z = jnp.zeros((pad, c), f32)
        hp = jnp.concatenate([z, h, z], axis=0)            # (BP + 2*pad, C)
        taps = []
        for t, off in enumerate(offs):                     # static unroll (9 taps)
            start = pad + off
            taps.append((hp[start:start + bp, :] * m_ref[t]).astype(bf16))
        return taps

    def leaky(a, slope):
        return jnp.where(a >= 0, a, slope * a)

    # ---- conv1 (Cin=4): per-tap matmuls, K too small to benefit from fusion.
    x = x_ref[...]                                          # (BP, Cin) f32
    c1 = w1_ref.shape[2]
    acc1 = jnp.zeros((x.shape[0], c1), f32)
    for t, tap in enumerate(shifted_taps(x)):
        acc1 = acc1 + jnp.dot(tap, w1_ref[t], preferred_element_type=f32)
    h1 = leaky(acc1 + b1_ref[...], NEG_SLOPE)               # (BP, 128) f32

    # ---- conv2: one in-register im2col matmul, K = 9*128 = 1152 (lane-aligned).
    h9 = jnp.concatenate(shifted_taps(h1), axis=-1)         # (BP, 1152) bf16
    acc2 = jnp.dot(h9, w2_ref[...], preferred_element_type=f32)
    h2 = leaky(acc2 + b2_ref[...], NEG_SLOPE)               # (BP, 256) f32

    # ---- conv3 + gather at valid pixels + Linear(nValidAct, 1), folded:
    #   q[b] = sum_t sum_c (SelG_t @ h2)[b, c] * w3[t, c] + (bq + b3 * sum(wq))
    h2b = h2.astype(bf16)
    nb = selg_ref.shape[1]
    c2 = w3_ref.shape[2]
    ssum = jnp.zeros((nb, c2), f32)
    for t in range(9):
        ssum = ssum + jnp.dot(selg_ref[t], h2b, preferred_element_type=f32) * w3_ref[t]
    q = jnp.sum(ssum, axis=-1, keepdims=True) + const_ref[...]   # (B, 1)
    o_ref[...] = q.astype(o_ref.dtype)


# --------------------------- setup-time folding ------------------------------

def _tap_offsets(w):
    # tap t = dy*3 + dx maps output row r to input row r + (dy-1)*W + (dx-1)
    return tuple((dy - 1) * w + (dx - 1) for dy in range(3) for dx in range(3))


def _tap_masks(batch, h, w):
    """(9, B*H*W, 1) 0/1 masks: 1 iff the shifted pixel stays inside the image."""
    m = np.zeros((9, batch * h * w, 1), np.float32)
    for dy in range(3):
        for dx in range(3):
            t = dy * 3 + dx
            for i in range(h):
                if not (0 <= i + dy - 1 < h):
                    continue
                for j in range(w):
                    if 0 <= j + dx - 1 < w:
                        for b in range(batch):
                            m[t, b * h * w + i * w + j, 0] = 1.0
    return m


def _selection_fold(wq, xvalid, yvalid, batch, h, w):
    """(9, B, B*H*W): wq-weighted selection of conv3 receptive-field rows per tap."""
    p = h * w
    xv = np.asarray(xvalid)
    yv = np.asarray(yvalid)
    wqv = np.asarray(wq).reshape(-1)
    selg = np.zeros((9, batch, batch * p), np.float32)
    for dy in range(3):
        for dx in range(3):
            t = dy * 3 + dx
            for v in range(xv.shape[0]):
                ii, jj = int(xv[v]) + dy - 1, int(yv[v]) + dx - 1
                if 0 <= ii < h and 0 <= jj < w:
                    for b in range(batch):
                        selg[t, b, b * p + ii * w + jj] += wqv[v]
    return selg


def prepare_qnet(params, xvalid, yvalid, batch, h, w):
    """One-time folding of weights / indices into kernel-ready operands."""
    cin = params["w1"].shape[2]
    c1 = params["w1"].shape[3]
    c2 = params["w2"].shape[3]
    const = params["bq"] + params["b3"].reshape(()) * jnp.sum(params["wq"])
    return {
        "masks": jnp.asarray(_tap_masks(batch, h, w)),
        "w1": jnp.asarray(params["w1"]).reshape(9, cin, c1).astype(jnp.bfloat16),
        "b1": params["b1"].astype(jnp.float32),
        "w2": jnp.asarray(params["w2"]).reshape(9 * c1, c2).astype(jnp.bfloat16),
        "b2": params["b2"].astype(jnp.float32),
        "selg": jnp.asarray(
            _selection_fold(params["wq"], xvalid, yvalid, batch, h, w)
        ).astype(jnp.bfloat16),
        "w3": jnp.asarray(params["w3"]).reshape(9, 1, c2).astype(jnp.float32),
        "const": const.astype(jnp.float32),
    }


# -------------------------------- forward -----------------------------------

def qnet_forward(prep, state_nchw, action_nchw):
    """Pallas implementation of QNet.forward(state, action) -> (B, 1)."""
    x = jnp.concatenate([state_nchw, action_nchw], axis=1)   # cat on channels
    x = jnp.transpose(x, (0, 2, 3, 1))                       # NCHW -> NHWC
    b, h, w, cin = x.shape
    x_flat = x.reshape(b * h * w, cin).astype(jnp.float32)   # batch folded into M

    offs = _tap_offsets(w)
    pad = ((w + 1 + 7) // 8) * 8          # >= max |offset|, sublane-aligned
    nb = prep["selg"].shape[1]

    vmem = pl.BlockSpec(memory_space=pltpu.MemorySpace.VMEM)
    kernel = functools.partial(_qnet_fused_kernel, offs=offs, pad=pad)
    return pl.pallas_call(
        kernel,
        out_shape=jax.ShapeDtypeStruct((nb, 1), jnp.float32),
        in_specs=[vmem] * 9,
        out_specs=vmem,
    )(x_flat, prep["masks"], prep["w1"], prep["b1"], prep["w2"], prep["b2"],
      prep["selg"], prep["w3"], prep["const"])


# ---------------------------- pure-JAX reference -----------------------------

def qnet_reference(params, state_nchw, action_nchw, xvalid, yvalid):
    x = jnp.concatenate([state_nchw, action_nchw], axis=1)
    x = jnp.transpose(x, (0, 2, 3, 1))

    def conv(h, w, b):
        y = jax.lax.conv_general_dilated(
            h, w, window_strides=(1, 1), padding=((1, 1), (1, 1)),
            dimension_numbers=("NHWC", "HWIO", "NHWC"),
            precision=jax.lax.Precision.HIGHEST)
        return y + b.reshape(1, 1, 1, -1)

    h = jax.nn.leaky_relu(conv(x, params["w1"], params["b1"]), NEG_SLOPE)
    h = jax.nn.leaky_relu(conv(h, params["w2"], params["b2"]), NEG_SLOPE)
    h = conv(h, params["w3"], params["b3"])[..., 0]            # (B, H, W)
    out_sel = h[:, xvalid, yvalid]                             # (B, nValidAct)
    return out_sel @ params["wq"] + params["bq"]


# ------------------------------ parameter init -------------------------------

def init_params(key, cin, n_valid_act):
    ks = jax.random.split(key, 8)

    def rnd(k, shape, scale):
        return (scale * jax.random.normal(k, shape)).astype(jnp.float32)

    return {
        # conv weights in HWIO; reshaped to tap-major layouts at setup
        "w1": rnd(ks[0], (3, 3, cin, 128), 0.10),
        "b1": rnd(ks[1], (1, 128), 0.05),
        "w2": rnd(ks[2], (3, 3, 128, 256), 0.05),
        "b2": rnd(ks[3], (1, 256), 0.05),
        "w3": rnd(ks[4], (3, 3, 256, 1), 0.05),
        "b3": rnd(ks[5], (1, 1), 0.05),
        "wq": rnd(ks[6], (n_valid_act, 1), 0.10),
        "bq": rnd(ks[7], (1, 1), 0.05),
    }


# ---------------------------------- main -------------------------------------

if __name__ == "__main__":
    B, C_state, H, W = 2, 3, 8, 8          # state_dim = (3, 8, 8)
    n_valid_act = 10

    key = jax.random.PRNGKey(0)
    k_state, k_action, k_params, k_ix, k_iy = jax.random.split(key, 5)

    state = jax.random.normal(k_state, (B, C_state, H, W), jnp.float32)
    action = jax.random.normal(k_action, (B, 1, H, W), jnp.float32)
    xvalid = jax.random.randint(k_ix, (n_valid_act,), 0, H)
    yvalid = jax.random.randint(k_iy, (n_valid_act,), 0, W)

    params = init_params(k_params, C_state + 1, n_valid_act)

    # one-time setup: border masks, tap-major weights, folded gather+Linear
    prep = prepare_qnet(params, xvalid, yvalid, B, H, W)

    fwd = jax.jit(qnet_forward)
    q_vals = fwd(prep, state, action)
    q_vals = jax.block_until_ready(q_vals)
    assert q_vals.shape == (B, 1)

    q_ref = qnet_reference(params, state, action, xvalid, yvalid)
    np.testing.assert_allclose(np.asarray(q_vals), np.asarray(q_ref),
                               rtol=2e-2, atol=2e-2)
    print("KERNEL_OK")
</pallas_src>

<mosaic_0001>
module attributes {stable_mosaic.version = 11 : i64} {
  func.func @_qnet_fused_kernel(%arg0: memref<128x4xf32, #tpu.memory_space<vmem>>, %arg1: memref<9x128x1xf32, #tpu.memory_space<vmem>>, %arg2: memref<9x4x128xbf16, #tpu.memory_space<vmem>>, %arg3: memref<1x128xf32, #tpu.memory_space<vmem>>, %arg4: memref<1152x256xbf16, #tpu.memory_space<vmem>>, %arg5: memref<1x256xf32, #tpu.memory_space<vmem>>, %arg6: memref<9x2x128xbf16, #tpu.memory_space<vmem>>, %arg7: memref<9x1x256xf32, #tpu.memory_space<vmem>>, %arg8: memref<1x1xf32, #tpu.memory_space<vmem>>, %arg9: memref<2x1xf32, #tpu.memory_space<vmem>>) attributes {dimension_semantics = [], scalar_prefetch = 0 : i64, scratch_operands = 0 : i64, tpu.core_type = #tpu.core_type<tc>} {
    %c0 = arith.constant 0 : index
    %c0_0 = arith.constant 0 : index
    %0 = vector.load %arg0[%c0, %c0_0] : memref<128x4xf32, #tpu.memory_space<vmem>>, vector<128x4xf32>
    %cst = arith.constant 0.000000e+00 : f32
    %1 = vector.broadcast %cst : f32 to vector<128x128xf32>
    %cst_1 = arith.constant 0.000000e+00 : f32
    %2 = vector.broadcast %cst_1 : f32 to vector<16x4xf32>
    %3 = tpu.concatenate %2, %0, %2 in 0 : vector<16x4xf32>, vector<128x4xf32>, vector<16x4xf32> -> vector<160x4xf32>
    %4 = vector.extract_strided_slice %3 {offsets = [7, 0], sizes = [128, 4], strides = [1, 1]} : vector<160x4xf32> to vector<128x4xf32>
    %c0_2 = arith.constant 0 : index
    %c0_3 = arith.constant 0 : index
    %c0_4 = arith.constant 0 : index
    %5 = vector.load %arg1[%c0_2, %c0_3, %c0_4] : memref<9x128x1xf32, #tpu.memory_space<vmem>>, vector<1x128x1xf32>
    %6 = vector.shape_cast %5 : vector<1x128x1xf32> to vector<128x1xf32>
    %7 = vector.broadcast %6 : vector<128x1xf32> to vector<128x4xf32>
    %8 = arith.mulf %4, %7 : vector<128x4xf32>
    %9 = arith.truncf %8 : vector<128x4xf32> to vector<128x4xbf16>
    %10 = vector.extract_strided_slice %3 {offsets = [8, 0], sizes = [128, 4], strides = [1, 1]} : vector<160x4xf32> to vector<128x4xf32>
    %c1 = arith.constant 1 : index
    %c0_5 = arith.constant 0 : index
    %c0_6 = arith.constant 0 : index
    %11 = vector.load %arg1[%c1, %c0_5, %c0_6] : memref<9x128x1xf32, #tpu.memory_space<vmem>>, vector<1x128x1xf32>
    %12 = vector.shape_cast %11 : vector<1x128x1xf32> to vector<128x1xf32>
    %13 = vector.broadcast %12 : vector<128x1xf32> to vector<128x4xf32>
    %14 = arith.mulf %10, %13 : vector<128x4xf32>
    %15 = arith.truncf %14 : vector<128x4xf32> to vector<128x4xbf16>
    %16 = vector.extract_strided_slice %3 {offsets = [9, 0], sizes = [128, 4], strides = [1, 1]} : vector<160x4xf32> to vector<128x4xf32>
    %c2 = arith.constant 2 : index
    %c0_7 = arith.constant 0 : index
    %c0_8 = arith.constant 0 : index
    %17 = vector.load %arg1[%c2, %c0_7, %c0_8] : memref<9x128x1xf32, #tpu.memory_space<vmem>>, vector<1x128x1xf32>
    %18 = vector.shape_cast %17 : vector<1x128x1xf32> to vector<128x1xf32>
    %19 = vector.broadcast %18 : vector<128x1xf32> to vector<128x4xf32>
    %20 = arith.mulf %16, %19 : vector<128x4xf32>
    %21 = arith.truncf %20 : vector<128x4xf32> to vector<128x4xbf16>
    %22 = vector.extract_strided_slice %3 {offsets = [15, 0], sizes = [128, 4], strides = [1, 1]} : vector<160x4xf32> to vector<128x4xf32>
    %c3 = arith.constant 3 : index
    %c0_9 = arith.constant 0 : index
    %c0_10 = arith.constant 0 : index
    %23 = vector.load %arg1[%c3, %c0_9, %c0_10] : memref<9x128x1xf32, #tpu.memory_space<vmem>>, vector<1x128x1xf32>
    %24 = vector.shape_cast %23 : vector<1x128x1xf32> to vector<128x1xf32>
    %25 = vector.broadcast %24 : vector<128x1xf32> to vector<128x4xf32>
    %26 = arith.mulf %22, %25 : vector<128x4xf32>
    %27 = arith.truncf %26 : vector<128x4xf32> to vector<128x4xbf16>
    %28 = vector.extract_strided_slice %3 {offsets = [16, 0], sizes = [128, 4], strides = [1, 1]} : vector<160x4xf32> to vector<128x4xf32>
    %c4 = arith.constant 4 : index
    %c0_11 = arith.constant 0 : index
    %c0_12 = arith.constant 0 : index
    %29 = vector.load %arg1[%c4, %c0_11, %c0_12] : memref<9x128x1xf32, #tpu.memory_space<vmem>>, vector<1x128x1xf32>
    %30 = vector.shape_cast %29 : vector<1x128x1xf32> to vector<128x1xf32>
    %31 = vector.broadcast %30 : vector<128x1xf32> to vector<128x4xf32>
    %32 = arith.mulf %28, %31 : vector<128x4xf32>
    %33 = arith.truncf %32 : vector<128x4xf32> to vector<128x4xbf16>
    %34 = vector.extract_strided_slice %3 {offsets = [17, 0], sizes = [128, 4], strides = [1, 1]} : vector<160x4xf32> to vector<128x4xf32>
    %c5 = arith.constant 5 : index
    %c0_13 = arith.constant 0 : index
    %c0_14 = arith.constant 0 : index
    %35 = vector.load %arg1[%c5, %c0_13, %c0_14] : memref<9x128x1xf32, #tpu.memory_space<vmem>>, vector<1x128x1xf32>
    %36 = vector.shape_cast %35 : vector<1x128x1xf32> to vector<128x1xf32>
    %37 = vector.broadcast %36 : vector<128x1xf32> to vector<128x4xf32>
    %38 = arith.mulf %34, %37 : vector<128x4xf32>
    %39 = arith.truncf %38 : vector<128x4xf32> to vector<128x4xbf16>
    %40 = vector.extract_strided_slice %3 {offsets = [23, 0], sizes = [128, 4], strides = [1, 1]} : vector<160x4xf32> to vector<128x4xf32>
    %c6 = arith.constant 6 : index
    %c0_15 = arith.constant 0 : index
    %c0_16 = arith.constant 0 : index
    %41 = vector.load %arg1[%c6, %c0_15, %c0_16] : memref<9x128x1xf32, #tpu.memory_space<vmem>>, vector<1x128x1xf32>
    %42 = vector.shape_cast %41 : vector<1x128x1xf32> to vector<128x1xf32>
    %43 = vector.broadcast %42 : vector<128x1xf32> to vector<128x4xf32>
    %44 = arith.mulf %40, %43 : vector<128x4xf32>
    %45 = arith.truncf %44 : vector<128x4xf32> to vector<128x4xbf16>
    %46 = vector.extract_strided_slice %3 {offsets = [24, 0], sizes = [128, 4], strides = [1, 1]} : vector<160x4xf32> to vector<128x4xf32>
    %c7 = arith.constant 7 : index
    %c0_17 = arith.constant 0 : index
    %c0_18 = arith.constant 0 : index
    %47 = vector.load %arg1[%c7, %c0_17, %c0_18] : memref<9x128x1xf32, #tpu.memory_space<vmem>>, vector<1x128x1xf32>
    %48 = vector.shape_cast %47 : vector<1x128x1xf32> to vector<128x1xf32>
    %49 = vector.broadcast %48 : vector<128x1xf32> to vector<128x4xf32>
    %50 = arith.mulf %46, %49 : vector<128x4xf32>
    %51 = arith.truncf %50 : vector<128x4xf32> to vector<128x4xbf16>
    %52 = vector.extract_strided_slice %3 {offsets = [25, 0], sizes = [128, 4], strides = [1, 1]} : vector<160x4xf32> to vector<128x4xf32>
    %c8 = arith.constant 8 : index
    %c0_19 = arith.constant 0 : index
    %c0_20 = arith.constant 0 : index
    %53 = vector.load %arg1[%c8, %c0_19, %c0_20] : memref<9x128x1xf32, #tpu.memory_space<vmem>>, vector<1x128x1xf32>
    %54 = vector.shape_cast %53 : vector<1x128x1xf32> to vector<128x1xf32>
    %55 = vector.broadcast %54 : vector<128x1xf32> to vector<128x4xf32>
    %56 = arith.mulf %52, %55 : vector<128x4xf32>
    %57 = arith.truncf %56 : vector<128x4xf32> to vector<128x4xbf16>
    %c0_21 = arith.constant 0 : index
    %c0_22 = arith.constant 0 : index
    %c0_23 = arith.constant 0 : index
    %58 = vector.load %arg2[%c0_21, %c0_22, %c0_23] : memref<9x4x128xbf16, #tpu.memory_space<vmem>>, vector<1x4x128xbf16>
    %59 = vector.shape_cast %58 : vector<1x4x128xbf16> to vector<4x128xbf16>
    %cst_24 = arith.constant dense<0.000000e+00> : vector<128x128xf32>
    %60 = tpu.matmul %9, %59, %cst_24 {dimension_numbers = #tpu.dot_dimension_numbers<[1], [0], [0], [1], [0, 0, 1, 1], [], []>} : vector<128x4xbf16>, vector<4x128xbf16>, vector<128x128xf32> -> vector<128x128xf32>
    %61 = arith.addf %1, %60 : vector<128x128xf32>
    %c1_25 = arith.constant 1 : index
    %c0_26 = arith.constant 0 : index
    %c0_27 = arith.constant 0 : index
    %62 = vector.load %arg2[%c1_25, %c0_26, %c0_27] : memref<9x4x128xbf16, #tpu.memory_space<vmem>>, vector<1x4x128xbf16>
    %63 = vector.shape_cast %62 : vector<1x4x128xbf16> to vector<4x128xbf16>
    %cst_28 = arith.constant dense<0.000000e+00> : vector<128x128xf32>
    %64 = tpu.matmul %15, %63, %cst_28 {dimension_numbers = #tpu.dot_dimension_numbers<[1], [0], [0], [1], [0, 0, 1, 1], [], []>} : vector<128x4xbf16>, vector<4x128xbf16>, vector<128x128xf32> -> vector<128x128xf32>
    %65 = arith.addf %61, %64 : vector<128x128xf32>
    %c2_29 = arith.constant 2 : index
    %c0_30 = arith.constant 0 : index
    %c0_31 = arith.constant 0 : index
    %66 = vector.load %arg2[%c2_29, %c0_30, %c0_31] : memref<9x4x128xbf16, #tpu.memory_space<vmem>>, vector<1x4x128xbf16>
    %67 = vector.shape_cast %66 : vector<1x4x128xbf16> to vector<4x128xbf16>
    %cst_32 = arith.constant dense<0.000000e+00> : vector<128x128xf32>
    %68 = tpu.matmul %21, %67, %cst_32 {dimension_numbers = #tpu.dot_dimension_numbers<[1], [0], [0], [1], [0, 0, 1, 1], [], []>} : vector<128x4xbf16>, vector<4x128xbf16>, vector<128x128xf32> -> vector<128x128xf32>
    %69 = arith.addf %65, %68 : vector<128x128xf32>
    %c3_33 = arith.constant 3 : index
    %c0_34 = arith.constant 0 : index
    %c0_35 = arith.constant 0 : index
    %70 = vector.load %arg2[%c3_33, %c0_34, %c0_35] : memref<9x4x128xbf16, #tpu.memory_space<vmem>>, vector<1x4x128xbf16>
    %71 = vector.shape_cast %70 : vector<1x4x128xbf16> to vector<4x128xbf16>
    %cst_36 = arith.constant dense<0.000000e+00> : vector<128x128xf32>
    %72 = tpu.matmul %27, %71, %cst_36 {dimension_numbers = #tpu.dot_dimension_numbers<[1], [0], [0], [1], [0, 0, 1, 1], [], []>} : vector<128x4xbf16>, vector<4x128xbf16>, vector<128x128xf32> -> vector<128x128xf32>
    %73 = arith.addf %69, %72 : vector<128x128xf32>
    %c4_37 = arith.constant 4 : index
    %c0_38 = arith.constant 0 : index
    %c0_39 = arith.constant 0 : index
    %74 = vector.load %arg2[%c4_37, %c0_38, %c0_39] : memref<9x4x128xbf16, #tpu.memory_space<vmem>>, vector<1x4x128xbf16>
    %75 = vector.shape_cast %74 : vector<1x4x128xbf16> to vector<4x128xbf16>
    %cst_40 = arith.constant dense<0.000000e+00> : vector<128x128xf32>
    %76 = tpu.matmul %33, %75, %cst_40 {dimension_numbers = #tpu.dot_dimension_numbers<[1], [0], [0], [1], [0, 0, 1, 1], [], []>} : vector<128x4xbf16>, vector<4x128xbf16>, vector<128x128xf32> -> vector<128x128xf32>
    %77 = arith.addf %73, %76 : vector<128x128xf32>
    %c5_41 = arith.constant 5 : index
    %c0_42 = arith.constant 0 : index
    %c0_43 = arith.constant 0 : index
    %78 = vector.load %arg2[%c5_41, %c0_42, %c0_43] : memref<9x4x128xbf16, #tpu.memory_space<vmem>>, vector<1x4x128xbf16>
    %79 = vector.shape_cast %78 : vector<1x4x128xbf16> to vector<4x128xbf16>
    %cst_44 = arith.constant dense<0.000000e+00> : vector<128x128xf32>
    %80 = tpu.matmul %39, %79, %cst_44 {dimension_numbers = #tpu.dot_dimension_numbers<[1], [0], [0], [1], [0, 0, 1, 1], [], []>} : vector<128x4xbf16>, vector<4x128xbf16>, vector<128x128xf32> -> vector<128x128xf32>
    %81 = arith.addf %77, %80 : vector<128x128xf32>
    %c6_45 = arith.constant 6 : index
    %c0_46 = arith.constant 0 : index
    %c0_47 = arith.constant 0 : index
    %82 = vector.load %arg2[%c6_45, %c0_46, %c0_47] : memref<9x4x128xbf16, #tpu.memory_space<vmem>>, vector<1x4x128xbf16>
    %83 = vector.shape_cast %82 : vector<1x4x128xbf16> to vector<4x128xbf16>
    %cst_48 = arith.constant dense<0.000000e+00> : vector<128x128xf32>
    %84 = tpu.matmul %45, %83, %cst_48 {dimension_numbers = #tpu.dot_dimension_numbers<[1], [0], [0], [1], [0, 0, 1, 1], [], []>} : vector<128x4xbf16>, vector<4x128xbf16>, vector<128x128xf32> -> vector<128x128xf32>
    %85 = arith.addf %81, %84 : vector<128x128xf32>
    %c7_49 = arith.constant 7 : index
    %c0_50 = arith.constant 0 : index
    %c0_51 = arith.constant 0 : index
    %86 = vector.load %arg2[%c7_49, %c0_50, %c0_51] : memref<9x4x128xbf16, #tpu.memory_space<vmem>>, vector<1x4x128xbf16>
    %87 = vector.shape_cast %86 : vector<1x4x128xbf16> to vector<4x128xbf16>
    %cst_52 = arith.constant dense<0.000000e+00> : vector<128x128xf32>
    %88 = tpu.matmul %51, %87, %cst_52 {dimension_numbers = #tpu.dot_dimension_numbers<[1], [0], [0], [1], [0, 0, 1, 1], [], []>} : vector<128x4xbf16>, vector<4x128xbf16>, vector<128x128xf32> -> vector<128x128xf32>
    %89 = arith.addf %85, %88 : vector<128x128xf32>
    %c8_53 = arith.constant 8 : index
    %c0_54 = arith.constant 0 : index
    %c0_55 = arith.constant 0 : index
    %90 = vector.load %arg2[%c8_53, %c0_54, %c0_55] : memref<9x4x128xbf16, #tpu.memory_space<vmem>>, vector<1x4x128xbf16>
    %91 = vector.shape_cast %90 : vector<1x4x128xbf16> to vector<4x128xbf16>
    %cst_56 = arith.constant dense<0.000000e+00> : vector<128x128xf32>
    %92 = tpu.matmul %57, %91, %cst_56 {dimension_numbers = #tpu.dot_dimension_numbers<[1], [0], [0], [1], [0, 0, 1, 1], [], []>} : vector<128x4xbf16>, vector<4x128xbf16>, vector<128x128xf32> -> vector<128x128xf32>
    %93 = arith.addf %89, %92 : vector<128x128xf32>
    %c0_57 = arith.constant 0 : index
    %c0_58 = arith.constant 0 : index
    %94 = vector.load %arg3[%c0_57, %c0_58] : memref<1x128xf32, #tpu.memory_space<vmem>>, vector<1x128xf32>
    %95 = vector.broadcast %94 : vector<1x128xf32> to vector<128x128xf32>
    %96 = arith.addf %93, %95 : vector<128x128xf32>
    %cst_59 = arith.constant 0.000000e+00 : f32
    %97 = vector.broadcast %cst_59 : f32 to vector<128x128xf32>
    %98 = arith.cmpf oge, %96, %97 : vector<128x128xf32>
    %cst_60 = arith.constant 0.00999999977 : f32
    %99 = vector.broadcast %cst_60 : f32 to vector<128x128xf32>
    %100 = arith.mulf %99, %96 : vector<128x128xf32>
    %101 = arith.select %98, %96, %100 : vector<128x128xi1>, vector<128x128xf32>
    %cst_61 = arith.constant 0.000000e+00 : f32
    %102 = vector.broadcast %cst_61 : f32 to vector<16x128xf32>
    %103 = tpu.concatenate %102, %101, %102 in 0 : vector<16x128xf32>, vector<128x128xf32>, vector<16x128xf32> -> vector<160x128xf32>
    %104 = vector.extract_strided_slice %103 {offsets = [7, 0], sizes = [128, 128], strides = [1, 1]} : vector<160x128xf32> to vector<128x128xf32>
    %c0_62 = arith.constant 0 : index
    %c0_63 = arith.constant 0 : index
    %c0_64 = arith.constant 0 : index
    %105 = vector.load %arg1[%c0_62, %c0_63, %c0_64] : memref<9x128x1xf32, #tpu.memory_space<vmem>>, vector<1x128x1xf32>
    %106 = vector.shape_cast %105 : vector<1x128x1xf32> to vector<128x1xf32>
    %107 = vector.broadcast %106 : vector<128x1xf32> to vector<128x128xf32>
    %108 = arith.mulf %104, %107 : vector<128x128xf32>
    %109 = arith.truncf %108 : vector<128x128xf32> to vector<128x128xbf16>
    %110 = vector.extract_strided_slice %103 {offsets = [8, 0], sizes = [128, 128], strides = [1, 1]} : vector<160x128xf32> to vector<128x128xf32>
    %c1_65 = arith.constant 1 : index
    %c0_66 = arith.constant 0 : index
    %c0_67 = arith.constant 0 : index
    %111 = vector.load %arg1[%c1_65, %c0_66, %c0_67] : memref<9x128x1xf32, #tpu.memory_space<vmem>>, vector<1x128x1xf32>
    %112 = vector.shape_cast %111 : vector<1x128x1xf32> to vector<128x1xf32>
    %113 = vector.broadcast %112 : vector<128x1xf32> to vector<128x128xf32>
    %114 = arith.mulf %110, %113 : vector<128x128xf32>
    %115 = arith.truncf %114 : vector<128x128xf32> to vector<128x128xbf16>
    %116 = vector.extract_strided_slice %103 {offsets = [9, 0], sizes = [128, 128], strides = [1, 1]} : vector<160x128xf32> to vector<128x128xf32>
    %c2_68 = arith.constant 2 : index
    %c0_69 = arith.constant 0 : index
    %c0_70 = arith.constant 0 : index
    %117 = vector.load %arg1[%c2_68, %c0_69, %c0_70] : memref<9x128x1xf32, #tpu.memory_space<vmem>>, vector<1x128x1xf32>
    %118 = vector.shape_cast %117 : vector<1x128x1xf32> to vector<128x1xf32>
    %119 = vector.broadcast %118 : vector<128x1xf32> to vector<128x128xf32>
    %120 = arith.mulf %116, %119 : vector<128x128xf32>
    %121 = arith.truncf %120 : vector<128x128xf32> to vector<128x128xbf16>
    %122 = vector.extract_strided_slice %103 {offsets = [15, 0], sizes = [128, 128], strides = [1, 1]} : vector<160x128xf32> to vector<128x128xf32>
    %c3_71 = arith.constant 3 : index
    %c0_72 = arith.constant 0 : index
    %c0_73 = arith.constant 0 : index
    %123 = vector.load %arg1[%c3_71, %c0_72, %c0_73] : memref<9x128x1xf32, #tpu.memory_space<vmem>>, vector<1x128x1xf32>
    %124 = vector.shape_cast %123 : vector<1x128x1xf32> to vector<128x1xf32>
    %125 = vector.broadcast %124 : vector<128x1xf32> to vector<128x128xf32>
    %126 = arith.mulf %122, %125 : vector<128x128xf32>
    %127 = arith.truncf %126 : vector<128x128xf32> to vector<128x128xbf16>
    %128 = vector.extract_strided_slice %103 {offsets = [16, 0], sizes = [128, 128], strides = [1, 1]} : vector<160x128xf32> to vector<128x128xf32>
    %c4_74 = arith.constant 4 : index
    %c0_75 = arith.constant 0 : index
    %c0_76 = arith.constant 0 : index
    %129 = vector.load %arg1[%c4_74, %c0_75, %c0_76] : memref<9x128x1xf32, #tpu.memory_space<vmem>>, vector<1x128x1xf32>
    %130 = vector.shape_cast %129 : vector<1x128x1xf32> to vector<128x1xf32>
    %131 = vector.broadcast %130 : vector<128x1xf32> to vector<128x128xf32>
    %132 = arith.mulf %128, %131 : vector<128x128xf32>
    %133 = arith.truncf %132 : vector<128x128xf32> to vector<128x128xbf16>
    %134 = vector.extract_strided_slice %103 {offsets = [17, 0], sizes = [128, 128], strides = [1, 1]} : vector<160x128xf32> to vector<128x128xf32>
    %c5_77 = arith.constant 5 : index
    %c0_78 = arith.constant 0 : index
    %c0_79 = arith.constant 0 : index
    %135 = vector.load %arg1[%c5_77, %c0_78, %c0_79] : memref<9x128x1xf32, #tpu.memory_space<vmem>>, vector<1x128x1xf32>
    %136 = vector.shape_cast %135 : vector<1x128x1xf32> to vector<128x1xf32>
    %137 = vector.broadcast %136 : vector<128x1xf32> to vector<128x128xf32>
    %138 = arith.mulf %134, %137 : vector<128x128xf32>
    %139 = arith.truncf %138 : vector<128x128xf32> to vector<128x128xbf16>
    %140 = vector.extract_strided_slice %103 {offsets = [23, 0], sizes = [128, 128], strides = [1, 1]} : vector<160x128xf32> to vector<128x128xf32>
    %c6_80 = arith.constant 6 : index
    %c0_81 = arith.constant 0 : index
    %c0_82 = arith.constant 0 : index
    %141 = vector.load %arg1[%c6_80, %c0_81, %c0_82] : memref<9x128x1xf32, #tpu.memory_space<vmem>>, vector<1x128x1xf32>
    %142 = vector.shape_cast %141 : vector<1x128x1xf32> to vector<128x1xf32>
    %143 = vector.broadcast %142 : vector<128x1xf32> to vector<128x128xf32>
    %144 = arith.mulf %140, %143 : vector<128x128xf32>
    %145 = arith.truncf %144 : vector<128x128xf32> to vector<128x128xbf16>
    %146 = vector.extract_strided_slice %103 {offsets = [24, 0], sizes = [128, 128], strides = [1, 1]} : vector<160x128xf32> to vector<128x128xf32>
    %c7_83 = arith.constant 7 : index
    %c0_84 = arith.constant 0 : index
    %c0_85 = arith.constant 0 : index
    %147 = vector.load %arg1[%c7_83, %c0_84, %c0_85] : memref<9x128x1xf32, #tpu.memory_space<vmem>>, vector<1x128x1xf32>
    %148 = vector.shape_cast %147 : vector<1x128x1xf32> to vector<128x1xf32>
    %149 = vector.broadcast %148 : vector<128x1xf32> to vector<128x128xf32>
    %150 = arith.mulf %146, %149 : vector<128x128xf32>
    %151 = arith.truncf %150 : vector<128x128xf32> to vector<128x128xbf16>
    %152 = vector.extract_strided_slice %103 {offsets = [25, 0], sizes = [128, 128], strides = [1, 1]} : vector<160x128xf32> to vector<128x128xf32>
    %c8_86 = arith.constant 8 : index
    %c0_87 = arith.constant 0 : index
    %c0_88 = arith.constant 0 : index
    %153 = vector.load %arg1[%c8_86, %c0_87, %c0_88] : memref<9x128x1xf32, #tpu.memory_space<vmem>>, vector<1x128x1xf32>
    %154 = vector.shape_cast %153 : vector<1x128x1xf32> to vector<128x1xf32>
    %155 = vector.broadcast %154 : vector<128x1xf32> to vector<128x128xf32>
    %156 = arith.mulf %152, %155 : vector<128x128xf32>
    %157 = arith.truncf %156 : vector<128x128xf32> to vector<128x128xbf16>
    %158 = tpu.concatenate %109, %115, %121, %127, %133, %139, %145, %151, %157 in 1 : vector<128x128xbf16>, vector<128x128xbf16>, vector<128x128xbf16>, vector<128x128xbf16>, vector<128x128xbf16>, vector<128x128xbf16>, vector<128x128xbf16>, vector<128x128xbf16>, vector<128x128xbf16> -> vector<128x1152xbf16>
    %c0_89 = arith.constant 0 : index
    %c0_90 = arith.constant 0 : index
    %159 = vector.load %arg4[%c0_89, %c0_90] : memref<1152x256xbf16, #tpu.memory_space<vmem>>, vector<1152x256xbf16>
    %cst_91 = arith.constant dense<0.000000e+00> : vector<128x256xf32>
    %160 = tpu.matmul %158, %159, %cst_91 {dimension_numbers = #tpu.dot_dimension_numbers<[1], [0], [0], [1], [0, 0, 1, 1], [], []>} : vector<128x1152xbf16>, vector<1152x256xbf16>, vector<128x256xf32> -> vector<128x256xf32>
    %c0_92 = arith.constant 0 : index
    %c0_93 = arith.constant 0 : index
    %161 = vector.load %arg5[%c0_92, %c0_93] : memref<1x256xf32, #tpu.memory_space<vmem>>, vector<1x256xf32>
    %162 = vector.broadcast %161 : vector<1x256xf32> to vector<128x256xf32>
    %163 = arith.addf %160, %162 : vector<128x256xf32>
    %cst_94 = arith.constant 0.000000e+00 : f32
    %164 = vector.broadcast %cst_94 : f32 to vector<128x256xf32>
    %165 = arith.cmpf oge, %163, %164 : vector<128x256xf32>
    %cst_95 = arith.constant 0.00999999977 : f32
    %166 = vector.broadcast %cst_95 : f32 to vector<128x256xf32>
    %167 = arith.mulf %166, %163 : vector<128x256xf32>
    %168 = arith.select %165, %163, %167 : vector<128x256xi1>, vector<128x256xf32>
    %169 = arith.truncf %168 : vector<128x256xf32> to vector<128x256xbf16>
    %cst_96 = arith.constant 0.000000e+00 : f32
    %170 = vector.broadcast %cst_96 : f32 to vector<2x256xf32>
    %c0_97 = arith.constant 0 : index
    %c0_98 = arith.constant 0 : index
    %c0_99 = arith.constant 0 : index
    %171 = vector.load %arg6[%c0_97, %c0_98, %c0_99] : memref<9x2x128xbf16, #tpu.memory_space<vmem>>, vector<1x2x128xbf16>
    %172 = vector.shape_cast %171 : vector<1x2x128xbf16> to vector<2x128xbf16>
    %cst_100 = arith.constant dense<0.000000e+00> : vector<2x256xf32>
    %173 = tpu.matmul %172, %169, %cst_100 {dimension_numbers = #tpu.dot_dimension_numbers<[1], [0], [0], [1], [0, 0, 1, 1], [], []>} : vector<2x128xbf16>, vector<128x256xbf16>, vector<2x256xf32> -> vector<2x256xf32>
    %c0_101 = arith.constant 0 : index
    %c0_102 = arith.constant 0 : index
    %c0_103 = arith.constant 0 : index
    %174 = vector.load %arg7[%c0_101, %c0_102, %c0_103] : memref<9x1x256xf32, #tpu.memory_space<vmem>>, vector<1x1x256xf32>
    %175 = vector.shape_cast %174 : vector<1x1x256xf32> to vector<1x256xf32>
    %176 = vector.broadcast %175 : vector<1x256xf32> to vector<2x256xf32>
    %177 = arith.mulf %173, %176 : vector<2x256xf32>
    %178 = arith.addf %170, %177 : vector<2x256xf32>
    %c1_104 = arith.constant 1 : index
    %c0_105 = arith.constant 0 : index
    %c0_106 = arith.constant 0 : index
    %179 = vector.load %arg6[%c1_104, %c0_105, %c0_106] : memref<9x2x128xbf16, #tpu.memory_space<vmem>>, vector<1x2x128xbf16>
    %180 = vector.shape_cast %179 : vector<1x2x128xbf16> to vector<2x128xbf16>
    %cst_107 = arith.constant dense<0.000000e+00> : vector<2x256xf32>
    %181 = tpu.matmul %180, %169, %cst_107 {dimension_numbers = #tpu.dot_dimension_numbers<[1], [0], [0], [1], [0, 0, 1, 1], [], []>} : vector<2x128xbf16>, vector<128x256xbf16>, vector<2x256xf32> -> vector<2x256xf32>
    %c1_108 = arith.constant 1 : index
    %c0_109 = arith.constant 0 : index
    %c0_110 = arith.constant 0 : index
    %182 = vector.load %arg7[%c1_108, %c0_109, %c0_110] : memref<9x1x256xf32, #tpu.memory_space<vmem>>, vector<1x1x256xf32>
    %183 = vector.shape_cast %182 : vector<1x1x256xf32> to vector<1x256xf32>
    %184 = vector.broadcast %183 : vector<1x256xf32> to vector<2x256xf32>
    %185 = arith.mulf %181, %184 : vector<2x256xf32>
    %186 = arith.addf %178, %185 : vector<2x256xf32>
    %c2_111 = arith.constant 2 : index
    %c0_112 = arith.constant 0 : index
    %c0_113 = arith.constant 0 : index
    %187 = vector.load %arg6[%c2_111, %c0_112, %c0_113] : memref<9x2x128xbf16, #tpu.memory_space<vmem>>, vector<1x2x128xbf16>
    %188 = vector.shape_cast %187 : vector<1x2x128xbf16> to vector<2x128xbf16>
    %cst_114 = arith.constant dense<0.000000e+00> : vector<2x256xf32>
    %189 = tpu.matmul %188, %169, %cst_114 {dimension_numbers = #tpu.dot_dimension_numbers<[1], [0], [0], [1], [0, 0, 1, 1], [], []>} : vector<2x128xbf16>, vector<128x256xbf16>, vector<2x256xf32> -> vector<2x256xf32>
    %c2_115 = arith.constant 2 : index
    %c0_116 = arith.constant 0 : index
    %c0_117 = arith.constant 0 : index
    %190 = vector.load %arg7[%c2_115, %c0_116, %c0_117] : memref<9x1x256xf32, #tpu.memory_space<vmem>>, vector<1x1x256xf32>
    %191 = vector.shape_cast %190 : vector<1x1x256xf32> to vector<1x256xf32>
    %192 = vector.broadcast %191 : vector<1x256xf32> to vector<2x256xf32>
    %193 = arith.mulf %189, %192 : vector<2x256xf32>
    %194 = arith.addf %186, %193 : vector<2x256xf32>
    %c3_118 = arith.constant 3 : index
    %c0_119 = arith.constant 0 : index
    %c0_120 = arith.constant 0 : index
    %195 = vector.load %arg6[%c3_118, %c0_119, %c0_120] : memref<9x2x128xbf16, #tpu.memory_space<vmem>>, vector<1x2x128xbf16>
    %196 = vector.shape_cast %195 : vector<1x2x128xbf16> to vector<2x128xbf16>
    %cst_121 = arith.constant dense<0.000000e+00> : vector<2x256xf32>
    %197 = tpu.matmul %196, %169, %cst_121 {dimension_numbers = #tpu.dot_dimension_numbers<[1], [0], [0], [1], [0, 0, 1, 1], [], []>} : vector<2x128xbf16>, vector<128x256xbf16>, vector<2x256xf32> -> vector<2x256xf32>
    %c3_122 = arith.constant 3 : index
    %c0_123 = arith.constant 0 : index
    %c0_124 = arith.constant 0 : index
    %198 = vector.load %arg7[%c3_122, %c0_123, %c0_124] : memref<9x1x256xf32, #tpu.memory_space<vmem>>, vector<1x1x256xf32>
    %199 = vector.shape_cast %198 : vector<1x1x256xf32> to vector<1x256xf32>
    %200 = vector.broadcast %199 : vector<1x256xf32> to vector<2x256xf32>
    %201 = arith.mulf %197, %200 : vector<2x256xf32>
    %202 = arith.addf %194, %201 : vector<2x256xf32>
    %c4_125 = arith.constant 4 : index
    %c0_126 = arith.constant 0 : index
    %c0_127 = arith.constant 0 : index
    %203 = vector.load %arg6[%c4_125, %c0_126, %c0_127] : memref<9x2x128xbf16, #tpu.memory_space<vmem>>, vector<1x2x128xbf16>
    %204 = vector.shape_cast %203 : vector<1x2x128xbf16> to vector<2x128xbf16>
    %cst_128 = arith.constant dense<0.000000e+00> : vector<2x256xf32>
    %205 = tpu.matmul %204, %169, %cst_128 {dimension_numbers = #tpu.dot_dimension_numbers<[1], [0], [0], [1], [0, 0, 1, 1], [], []>} : vector<2x128xbf16>, vector<128x256xbf16>, vector<2x256xf32> -> vector<2x256xf32>
    %c4_129 = arith.constant 4 : index
    %c0_130 = arith.constant 0 : index
    %c0_131 = arith.constant 0 : index
    %206 = vector.load %arg7[%c4_129, %c0_130, %c0_131] : memref<9x1x256xf32, #tpu.memory_space<vmem>>, vector<1x1x256xf32>
    %207 = vector.shape_cast %206 : vector<1x1x256xf32> to vector<1x256xf32>
    %208 = vector.broadcast %207 : vector<1x256xf32> to vector<2x256xf32>
    %209 = arith.mulf %205, %208 : vector<2x256xf32>
    %210 = arith.addf %202, %209 : vector<2x256xf32>
    %c5_132 = arith.constant 5 : index
    %c0_133 = arith.constant 0 : index
    %c0_134 = arith.constant 0 : index
    %211 = vector.load %arg6[%c5_132, %c0_133, %c0_134] : memref<9x2x128xbf16, #tpu.memory_space<vmem>>, vector<1x2x128xbf16>
    %212 = vector.shape_cast %211 : vector<1x2x128xbf16> to vector<2x128xbf16>
    %cst_135 = arith.constant dense<0.000000e+00> : vector<2x256xf32>
    %213 = tpu.matmul %212, %169, %cst_135 {dimension_numbers = #tpu.dot_dimension_numbers<[1], [0], [0], [1], [0, 0, 1, 1], [], []>} : vector<2x128xbf16>, vector<128x256xbf16>, vector<2x256xf32> -> vector<2x256xf32>
    %c5_136 = arith.constant 5 : index
    %c0_137 = arith.constant 0 : index
    %c0_138 = arith.constant 0 : index
    %214 = vector.load %arg7[%c5_136, %c0_137, %c0_138] : memref<9x1x256xf32, #tpu.memory_space<vmem>>, vector<1x1x256xf32>
    %215 = vector.shape_cast %214 : vector<1x1x256xf32> to vector<1x256xf32>
    %216 = vector.broadcast %215 : vector<1x256xf32> to vector<2x256xf32>
    %217 = arith.mulf %213, %216 : vector<2x256xf32>
    %218 = arith.addf %210, %217 : vector<2x256xf32>
    %c6_139 = arith.constant 6 : index
    %c0_140 = arith.constant 0 : index
    %c0_141 = arith.constant 0 : index
    %219 = vector.load %arg6[%c6_139, %c0_140, %c0_141] : memref<9x2x128xbf16, #tpu.memory_space<vmem>>, vector<1x2x128xbf16>
    %220 = vector.shape_cast %219 : vector<1x2x128xbf16> to vector<2x128xbf16>
    %cst_142 = arith.constant dense<0.000000e+00> : vector<2x256xf32>
    %221 = tpu.matmul %220, %169, %cst_142 {dimension_numbers = #tpu.dot_dimension_numbers<[1], [0], [0], [1], [0, 0, 1, 1], [], []>} : vector<2x128xbf16>, vector<128x256xbf16>, vector<2x256xf32> -> vector<2x256xf32>
    %c6_143 = arith.constant 6 : index
    %c0_144 = arith.constant 0 : index
    %c0_145 = arith.constant 0 : index
    %222 = vector.load %arg7[%c6_143, %c0_144, %c0_145] : memref<9x1x256xf32, #tpu.memory_space<vmem>>, vector<1x1x256xf32>
    %223 = vector.shape_cast %222 : vector<1x1x256xf32> to vector<1x256xf32>
    %224 = vector.broadcast %223 : vector<1x256xf32> to vector<2x256xf32>
    %225 = arith.mulf %221, %224 : vector<2x256xf32>
    %226 = arith.addf %218, %225 : vector<2x256xf32>
    %c7_146 = arith.constant 7 : index
    %c0_147 = arith.constant 0 : index
    %c0_148 = arith.constant 0 : index
    %227 = vector.load %arg6[%c7_146, %c0_147, %c0_148] : memref<9x2x128xbf16, #tpu.memory_space<vmem>>, vector<1x2x128xbf16>
    %228 = vector.shape_cast %227 : vector<1x2x128xbf16> to vector<2x128xbf16>
    %cst_149 = arith.constant dense<0.000000e+00> : vector<2x256xf32>
    %229 = tpu.matmul %228, %169, %cst_149 {dimension_numbers = #tpu.dot_dimension_numbers<[1], [0], [0], [1], [0, 0, 1, 1], [], []>} : vector<2x128xbf16>, vector<128x256xbf16>, vector<2x256xf32> -> vector<2x256xf32>
    %c7_150 = arith.constant 7 : index
    %c0_151 = arith.constant 0 : index
    %c0_152 = arith.constant 0 : index
    %230 = vector.load %arg7[%c7_150, %c0_151, %c0_152] : memref<9x1x256xf32, #tpu.memory_space<vmem>>, vector<1x1x256xf32>
    %231 = vector.shape_cast %230 : vector<1x1x256xf32> to vector<1x256xf32>
    %232 = vector.broadcast %231 : vector<1x256xf32> to vector<2x256xf32>
    %233 = arith.mulf %229, %232 : vector<2x256xf32>
    %234 = arith.addf %226, %233 : vector<2x256xf32>
    %c8_153 = arith.constant 8 : index
    %c0_154 = arith.constant 0 : index
    %c0_155 = arith.constant 0 : index
    %235 = vector.load %arg6[%c8_153, %c0_154, %c0_155] : memref<9x2x128xbf16, #tpu.memory_space<vmem>>, vector<1x2x128xbf16>
    %236 = vector.shape_cast %235 : vector<1x2x128xbf16> to vector<2x128xbf16>
    %cst_156 = arith.constant dense<0.000000e+00> : vector<2x256xf32>
    %237 = tpu.matmul %236, %169, %cst_156 {dimension_numbers = #tpu.dot_dimension_numbers<[1], [0], [0], [1], [0, 0, 1, 1], [], []>} : vector<2x128xbf16>, vector<128x256xbf16>, vector<2x256xf32> -> vector<2x256xf32>
    %c8_157 = arith.constant 8 : index
    %c0_158 = arith.constant 0 : index
    %c0_159 = arith.constant 0 : index
    %238 = vector.load %arg7[%c8_157, %c0_158, %c0_159] : memref<9x1x256xf32, #tpu.memory_space<vmem>>, vector<1x1x256xf32>
    %239 = vector.shape_cast %238 : vector<1x1x256xf32> to vector<1x256xf32>
    %240 = vector.broadcast %239 : vector<1x256xf32> to vector<2x256xf32>
    %241 = arith.mulf %237, %240 : vector<2x256xf32>
    %242 = arith.addf %234, %241 : vector<2x256xf32>
    %cst_160 = arith.constant dense<0.000000e+00> : vector<2xf32>
    %243 = vector.multi_reduction <add>, %242, %cst_160 [1] : vector<2x256xf32> to vector<2xf32>
    %244 = vector.shape_cast %243 : vector<2xf32> to vector<2x1xf32>
    %c0_161 = arith.constant 0 : index
    %c0_162 = arith.constant 0 : index
    %245 = vector.load %arg8[%c0_161, %c0_162] : memref<1x1xf32, #tpu.memory_space<vmem>>, vector<1x1xf32>
    %246 = vector.broadcast %245 : vector<1x1xf32> to vector<2x1xf32>
    %247 = arith.addf %244, %246 : vector<2x1xf32>
    %c0_163 = arith.constant 0 : index
    %c0_164 = arith.constant 0 : index
    %248 = vector.load %arg9[%c0_163, %c0_164] : memref<2x1xf32, #tpu.memory_space<vmem>>, vector<2x1xf32>
    tpu.vector_store %arg9[%c0_163, %c0_164], %247 {strides = array<i32>} : memref<2x1xf32, #tpu.memory_space<vmem>>, vector<2x1xf32>,
    return
  }
}

</mosaic_0001>

<llo_original>
// kernel: qnet_forward.1
$region0: #{qnet_forward.1}
  #allocation0 [shape = 'u32[]', space=smem, size = 0x4, offset = 0x4, fixed_abs, tag = 'smem constant byte address 0x4 - core index']
  #allocation1 [shape = 'u32[144,128]{1,0:T(1,128)}', space=vmem, size = 0x12000, scoped, tag = 'internal scratch']
  #allocation2 [shape = 'f32[1,1]{1,0:T(1,128)S(1)}', space=vmem, size = 0x200, scoped, tag = 'scoped memory for qnet_forward.1']
  %s0 = inlined_call_operand.vmem [shape: f32[128,4], index: 0, kind: input, shape index: {}]
  %s1 = inlined_call_operand.vmem [shape: f32[9,128,1], index: 1, kind: input, shape index: {}]
  %s2 = inlined_call_operand.vmem [shape: bf16[9,4,128], index: 2, kind: input, shape index: {}]
  %s3 = inlined_call_operand.vmem [shape: f32[1,128], index: 3, kind: input, shape index: {}]
  %s4 = inlined_call_operand.vmem [shape: bf16[1152,256], index: 4, kind: input, shape index: {}]
  %s5 = inlined_call_operand.vmem [shape: f32[1,256], index: 5, kind: input, shape index: {}]
  %s6 = inlined_call_operand.vmem [shape: bf16[9,2,128], index: 6, kind: input, shape index: {}]
  %s7 = inlined_call_operand.vmem [shape: f32[9,1,256], index: 7, kind: input, shape index: {}]
  %s8 = inlined_call_operand.<no memory space> [shape: f32[1,1], index: 8, kind: input, shape index: {}]
  %s9 = inlined_call_operand.vmem [shape: f32[2,1], index: 9, kind: output, shape index: {}]
  %s10 = sld [smem:[#allocation0]]
  $region46: #{qnet_forward.1} parent=0
    _
  %s12 = ssub.s32 1, %s10
  %s13 = scalar_select 0, %s12, %s10
  %v14 = vstv %s8
  %15 = vst [vmem:[#allocation2] sm:$0x1] %v14
  // Predicated region
  $region2: #{qnet_forward.1} parent=0 // pred_check
    _
  $region3: #{qnet_forward.1} parent=0 // pred_check_branch
    %17 = sbr.rel (0) target = $region5
  $region4: #{qnet_forward.1} parent=0 // pred_region
    _
  $region5: #{qnet_forward.1} parent=0 // pred_fallthru
    _
  // Predicated region
  $region6: #{qnet_forward.1} parent=0 // pred_check
    _
  $region7: #{qnet_forward.1} parent=0 // pred_check_branch
    %19 = sbr.rel (0) target = $region9
  $region8: #{qnet_forward.1} parent=0 // pred_region
    _
  $region9: #{qnet_forward.1} parent=0 // pred_fallthru
    _
  // Predicated region
  $region10: #{qnet_forward.1} parent=0 // pred_check
    _
  $region11: #{qnet_forward.1} parent=0 // pred_check_branch
    %21 = sbr.rel (0) target = $region13
  $region12: #{qnet_forward.1} parent=0 // pred_region
    _
  $region13: #{qnet_forward.1} parent=0 // pred_fallthru
    _
  // Predicated region
  $region14: #{qnet_forward.1} parent=0 // pred_check
    _
  $region15: #{qnet_forward.1} parent=0 // pred_check_branch
    %23 = sbr.rel (0) target = $region17
  $region16: #{qnet_forward.1} parent=0 // pred_region
    _
  $region17: #{qnet_forward.1} parent=0 // pred_fallthru
    _
  // Predicated region
  $region18: #{qnet_forward.1} parent=0 // pred_check
    _
  $region19: #{qnet_forward.1} parent=0 // pred_check_branch
    %25 = sbr.rel (0) target = $region21
  $region20: #{qnet_forward.1} parent=0 // pred_region
    _
  $region21: #{qnet_forward.1} parent=0 // pred_fallthru
    _
  // Predicated region
  $region22: #{qnet_forward.1} parent=0 // pred_check
    _
  $region23: #{qnet_forward.1} parent=0 // pred_check_branch
    %27 = sbr.rel (0) target = $region25
  $region24: #{qnet_forward.1} parent=0 // pred_region
    _
  $region25: #{qnet_forward.1} parent=0 // pred_fallthru
    _
  // Predicated region
  $region26: #{qnet_forward.1} parent=0 // pred_check
    _
  $region27: #{qnet_forward.1} parent=0 // pred_check_branch
    %29 = sbr.rel (0) target = $region29
  $region28: #{qnet_forward.1} parent=0 // pred_region
    _
  $region29: #{qnet_forward.1} parent=0 // pred_fallthru
    _
  // Predicated region
  $region30: #{qnet_forward.1} parent=0 // pred_check
    _
  $region31: #{qnet_forward.1} parent=0 // pred_check_branch
    %31 = sbr.rel (0) target = $region33
  $region32: #{qnet_forward.1} parent=0 // pred_region
    _
  $region33: #{qnet_forward.1} parent=0 // pred_fallthru
    _
  // Predicated region
  $region34: #{qnet_forward.1} parent=0 // pred_check
    _
  $region35: #{qnet_forward.1} parent=0 // pred_check_branch
    %33 = sbr.rel (0) target = $region37
  $region36: #{qnet_forward.1} parent=0 // pred_region
    _
  $region37: #{qnet_forward.1} parent=0 // pred_fallthru
    _
  %v35 = vld [vmem:[%s0] sm:$0xff]
  %v36 = vld [vmem:[%s0 + $0x8] sm:$0xff]
  %v37 = vld [vmem:[%s0 + $0x10] sm:$0xff]
  %v38 = vld [vmem:[%s0 + $0x18] sm:$0xff]
  %v39 = vld [vmem:[%s0 + $0x20] sm:$0xff]
  %v40 = vld [vmem:[%s0 + $0x28] sm:$0xff]
  %v41 = vld [vmem:[%s0 + $0x30] sm:$0xff]
  %v42 = vld [vmem:[%s0 + $0x38] sm:$0xff]
  %v43 = vld [vmem:[%s0 + $0x40] sm:$0xff]
  %v44 = vld [vmem:[%s0 + $0x48] sm:$0xff]
  %v45 = vld [vmem:[%s0 + $0x50] sm:$0xff]
  %v46 = vld [vmem:[%s0 + $0x58] sm:$0xff]
  %v47 = vld [vmem:[%s0 + $0x60] sm:$0xff]
  %v48 = vld [vmem:[%s0 + $0x68] sm:$0xff]
  %v49 = vld [vmem:[%s0 + $0x70] sm:$0xff]
  %v50 = vld [vmem:[%s0 + $0x78] sm:$0xff]
  %v51 = vld [vmem:[%s1] sm:$0xff]
  %v52 = vld [vmem:[%s1 + $0x8] sm:$0xff]
  %v53 = vld [vmem:[%s1 + $0x10] sm:$0xff]
  %v54 = vld [vmem:[%s1 + $0x18] sm:$0xff]
  %v55 = vld [vmem:[%s1 + $0x20] sm:$0xff]
  %v56 = vld [vmem:[%s1 + $0x28] sm:$0xff]
  %v57 = vld [vmem:[%s1 + $0x30] sm:$0xff]
  %v58 = vld [vmem:[%s1 + $0x38] sm:$0xff]
  %v59 = vld [vmem:[%s1 + $0x40] sm:$0xff]
  %v60 = vld [vmem:[%s1 + $0x48] sm:$0xff]
  %v61 = vld [vmem:[%s1 + $0x50] sm:$0xff]
  %v62 = vld [vmem:[%s1 + $0x58] sm:$0xff]
  %v63 = vld [vmem:[%s1 + $0x60] sm:$0xff]
  %v64 = vld [vmem:[%s1 + $0x68] sm:$0xff]
  %v65 = vld [vmem:[%s1 + $0x70] sm:$0xff]
  %v66 = vld [vmem:[%s1 + $0x78] sm:$0xff]
  %68 = vset.pattern.permute.xlu0 0
  %69 = vperm.xlu0 %68, %v51
  %v70 = vpop.permute.xlu0 %69
  %72 = vset.pattern.permute.xlu0 0
  %73 = vperm.xlu0 %72, %v52
  %v74 = vpop.permute.xlu0 %73
  %76 = vset.pattern.permute.xlu0 0
  %77 = vperm.xlu0 %76, %v53
  %v78 = vpop.permute.xlu0 %77
  %80 = vset.pattern.permute.xlu0 0
  %81 = vperm.xlu0 %80, %v54
  %v82 = vpop.permute.xlu0 %81
  %84 = vset.pattern.permute.xlu0 0
  %85 = vperm.xlu0 %84, %v55
  %v86 = vpop.permute.xlu0 %85
  %88 = vset.pattern.permute.xlu0 0
  %89 = vperm.xlu0 %88, %v56
  %v90 = vpop.permute.xlu0 %89
  %92 = vset.pattern.permute.xlu0 0
  %93 = vperm.xlu0 %92, %v57
  %v94 = vpop.permute.xlu0 %93
  %96 = vset.pattern.permute.xlu0 0
  %97 = vperm.xlu0 %96, %v58
  %v98 = vpop.permute.xlu0 %97
  %100 = vset.pattern.permute.xlu0 0
  %101 = vperm.xlu0 %100, %v59
  %v102 = vpop.permute.xlu0 %101
  %104 = vset.pattern.permute.xlu0 0
  %105 = vperm.xlu0 %104, %v60
  %v106 = vpop.permute.xlu0 %105
  %108 = vset.pattern.permute.xlu0 0
  %109 = vperm.xlu0 %108, %v61
  %v110 = vpop.permute.xlu0 %109
  %112 = vset.pattern.permute.xlu0 0
  %113 = vperm.xlu0 %112, %v62
  %v114 = vpop.permute.xlu0 %113
  %116 = vset.pattern.permute.xlu0 0
  %117 = vperm.xlu0 %116, %v63
  %v118 = vpop.permute.xlu0 %117
  %120 = vset.pattern.permute.xlu0 0
  %121 = vperm.xlu0 %120, %v64
  %v122 = vpop.permute.xlu0 %121
  %124 = vset.pattern.permute.xlu0 0
  %125 = vperm.xlu0 %124, %v65
  %v126 = vpop.permute.xlu0 %125
  %128 = vset.pattern.permute.xlu0 0
  %129 = vperm.xlu0 %128, %v66
  %v130 = vpop.permute.xlu0 %129
  %vm131 = vcmask 1046528
  %v132 = vrot.slane %v70, 1
  %v133 = vrot.slane %v74, 1
  %v134 = vsel %vm131, %v132, %v133
  %v135 = vrot.slane %v78, 1
  %v136 = vsel %vm131, %v133, %v135
  %v137 = vrot.slane %v82, 1
  %v138 = vsel %vm131, %v135, %v137
  %v139 = vrot.slane %v86, 1
  %v140 = vsel %vm131, %v137, %v139
  %v141 = vrot.slane %v90, 1
  %v142 = vsel %vm131, %v139, %v141
  %v143 = vrot.slane %v94, 1
  %v144 = vsel %vm131, %v141, %v143
  %v145 = vrot.slane %v98, 1
  %v146 = vsel %vm131, %v143, %v145
  %v147 = vrot.slane %v102, 1
  %v148 = vsel %vm131, %v145, %v147
  %v149 = vrot.slane %v106, 1
  %v150 = vsel %vm131, %v147, %v149
  %v151 = vrot.slane %v110, 1
  %v152 = vsel %vm131, %v149, %v151
  %v153 = vrot.slane %v114, 1
  %v154 = vsel %vm131, %v151, %v153
  %v155 = vrot.slane %v118, 1
  %v156 = vsel %vm131, %v153, %v155
  %v157 = vrot.slane %v122, 1
  %v158 = vsel %vm131, %v155, %v157
  %v159 = vrot.slane %v126, 1
  %v160 = vsel %vm131, %v157, %v159
  %v161 = vrot.slane %v130, 1
  %v162 = vsel %vm131, %v159, %v161
  %v180 = vmul.f32 %v132, 0.0
  %v181 = vmul.f32 %v134, 0.0
  %v182 = vmul.f32 %v35, %v136
  %v183 = vmul.f32 %v36, %v138
  %v184 = vmul.f32 %v37, %v140
  %v185 = vmul.f32 %v38, %v142
  %v186 = vmul.f32 %v39, %v144
  %v187 = vmul.f32 %v40, %v146
  %v188 = vmul.f32 %v41, %v148
  %v189 = vmul.f32 %v42, %v150
  %v190 = vmul.f32 %v43, %v152
  %v191 = vmul.f32 %v44, %v154
  %v192 = vmul.f32 %v45, %v156
  %v193 = vmul.f32 %v46, %v158
  %v194 = vmul.f32 %v47, %v160
  %v195 = vmul.f32 %v48, %v162
  %v196 = vmul.f32 %v49, %v161
  %v197 = vpack.c.bf16 %v181, %v180
  %v198 = vpack.c.bf16 %v183, %v182
  %v199 = vpack.c.bf16 %v185, %v184
  %v200 = vpack.c.bf16 %v187, %v186
  %v201 = vpack.c.bf16 %v189, %v188
  %v202 = vpack.c.bf16 %v191, %v190
  %v203 = vpack.c.bf16 %v193, %v192
  %v204 = vpack.c.bf16 %v195, %v194
  %v205 = vpack.c.bf16 %v196, %v196
  %s206 = scalar_lea.vmem %s1, 128
  %v207 = vld [vmem:[%s206] sm:$0xff]
  %v208 = vld [vmem:[%s206 + $0x8] sm:$0xff]
  %v209 = vld [vmem:[%s206 + $0x10] sm:$0xff]
  %v210 = vld [vmem:[%s206 + $0x18] sm:$0xff]
  %v211 = vld [vmem:[%s206 + $0x20] sm:$0xff]
  %v212 = vld [vmem:[%s206 + $0x28] sm:$0xff]
  %v213 = vld [vmem:[%s206 + $0x30] sm:$0xff]
  %v214 = vld [vmem:[%s206 + $0x38] sm:$0xff]
  %v215 = vld [vmem:[%s206 + $0x40] sm:$0xff]
  %v216 = vld [vmem:[%s206 + $0x48] sm:$0xff]
  %v217 = vld [vmem:[%s206 + $0x50] sm:$0xff]
  %v218 = vld [vmem:[%s206 + $0x58] sm:$0xff]
  %v219 = vld [vmem:[%s206 + $0x60] sm:$0xff]
  %v220 = vld [vmem:[%s206 + $0x68] sm:$0xff]
  %v221 = vld [vmem:[%s206 + $0x70] sm:$0xff]
  %v222 = vld [vmem:[%s206 + $0x78] sm:$0xff]
  %224 = vset.pattern.permute.xlu0 0
  %225 = vperm.xlu0 %224, %v207
  %v226 = vpop.permute.xlu0 %225
  %229 = vset.pattern.permute.xlu0 0
  %230 = vperm.xlu0 %229, %v208
  %v231 = vpop.permute.xlu0 %230
  %234 = vset.pattern.permute.xlu0 0
  %235 = vperm.xlu0 %234, %v209
  %v236 = vpop.permute.xlu0 %235
  %239 = vset.pattern.permute.xlu0 0
  %240 = vperm.xlu0 %239, %v210
  %v241 = vpop.permute.xlu0 %240
  %244 = vset.pattern.permute.xlu0 0
  %245 = vperm.xlu0 %244, %v211
  %v246 = vpop.permute.xlu0 %245
  %249 = vset.pattern.permute.xlu0 0
  %250 = vperm.xlu0 %249, %v212
  %v251 = vpop.permute.xlu0 %250
  %254 = vset.pattern.permute.xlu0 0
  %255 = vperm.xlu0 %254, %v213
  %v256 = vpop.permute.xlu0 %255
  %259 = vset.pattern.permute.xlu0 0
  %260 = vperm.xlu0 %259, %v214
  %v261 = vpop.permute.xlu0 %260
  %264 = vset.pattern.permute.xlu0 0
  %265 = vperm.xlu0 %264, %v215
  %v266 = vpop.permute.xlu0 %265
  %269 = vset.pattern.permute.xlu0 0
  %270 = vperm.xlu0 %269, %v216
  %v271 = vpop.permute.xlu0 %270
  %274 = vset.pattern.permute.xlu0 0
  %275 = vperm.xlu0 %274, %v217
  %v276 = vpop.permute.xlu0 %275
  %279 = vset.pattern.permute.xlu0 0
  %280 = vperm.xlu0 %279, %v218
  %v281 = vpop.permute.xlu0 %280
  %284 = vset.pattern.permute.xlu0 0
  %285 = vperm.xlu0 %284, %v219
  %v286 = vpop.permute.xlu0 %285
  %289 = vset.pattern.permute.xlu0 0
  %290 = vperm.xlu0 %289, %v220
  %v291 = vpop.permute.xlu0 %290
  %294 = vset.pattern.permute.xlu0 0
  %295 = vperm.xlu0 %294, %v221
  %v296 = vpop.permute.xlu0 %295
  %299 = vset.pattern.permute.xlu0 0
  %300 = vperm.xlu0 %299, %v222
  %v301 = vpop.permute.xlu0 %300
  %v303 = vmul.f32 %v226, 0.0
  %v304 = vmul.f32 %v35, %v231
  %v305 = vmul.f32 %v36, %v236
  %v306 = vmul.f32 %v37, %v241
  %v307 = vmul.f32 %v38, %v246
  %v308 = vmul.f32 %v39, %v251
  %v309 = vmul.f32 %v40, %v256
  %v310 = vmul.f32 %v41, %v261
  %v311 = vmul.f32 %v42, %v266
  %v312 = vmul.f32 %v43, %v271
  %v313 = vmul.f32 %v44, %v276
  %v314 = vmul.f32 %v45, %v281
  %v315 = vmul.f32 %v46, %v286
  %v316 = vmul.f32 %v47, %v291
  %v317 = vmul.f32 %v48, %v296
  %v318 = vmul.f32 %v49, %v301
  %v319 = vpack.c.bf16 %v304, %v303
  %v320 = vpack.c.bf16 %v306, %v305
  %v321 = vpack.c.bf16 %v308, %v307
  %v322 = vpack.c.bf16 %v310, %v309
  %v323 = vpack.c.bf16 %v312, %v311
  %v324 = vpack.c.bf16 %v314, %v313
  %v325 = vpack.c.bf16 %v316, %v315
  %v326 = vpack.c.bf16 %v318, %v317
  %s327 = scalar_lea.vmem %s1, 256
  %v328 = vld [vmem:[%s327] sm:$0xff]
  %v329 = vld [vmem:[%s327 + $0x8] sm:$0xff]
  %v330 = vld [vmem:[%s327 + $0x10] sm:$0xff]
  %v331 = vld [vmem:[%s327 + $0x18] sm:$0xff]
  %v332 = vld [vmem:[%s327 + $0x20] sm:$0xff]
  %v333 = vld [vmem:[%s327 + $0x28] sm:$0xff]
  %v334 = vld [vmem:[%s327 + $0x30] sm:$0xff]
  %v335 = vld [vmem:[%s327 + $0x38] sm:$0xff]
  %v336 = vld [vmem:[%s327 + $0x40] sm:$0xff]
  %v337 = vld [vmem:[%s327 + $0x48] sm:$0xff]
  %v338 = vld [vmem:[%s327 + $0x50] sm:$0xff]
  %v339 = vld [vmem:[%s327 + $0x58] sm:$0xff]
  %v340 = vld [vmem:[%s327 + $0x60] sm:$0xff]
  %v341 = vld [vmem:[%s327 + $0x68] sm:$0xff]
  %v342 = vld [vmem:[%s327 + $0x70] sm:$0xff]
  %v343 = vld [vmem:[%s327 + $0x78] sm:$0xff]
  %345 = vset.pattern.permute.xlu0 0
  %346 = vperm.xlu0 %345, %v328
  %v347 = vpop.permute.xlu0 %346
  %349 = vset.pattern.permute.xlu0 0
  %350 = vperm.xlu0 %349, %v329
  %v351 = vpop.permute.xlu0 %350
  %353 = vset.pattern.permute.xlu0 0
  %354 = vperm.xlu0 %353, %v330
  %v355 = vpop.permute.xlu0 %354
  %357 = vset.pattern.permute.xlu0 0
  %358 = vperm.xlu0 %357, %v331
  %v359 = vpop.permute.xlu0 %358
  %361 = vset.pattern.permute.xlu0 0
  %362 = vperm.xlu0 %361, %v332
  %v363 = vpop.permute.xlu0 %362
  %365 = vset.pattern.permute.xlu0 0
  %366 = vperm.xlu0 %365, %v333
  %v367 = vpop.permute.xlu0 %366
  %369 = vset.pattern.permute.xlu0 0
  %370 = vperm.xlu0 %369, %v334
  %v371 = vpop.permute.xlu0 %370
  %373 = vset.pattern.permute.xlu0 0
  %374 = vperm.xlu0 %373, %v335
  %v375 = vpop.permute.xlu0 %374
  %377 = vset.pattern.permute.xlu0 0
  %378 = vperm.xlu0 %377, %v336
  %v379 = vpop.permute.xlu0 %378
  %381 = vset.pattern.permute.xlu0 0
  %382 = vperm.xlu0 %381, %v337
  %v383 = vpop.permute.xlu0 %382
  %385 = vset.pattern.permute.xlu0 0
  %386 = vperm.xlu0 %385, %v338
  %v387 = vpop.permute.xlu0 %386
  %389 = vset.pattern.permute.xlu0 0
  %390 = vperm.xlu0 %389, %v339
  %v391 = vpop.permute.xlu0 %390
  %393 = vset.pattern.permute.xlu0 0
  %394 = vperm.xlu0 %393, %v340
  %v395 = vpop.permute.xlu0 %394
  %397 = vset.pattern.permute.xlu0 0
  %398 = vperm.xlu0 %397, %v341
  %v399 = vpop.permute.xlu0 %398
  %401 = vset.pattern.permute.xlu0 0
  %402 = vperm.xlu0 %401, %v342
  %v403 = vpop.permute.xlu0 %402
  %405 = vset.pattern.permute.xlu0 0
  %406 = vperm.xlu0 %405, %v343
  %v407 = vpop.permute.xlu0 %406
  %vm408 = vcmask 1040384
  %v409 = vrot.slane %v347, 7
  %v410 = vrot.slane %v351, 7
  %v411 = vsel %vm408, %v409, %v410
  %v412 = vrot.slane %v355, 7
  %v413 = vsel %vm408, %v410, %v412
  %v414 = vrot.slane %v359, 7
  %v415 = vsel %vm408, %v412, %v414
  %v416 = vrot.slane %v363, 7
  %v417 = vsel %vm408, %v414, %v416
  %v418 = vrot.slane %v367, 7
  %v419 = vsel %vm408, %v416, %v418
  %v420 = vrot.slane %v371, 7
  %v421 = vsel %vm408, %v418, %v420
  %v422 = vrot.slane %v375, 7
  %v423 = vsel %vm408, %v420, %v422
  %v424 = vrot.slane %v379, 7
  %v425 = vsel %vm408, %v422, %v424
  %v426 = vrot.slane %v383, 7
  %v427 = vsel %vm408, %v424, %v426
  %v428 = vrot.slane %v387, 7
  %v429 = vsel %vm408, %v426, %v428
  %v430 = vrot.slane %v391, 7
  %v431 = vsel %vm408, %v428, %v430
  %v432 = vrot.slane %v395, 7
  %v433 = vsel %vm408, %v430, %v432
  %v434 = vrot.slane %v399, 7
  %v435 = vsel %vm408, %v432, %v434
  %v436 = vrot.slane %v403, 7
  %v437 = vsel %vm408, %v434, %v436
  %v438 = vrot.slane %v407, 7
  %v439 = vsel %vm408, %v436, %v438
  %v457 = vmul.f32 %v409, 0.0
  %v458 = vmul.f32 %v35, %v411
  %v459 = vmul.f32 %v36, %v413
  %v460 = vmul.f32 %v37, %v415
  %v461 = vmul.f32 %v38, %v417
  %v462 = vmul.f32 %v39, %v419
  %v463 = vmul.f32 %v40, %v421
  %v464 = vmul.f32 %v41, %v423
  %v465 = vmul.f32 %v42, %v425
  %v466 = vmul.f32 %v43, %v427
  %v467 = vmul.f32 %v44, %v429
  %v468 = vmul.f32 %v45, %v431
  %v469 = vmul.f32 %v46, %v433
  %v470 = vmul.f32 %v47, %v435
  %v471 = vmul.f32 %v48, %v437
  %v472 = vmul.f32 %v49, %v439
  %v473 = vmul.f32 %v50, %v438
  %v474 = vpack.c.bf16 %v458, %v457
  %v475 = vpack.c.bf16 %v460, %v459
  %v476 = vpack.c.bf16 %v462, %v461
  %v477 = vpack.c.bf16 %v464, %v463
  %v478 = vpack.c.bf16 %v466, %v465
  %v479 = vpack.c.bf16 %v468, %v467
  %v480 = vpack.c.bf16 %v470, %v469
  %v481 = vpack.c.bf16 %v472, %v471
  %v482 = vpack.c.bf16 %v473, %v473
  %s483 = scalar_lea.vmem %s1, 384
  %v484 = vld [vmem:[%s483] sm:$0xff]
  %v485 = vld [vmem:[%s483 + $0x8] sm:$0xff]
  %v486 = vld [vmem:[%s483 + $0x10] sm:$0xff]
  %v487 = vld [vmem:[%s483 + $0x18] sm:$0xff]
  %v488 = vld [vmem:[%s483 + $0x20] sm:$0xff]
  %v489 = vld [vmem:[%s483 + $0x28] sm:$0xff]
  %v490 = vld [vmem:[%s483 + $0x30] sm:$0xff]
  %v491 = vld [vmem:[%s483 + $0x38] sm:$0xff]
  %v492 = vld [vmem:[%s483 + $0x40] sm:$0xff]
  %v493 = vld [vmem:[%s483 + $0x48] sm:$0xff]
  %v494 = vld [vmem:[%s483 + $0x50] sm:$0xff]
  %v495 = vld [vmem:[%s483 + $0x58] sm:$0xff]
  %v496 = vld [vmem:[%s483 + $0x60] sm:$0xff]
  %v497 = vld [vmem:[%s483 + $0x68] sm:$0xff]
  %v498 = vld [vmem:[%s483 + $0x70] sm:$0xff]
  %v499 = vld [vmem:[%s483 + $0x78] sm:$0xff]
  %501 = vset.pattern.permute.xlu0 0
  %502 = vperm.xlu0 %501, %v484
  %v503 = vpop.permute.xlu0 %502
  %505 = vset.pattern.permute.xlu0 0
  %506 = vperm.xlu0 %505, %v485
  %v507 = vpop.permute.xlu0 %506
  %509 = vset.pattern.permute.xlu0 0
  %510 = vperm.xlu0 %509, %v486
  %v511 = vpop.permute.xlu0 %510
  %513 = vset.pattern.permute.xlu0 0
  %514 = vperm.xlu0 %513, %v487
  %v515 = vpop.permute.xlu0 %514
  %517 = vset.pattern.permute.xlu0 0
  %518 = vperm.xlu0 %517, %v488
  %v519 = vpop.permute.xlu0 %518
  %521 = vset.pattern.permute.xlu0 0
  %522 = vperm.xlu0 %521, %v489
  %v523 = vpop.permute.xlu0 %522
  %525 = vset.pattern.permute.xlu0 0
  %526 = vperm.xlu0 %525, %v490
  %v527 = vpop.permute.xlu0 %526
  %529 = vset.pattern.permute.xlu0 0
  %530 = vperm.xlu0 %529, %v491
  %v531 = vpop.permute.xlu0 %530
  %533 = vset.pattern.permute.xlu0 0
  %534 = vperm.xlu0 %533, %v492
  %v535 = vpop.permute.xlu0 %534
  %537 = vset.pattern.permute.xlu0 0
  %538 = vperm.xlu0 %537, %v493
  %v539 = vpop.permute.xlu0 %538
  %541 = vset.pattern.permute.xlu0 0
  %542 = vperm.xlu0 %541, %v494
  %v543 = vpop.permute.xlu0 %542
  %545 = vset.pattern.permute.xlu0 0
  %546 = vperm.xlu0 %545, %v495
  %v547 = vpop.permute.xlu0 %546
  %549 = vset.pattern.permute.xlu0 0
  %550 = vperm.xlu0 %549, %v496
  %v551 = vpop.permute.xlu0 %550
  %553 = vset.pattern.permute.xlu0 0
  %554 = vperm.xlu0 %553, %v497
  %v555 = vpop.permute.xlu0 %554
  %557 = vset.pattern.permute.xlu0 0
  %558 = vperm.xlu0 %557, %v498
  %v559 = vpop.permute.xlu0 %558
  %561 = vset.pattern.permute.xlu0 0
  %562 = vperm.xlu0 %561, %v499
  %v563 = vpop.permute.xlu0 %562
  %v564 = vrot.slane %v503, 1
  %v565 = vrot.slane %v507, 1
  %v566 = vsel %vm131, %v564, %v565
  %v567 = vrot.slane %v511, 1
  %v568 = vsel %vm131, %v565, %v567
  %v569 = vrot.slane %v515, 1
  %v570 = vsel %vm131, %v567, %v569
  %v571 = vrot.slane %v519, 1
  %v572 = vsel %vm131, %v569, %v571
  %v573 = vrot.slane %v523, 1
  %v574 = vsel %vm131, %v571, %v573
  %v575 = vrot.slane %v527, 1
  %v576 = vsel %vm131, %v573, %v575
  %v577 = vrot.slane %v531, 1
  %v578 = vsel %vm131, %v575, %v577
  %v579 = vrot.slane %v535, 1
  %v580 = vsel %vm131, %v577, %v579
  %v581 = vrot.slane %v539, 1
  %v582 = vsel %vm131, %v579, %v581
  %v583 = vrot.slane %v543, 1
  %v584 = vsel %vm131, %v581, %v583
  %v585 = vrot.slane %v547, 1
  %v586 = vsel %vm131, %v583, %v585
  %v587 = vrot.slane %v551, 1
  %v588 = vsel %vm131, %v585, %v587
  %v589 = vrot.slane %v555, 1
  %v590 = vsel %vm131, %v587, %v589
  %v591 = vrot.slane %v559, 1
  %v592 = vsel %vm131, %v589, %v591
  %v593 = vrot.slane %v563, 1
  %v594 = vsel %vm131, %v591, %v593
  %v612 = vmul.f32 %v564, 0.0
  %v613 = vmul.f32 %v35, %v566
  %v614 = vmul.f32 %v36, %v568
  %v615 = vmul.f32 %v37, %v570
  %v616 = vmul.f32 %v38, %v572
  %v617 = vmul.f32 %v39, %v574
  %v618 = vmul.f32 %v40, %v576
  %v619 = vmul.f32 %v41, %v578
  %v620 = vmul.f32 %v42, %v580
  %v621 = vmul.f32 %v43, %v582
  %v622 = vmul.f32 %v44, %v584
  %v623 = vmul.f32 %v45, %v586
  %v624 = vmul.f32 %v46, %v588
  %v625 = vmul.f32 %v47, %v590
  %v626 = vmul.f32 %v48, %v592
  %v627 = vmul.f32 %v49, %v594
  %v628 = vmul.f32 %v50, %v593
  %v629 = vpack.c.bf16 %v613, %v612
  %v630 = vpack.c.bf16 %v615, %v614
  %v631 = vpack.c.bf16 %v617, %v616
  %v632 = vpack.c.bf16 %v619, %v618
  %v633 = vpack.c.bf16 %v621, %v620
  %v634 = vpack.c.bf16 %v623, %v622
  %v635 = vpack.c.bf16 %v625, %v624
  %v636 = vpack.c.bf16 %v627, %v626
  %v637 = vpack.c.bf16 %v628, %v628
  %s638 = scalar_lea.vmem %s1, 512
  %v639 = vld [vmem:[%s638] sm:$0xff]
  %v640 = vld [vmem:[%s638 + $0x8] sm:$0xff]
  %v641 = vld [vmem:[%s638 + $0x10] sm:$0xff]
  %v642 = vld [vmem:[%s638 + $0x18] sm:$0xff]
  %v643 = vld [vmem:[%s638 + $0x20] sm:$0xff]
  %v644 = vld [vmem:[%s638 + $0x28] sm:$0xff]
  %v645 = vld [vmem:[%s638 + $0x30] sm:$0xff]
  %v646 = vld [vmem:[%s638 + $0x38] sm:$0xff]
  %v647 = vld [vmem:[%s638 + $0x40] sm:$0xff]
  %v648 = vld [vmem:[%s638 + $0x48] sm:$0xff]
  %v649 = vld [vmem:[%s638 + $0x50] sm:$0xff]
  %v650 = vld [vmem:[%s638 + $0x58] sm:$0xff]
  %v651 = vld [vmem:[%s638 + $0x60] sm:$0xff]
  %v652 = vld [vmem:[%s638 + $0x68] sm:$0xff]
  %v653 = vld [vmem:[%s638 + $0x70] sm:$0xff]
  %v654 = vld [vmem:[%s638 + $0x78] sm:$0xff]
  %656 = vset.pattern.permute.xlu0 0
  %657 = vperm.xlu0 %656, %v639
  %v658 = vpop.permute.xlu0 %657
  %661 = vset.pattern.permute.xlu0 0
  %662 = vperm.xlu0 %661, %v640
  %v663 = vpop.permute.xlu0 %662
  %666 = vset.pattern.permute.xlu0 0
  %667 = vperm.xlu0 %666, %v641
  %v668 = vpop.permute.xlu0 %667
  %671 = vset.pattern.permute.xlu0 0
  %672 = vperm.xlu0 %671, %v642
  %v673 = vpop.permute.xlu0 %672
  %676 = vset.pattern.permute.xlu0 0
  %677 = vperm.xlu0 %676, %v643
  %v678 = vpop.permute.xlu0 %677
  %681 = vset.pattern.permute.xlu0 0
  %682 = vperm.xlu0 %681, %v644
  %v683 = vpop.permute.xlu0 %682
  %686 = vset.pattern.permute.xlu0 0
  %687 = vperm.xlu0 %686, %v645
  %v688 = vpop.permute.xlu0 %687
  %691 = vset.pattern.permute.xlu0 0
  %692 = vperm.xlu0 %691, %v646
  %v693 = vpop.permute.xlu0 %692
  %696 = vset.pattern.permute.xlu0 0
  %697 = vperm.xlu0 %696, %v647
  %v698 = vpop.permute.xlu0 %697
  %701 = vset.pattern.permute.xlu0 0
  %702 = vperm.xlu0 %701, %v648
  %v703 = vpop.permute.xlu0 %702
  %706 = vset.pattern.permute.xlu0 0
  %707 = vperm.xlu0 %706, %v649
  %v708 = vpop.permute.xlu0 %707
  %711 = vset.pattern.permute.xlu0 0
  %712 = vperm.xlu0 %711, %v650
  %v713 = vpop.permute.xlu0 %712
  %716 = vset.pattern.permute.xlu0 0
  %717 = vperm.xlu0 %716, %v651
  %v718 = vpop.permute.xlu0 %717
  %721 = vset.pattern.permute.xlu0 0
  %722 = vperm.xlu0 %721, %v652
  %v723 = vpop.permute.xlu0 %722
  %726 = vset.pattern.permute.xlu0 0
  %727 = vperm.xlu0 %726, %v653
  %v728 = vpop.permute.xlu0 %727
  %731 = vset.pattern.permute.xlu0 0
  %732 = vperm.xlu0 %731, %v654
  %v733 = vpop.permute.xlu0 %732
  %v735 = vmul.f32 %v35, %v658
  %v736 = vmul.f32 %v36, %v663
  %v737 = vmul.f32 %v37, %v668
  %v738 = vmul.f32 %v38, %v673
  %v739 = vmul.f32 %v39, %v678
  %v740 = vmul.f32 %v40, %v683
  %v741 = vmul.f32 %v41, %v688
  %v742 = vmul.f32 %v42, %v693
  %v743 = vmul.f32 %v43, %v698
  %v744 = vmul.f32 %v44, %v703
  %v745 = vmul.f32 %v45, %v708
  %v746 = vmul.f32 %v46, %v713
  %v747 = vmul.f32 %v47, %v718
  %v748 = vmul.f32 %v48, %v723
  %v749 = vmul.f32 %v49, %v728
  %v750 = vmul.f32 %v50, %v733
  %v751 = vpack.c.bf16 %v736, %v735
  %v752 = vpack.c.bf16 %v738, %v737
  %v753 = vpack.c.bf16 %v740, %v739
  %v754 = vpack.c.bf16 %v742, %v741
  %v755 = vpack.c.bf16 %v744, %v743
  %v756 = vpack.c.bf16 %v746, %v745
  %v757 = vpack.c.bf16 %v748, %v747
  %v758 = vpack.c.bf16 %v750, %v749
  %s759 = scalar_lea.vmem %s1, 640
  %v760 = vld [vmem:[%s759] sm:$0xff]
  %v761 = vld [vmem:[%s759 + $0x8] sm:$0xff]
  %v762 = vld [vmem:[%s759 + $0x10] sm:$0xff]
  %v763 = vld [vmem:[%s759 + $0x18] sm:$0xff]
  %v764 = vld [vmem:[%s759 + $0x20] sm:$0xff]
  %v765 = vld [vmem:[%s759 + $0x28] sm:$0xff]
  %v766 = vld [vmem:[%s759 + $0x30] sm:$0xff]
  %v767 = vld [vmem:[%s759 + $0x38] sm:$0xff]
  %v768 = vld [vmem:[%s759 + $0x40] sm:$0xff]
  %v769 = vld [vmem:[%s759 + $0x48] sm:$0xff]
  %v770 = vld [vmem:[%s759 + $0x50] sm:$0xff]
  %v771 = vld [vmem:[%s759 + $0x58] sm:$0xff]
  %v772 = vld [vmem:[%s759 + $0x60] sm:$0xff]
  %v773 = vld [vmem:[%s759 + $0x68] sm:$0xff]
  %v774 = vld [vmem:[%s759 + $0x70] sm:$0xff]
  %v775 = vld [vmem:[%s759 + $0x78] sm:$0xff]
  %777 = vset.pattern.permute.xlu0 0
  %778 = vperm.xlu0 %777, %v760
  %v779 = vpop.permute.xlu0 %778
  %781 = vset.pattern.permute.xlu0 0
  %782 = vperm.xlu0 %781, %v761
  %v783 = vpop.permute.xlu0 %782
  %785 = vset.pattern.permute.xlu0 0
  %786 = vperm.xlu0 %785, %v762
  %v787 = vpop.permute.xlu0 %786
  %789 = vset.pattern.permute.xlu0 0
  %790 = vperm.xlu0 %789, %v763
  %v791 = vpop.permute.xlu0 %790
  %793 = vset.pattern.permute.xlu0 0
  %794 = vperm.xlu0 %793, %v764
  %v795 = vpop.permute.xlu0 %794
  %797 = vset.pattern.permute.xlu0 0
  %798 = vperm.xlu0 %797, %v765
  %v799 = vpop.permute.xlu0 %798
  %801 = vset.pattern.permute.xlu0 0
  %802 = vperm.xlu0 %801, %v766
  %v803 = vpop.permute.xlu0 %802
  %805 = vset.pattern.permute.xlu0 0
  %806 = vperm.xlu0 %805, %v767
  %v807 = vpop.permute.xlu0 %806
  %809 = vset.pattern.permute.xlu0 0
  %810 = vperm.xlu0 %809, %v768
  %v811 = vpop.permute.xlu0 %810
  %813 = vset.pattern.permute.xlu0 0
  %814 = vperm.xlu0 %813, %v769
  %v815 = vpop.permute.xlu0 %814
  %817 = vset.pattern.permute.xlu0 0
  %818 = vperm.xlu0 %817, %v770
  %v819 = vpop.permute.xlu0 %818
  %821 = vset.pattern.permute.xlu0 0
  %822 = vperm.xlu0 %821, %v771
  %v823 = vpop.permute.xlu0 %822
  %825 = vset.pattern.permute.xlu0 0
  %826 = vperm.xlu0 %825, %v772
  %v827 = vpop.permute.xlu0 %826
  %829 = vset.pattern.permute.xlu0 0
  %830 = vperm.xlu0 %829, %v773
  %v831 = vpop.permute.xlu0 %830
  %833 = vset.pattern.permute.xlu0 0
  %834 = vperm.xlu0 %833, %v774
  %v835 = vpop.permute.xlu0 %834
  %837 = vset.pattern.permute.xlu0 0
  %838 = vperm.xlu0 %837, %v775
  %v839 = vpop.permute.xlu0 %838
  %v840 = vrot.slane %v779, 7
  %v841 = vrot.slane %v783, 7
  %v842 = vsel %vm408, %v840, %v841
  %v843 = vrot.slane %v787, 7
  %v844 = vsel %vm408, %v841, %v843
  %v845 = vrot.slane %v791, 7
  %v846 = vsel %vm408, %v843, %v845
  %v847 = vrot.slane %v795, 7
  %v848 = vsel %vm408, %v845, %v847
  %v849 = vrot.slane %v799, 7
  %v850 = vsel %vm408, %v847, %v849
  %v851 = vrot.slane %v803, 7
  %v852 = vsel %vm408, %v849, %v851
  %v853 = vrot.slane %v807, 7
  %v854 = vsel %vm408, %v851, %v853
  %v855 = vrot.slane %v811, 7
  %v856 = vsel %vm408, %v853, %v855
  %v857 = vrot.slane %v815, 7
  %v858 = vsel %vm408, %v855, %v857
  %v859 = vrot.slane %v819, 7
  %v860 = vsel %vm408, %v857, %v859
  %v861 = vrot.slane %v823, 7
  %v862 = vsel %vm408, %v859, %v861
  %v863 = vrot.slane %v827, 7
  %v864 = vsel %vm408, %v861, %v863
  %v865 = vrot.slane %v831, 7
  %v866 = vsel %vm408, %v863, %v865
  %v867 = vrot.slane %v835, 7
  %v868 = vsel %vm408, %v865, %v867
  %v869 = vrot.slane %v839, 7
  %v870 = vsel %vm408, %v867, %v869
  %v888 = vmul.f32 %v35, %v840
  %v889 = vmul.f32 %v36, %v842
  %v890 = vmul.f32 %v37, %v844
  %v891 = vmul.f32 %v38, %v846
  %v892 = vmul.f32 %v39, %v848
  %v893 = vmul.f32 %v40, %v850
  %v894 = vmul.f32 %v41, %v852
  %v895 = vmul.f32 %v42, %v854
  %v896 = vmul.f32 %v43, %v856
  %v897 = vmul.f32 %v44, %v858
  %v898 = vmul.f32 %v45, %v860
  %v899 = vmul.f32 %v46, %v862
  %v900 = vmul.f32 %v47, %v864
  %v901 = vmul.f32 %v48, %v866
  %v902 = vmul.f32 %v49, %v868
  %v903 = vmul.f32 %v50, %v870
  %v904 = vmul.f32 %v869, 0.0
  %v905 = vpack.c.bf16 %v889, %v888
  %v906 = vpack.c.bf16 %v891, %v890
  %v907 = vpack.c.bf16 %v893, %v892
  %v908 = vpack.c.bf16 %v895, %v894
  %v909 = vpack.c.bf16 %v897, %v896
  %v910 = vpack.c.bf16 %v899, %v898
  %v911 = vpack.c.bf16 %v901, %v900
  %v912 = vpack.c.bf16 %v903, %v902
  %v913 = vpack.c.bf16 %v904, %v904
  %s914 = scalar_lea.vmem %s1, 768
  %v915 = vld [vmem:[%s914] sm:$0xff]
  %v916 = vld [vmem:[%s914 + $0x8] sm:$0xff]
  %v917 = vld [vmem:[%s914 + $0x10] sm:$0xff]
  %v918 = vld [vmem:[%s914 + $0x18] sm:$0xff]
  %v919 = vld [vmem:[%s914 + $0x20] sm:$0xff]
  %v920 = vld [vmem:[%s914 + $0x28] sm:$0xff]
  %v921 = vld [vmem:[%s914 + $0x30] sm:$0xff]
  %v922 = vld [vmem:[%s914 + $0x38] sm:$0xff]
  %v923 = vld [vmem:[%s914 + $0x40] sm:$0xff]
  %v924 = vld [vmem:[%s914 + $0x48] sm:$0xff]
  %v925 = vld [vmem:[%s914 + $0x50] sm:$0xff]
  %v926 = vld [vmem:[%s914 + $0x58] sm:$0xff]
  %v927 = vld [vmem:[%s914 + $0x60] sm:$0xff]
  %v928 = vld [vmem:[%s914 + $0x68] sm:$0xff]
  %v929 = vld [vmem:[%s914 + $0x70] sm:$0xff]
  %v930 = vld [vmem:[%s914 + $0x78] sm:$0xff]
  %932 = vset.pattern.permute.xlu0 0
  %933 = vperm.xlu0 %932, %v915
  %v934 = vpop.permute.xlu0 %933
  %936 = vset.pattern.permute.xlu0 0
  %937 = vperm.xlu0 %936, %v916
  %v938 = vpop.permute.xlu0 %937
  %940 = vset.pattern.permute.xlu0 0
  %941 = vperm.xlu0 %940, %v917
  %v942 = vpop.permute.xlu0 %941
  %944 = vset.pattern.permute.xlu0 0
  %945 = vperm.xlu0 %944, %v918
  %v946 = vpop.permute.xlu0 %945
  %948 = vset.pattern.permute.xlu0 0
  %949 = vperm.xlu0 %948, %v919
  %v950 = vpop.permute.xlu0 %949
  %952 = vset.pattern.permute.xlu0 0
  %953 = vperm.xlu0 %952, %v920
  %v954 = vpop.permute.xlu0 %953
  %956 = vset.pattern.permute.xlu0 0
  %957 = vperm.xlu0 %956, %v921
  %v958 = vpop.permute.xlu0 %957
  %960 = vset.pattern.permute.xlu0 0
  %961 = vperm.xlu0 %960, %v922
  %v962 = vpop.permute.xlu0 %961
  %964 = vset.pattern.permute.xlu0 0
  %965 = vperm.xlu0 %964, %v923
  %v966 = vpop.permute.xlu0 %965
  %968 = vset.pattern.permute.xlu0 0
  %969 = vperm.xlu0 %968, %v924
  %v970 = vpop.permute.xlu0 %969
  %972 = vset.pattern.permute.xlu0 0
  %973 = vperm.xlu0 %972, %v925
  %v974 = vpop.permute.xlu0 %973
  %976 = vset.pattern.permute.xlu0 0
  %977 = vperm.xlu0 %976, %v926
  %v978 = vpop.permute.xlu0 %977
  %980 = vset.pattern.permute.xlu0 0
  %981 = vperm.xlu0 %980, %v927
  %v982 = vpop.permute.xlu0 %981
  %984 = vset.pattern.permute.xlu0 0
  %985 = vperm.xlu0 %984, %v928
  %v986 = vpop.permute.xlu0 %985
  %988 = vset.pattern.permute.xlu0 0
  %989 = vperm.xlu0 %988, %v929
  %v990 = vpop.permute.xlu0 %989
  %992 = vset.pattern.permute.xlu0 0
  %993 = vperm.xlu0 %992, %v930
  %v994 = vpop.permute.xlu0 %993
  %v995 = vrot.slane %v934, 1
  %v996 = vrot.slane %v938, 1
  %v997 = vsel %vm131, %v995, %v996
  %v998 = vrot.slane %v942, 1
  %v999 = vsel %vm131, %v996, %v998
  %v1000 = vrot.slane %v946, 1
  %v1001 = vsel %vm131, %v998, %v1000
  %v1002 = vrot.slane %v950, 1
  %v1003 = vsel %vm131, %v1000, %v1002
  %v1004 = vrot.slane %v954, 1
  %v1005 = vsel %vm131, %v1002, %v1004
  %v1006 = vrot.slane %v958, 1
  %v1007 = vsel %vm131, %v1004, %v1006
  %v1008 = vrot.slane %v962, 1
  %v1009 = vsel %vm131, %v1006, %v1008
  %v1010 = vrot.slane %v966, 1
  %v1011 = vsel %vm131, %v1008, %v1010
  %v1012 = vrot.slane %v970, 1
  %v1013 = vsel %vm131, %v1010, %v1012
  %v1014 = vrot.slane %v974, 1
  %v1015 = vsel %vm131, %v1012, %v1014
  %v1016 = vrot.slane %v978, 1
  %v1017 = vsel %vm131, %v1014, %v1016
  %v1018 = vrot.slane %v982, 1
  %v1019 = vsel %vm131, %v1016, %v1018
  %v1020 = vrot.slane %v986, 1
  %v1021 = vsel %vm131, %v1018, %v1020
  %v1022 = vrot.slane %v990, 1
  %v1023 = vsel %vm131, %v1020, %v1022
  %v1024 = vrot.slane %v994, 1
  %v1025 = vsel %vm131, %v1022, %v1024
  %v1043 = vmul.f32 %v35, %v995
  %v1044 = vmul.f32 %v36, %v997
  %v1045 = vmul.f32 %v37, %v999
  %v1046 = vmul.f32 %v38, %v1001
  %v1047 = vmul.f32 %v39, %v1003
  %v1048 = vmul.f32 %v40, %v1005
  %v1049 = vmul.f32 %v41, %v1007
  %v1050 = vmul.f32 %v42, %v1009
  %v1051 = vmul.f32 %v43, %v1011
  %v1052 = vmul.f32 %v44, %v1013
  %v1053 = vmul.f32 %v45, %v1015
  %v1054 = vmul.f32 %v46, %v1017
  %v1055 = vmul.f32 %v47, %v1019
  %v1056 = vmul.f32 %v48, %v1021
  %v1057 = vmul.f32 %v49, %v1023
  %v1058 = vmul.f32 %v50, %v1025
  %v1059 = vmul.f32 %v1024, 0.0
  %v1060 = vpack.c.bf16 %v1044, %v1043
  %v1061 = vpack.c.bf16 %v1046, %v1045
  %v1062 = vpack.c.bf16 %v1048, %v1047
  %v1063 = vpack.c.bf16 %v1050, %v1049
  %v1064 = vpack.c.bf16 %v1052, %v1051
  %v1065 = vpack.c.bf16 %v1054, %v1053
  %v1066 = vpack.c.bf16 %v1056, %v1055
  %v1067 = vpack.c.bf16 %v1058, %v1057
  %v1068 = vpack.c.bf16 %v1059, %v1059
  %s1069 = scalar_lea.vmem %s1, 896
  %v1070 = vld [vmem:[%s1069] sm:$0xff]
  %v1071 = vld [vmem:[%s1069 + $0x8] sm:$0xff]
  %v1072 = vld [vmem:[%s1069 + $0x10] sm:$0xff]
  %v1073 = vld [vmem:[%s1069 + $0x18] sm:$0xff]
  %v1074 = vld [vmem:[%s1069 + $0x20] sm:$0xff]
  %v1075 = vld [vmem:[%s1069 + $0x28] sm:$0xff]
  %v1076 = vld [vmem:[%s1069 + $0x30] sm:$0xff]
  %v1077 = vld [vmem:[%s1069 + $0x38] sm:$0xff]
  %v1078 = vld [vmem:[%s1069 + $0x40] sm:$0xff]
  %v1079 = vld [vmem:[%s1069 + $0x48] sm:$0xff]
  %v1080 = vld [vmem:[%s1069 + $0x50] sm:$0xff]
  %v1081 = vld [vmem:[%s1069 + $0x58] sm:$0xff]
  %v1082 = vld [vmem:[%s1069 + $0x60] sm:$0xff]
  %v1083 = vld [vmem:[%s1069 + $0x68] sm:$0xff]
  %v1084 = vld [vmem:[%s1069 + $0x70] sm:$0xff]
  %v1085 = vld [vmem:[%s1069 + $0x78] sm:$0xff]
  %1087 = vset.pattern.permute.xlu0 0
  %1088 = vperm.xlu0 %1087, %v1070
  %v1089 = vpop.permute.xlu0 %1088
  %1092 = vset.pattern.permute.xlu0 0
  %1093 = vperm.xlu0 %1092, %v1071
  %v1094 = vpop.permute.xlu0 %1093
  %1097 = vset.pattern.permute.xlu0 0
  %1098 = vperm.xlu0 %1097, %v1072
  %v1099 = vpop.permute.xlu0 %1098
  %1102 = vset.pattern.permute.xlu0 0
  %1103 = vperm.xlu0 %1102, %v1073
  %v1104 = vpop.permute.xlu0 %1103
  %1107 = vset.pattern.permute.xlu0 0
  %1108 = vperm.xlu0 %1107, %v1074
  %v1109 = vpop.permute.xlu0 %1108
  %1112 = vset.pattern.permute.xlu0 0
  %1113 = vperm.xlu0 %1112, %v1075
  %v1114 = vpop.permute.xlu0 %1113
  %1117 = vset.pattern.permute.xlu0 0
  %1118 = vperm.xlu0 %1117, %v1076
  %v1119 = vpop.permute.xlu0 %1118
  %1122 = vset.pattern.permute.xlu0 0
  %1123 = vperm.xlu0 %1122, %v1077
  %v1124 = vpop.permute.xlu0 %1123
  %1127 = vset.pattern.permute.xlu0 0
  %1128 = vperm.xlu0 %1127, %v1078
  %v1129 = vpop.permute.xlu0 %1128
  %1132 = vset.pattern.permute.xlu0 0
  %1133 = vperm.xlu0 %1132, %v1079
  %v1134 = vpop.permute.xlu0 %1133
  %1137 = vset.pattern.permute.xlu0 0
  %1138 = vperm.xlu0 %1137, %v1080
  %v1139 = vpop.permute.xlu0 %1138
  %1142 = vset.pattern.permute.xlu0 0
  %1143 = vperm.xlu0 %1142, %v1081
  %v1144 = vpop.permute.xlu0 %1143
  %1147 = vset.pattern.permute.xlu0 0
  %1148 = vperm.xlu0 %1147, %v1082
  %v1149 = vpop.permute.xlu0 %1148
  %1152 = vset.pattern.permute.xlu0 0
  %1153 = vperm.xlu0 %1152, %v1083
  %v1154 = vpop.permute.xlu0 %1153
  %1157 = vset.pattern.permute.xlu0 0
  %1158 = vperm.xlu0 %1157, %v1084
  %v1159 = vpop.permute.xlu0 %1158
  %1162 = vset.pattern.permute.xlu0 0
  %1163 = vperm.xlu0 %1162, %v1085
  %v1164 = vpop.permute.xlu0 %1163
  %v1166 = vmul.f32 %v36, %v1089
  %v1167 = vmul.f32 %v37, %v1094
  %v1168 = vmul.f32 %v38, %v1099
  %v1169 = vmul.f32 %v39, %v1104
  %v1170 = vmul.f32 %v40, %v1109
  %v1171 = vmul.f32 %v41, %v1114
  %v1172 = vmul.f32 %v42, %v1119
  %v1173 = vmul.f32 %v43, %v1124
  %v1174 = vmul.f32 %v44, %v1129
  %v1175 = vmul.f32 %v45, %v1134
  %v1176 = vmul.f32 %v46, %v1139
  %v1177 = vmul.f32 %v47, %v1144
  %v1178 = vmul.f32 %v48, %v1149
  %v1179 = vmul.f32 %v49, %v1154
  %v1180 = vmul.f32 %v50, %v1159
  %v1181 = vmul.f32 %v1164, 0.0
  %v1182 = vpack.c.bf16 %v1167, %v1166
  %v1183 = vpack.c.bf16 %v1169, %v1168
  %v1184 = vpack.c.bf16 %v1171, %v1170
  %v1185 = vpack.c.bf16 %v1173, %v1172
  %v1186 = vpack.c.bf16 %v1175, %v1174
  %v1187 = vpack.c.bf16 %v1177, %v1176
  %v1188 = vpack.c.bf16 %v1179, %v1178
  %v1189 = vpack.c.bf16 %v1181, %v1180
  %s1190 = scalar_lea.vmem %s1, 1024
  %v1191 = vld [vmem:[%s1190] sm:$0xff]
  %v1192 = vld [vmem:[%s1190 + $0x8] sm:$0xff]
  %v1193 = vld [vmem:[%s1190 + $0x10] sm:$0xff]
  %v1194 = vld [vmem:[%s1190 + $0x18] sm:$0xff]
  %v1195 = vld [vmem:[%s1190 + $0x20] sm:$0xff]
  %v1196 = vld [vmem:[%s1190 + $0x28] sm:$0xff]
  %v1197 = vld [vmem:[%s1190 + $0x30] sm:$0xff]
  %v1198 = vld [vmem:[%s1190 + $0x38] sm:$0xff]
  %v1199 = vld [vmem:[%s1190 + $0x40] sm:$0xff]
  %v1200 = vld [vmem:[%s1190 + $0x48] sm:$0xff]
  %v1201 = vld [vmem:[%s1190 + $0x50] sm:$0xff]
  %v1202 = vld [vmem:[%s1190 + $0x58] sm:$0xff]
  %v1203 = vld [vmem:[%s1190 + $0x60] sm:$0xff]
  %v1204 = vld [vmem:[%s1190 + $0x68] sm:$0xff]
  %v1205 = vld [vmem:[%s1190 + $0x70] sm:$0xff]
  %v1206 = vld [vmem:[%s1190 + $0x78] sm:$0xff]
  %1208 = vset.pattern.permute.xlu0 0
  %1209 = vperm.xlu0 %1208, %v1191
  %v1210 = vpop.permute.xlu0 %1209
  %1212 = vset.pattern.permute.xlu0 0
  %1213 = vperm.xlu0 %1212, %v1192
  %v1214 = vpop.permute.xlu0 %1213
  %1216 = vset.pattern.permute.xlu0 0
  %1217 = vperm.xlu0 %1216, %v1193
  %v1218 = vpop.permute.xlu0 %1217
  %1220 = vset.pattern.permute.xlu0 0
  %1221 = vperm.xlu0 %1220, %v1194
  %v1222 = vpop.permute.xlu0 %1221
  %1224 = vset.pattern.permute.xlu0 0
  %1225 = vperm.xlu0 %1224, %v1195
  %v1226 = vpop.permute.xlu0 %1225
  %1228 = vset.pattern.permute.xlu0 0
  %1229 = vperm.xlu0 %1228, %v1196
  %v1230 = vpop.permute.xlu0 %1229
  %1232 = vset.pattern.permute.xlu0 0
  %1233 = vperm.xlu0 %1232, %v1197
  %v1234 = vpop.permute.xlu0 %1233
  %1236 = vset.pattern.permute.xlu0 0
  %1237 = vperm.xlu0 %1236, %v1198
  %v1238 = vpop.permute.xlu0 %1237
  %1240 = vset.pattern.permute.xlu0 0
  %1241 = vperm.xlu0 %1240, %v1199
  %v1242 = vpop.permute.xlu0 %1241
  %1244 = vset.pattern.permute.xlu0 0
  %1245 = vperm.xlu0 %1244, %v1200
  %v1246 = vpop.permute.xlu0 %1245
  %1248 = vset.pattern.permute.xlu0 0
  %1249 = vperm.xlu0 %1248, %v1201
  %v1250 = vpop.permute.xlu0 %1249
  %1252 = vset.pattern.permute.xlu0 0
  %1253 = vperm.xlu0 %1252, %v1202
  %v1254 = vpop.permute.xlu0 %1253
  %1256 = vset.pattern.permute.xlu0 0
  %1257 = vperm.xlu0 %1256, %v1203
  %v1258 = vpop.permute.xlu0 %1257
  %1260 = vset.pattern.permute.xlu0 0
  %1261 = vperm.xlu0 %1260, %v1204
  %v1262 = vpop.permute.xlu0 %1261
  %1264 = vset.pattern.permute.xlu0 0
  %1265 = vperm.xlu0 %1264, %v1205
  %v1266 = vpop.permute.xlu0 %1265
  %1268 = vset.pattern.permute.xlu0 0
  %1269 = vperm.xlu0 %1268, %v1206
  %v1270 = vpop.permute.xlu0 %1269
  %v1271 = vrot.slane %v1210, 7
  %v1272 = vrot.slane %v1214, 7
  %v1273 = vsel %vm408, %v1271, %v1272
  %v1274 = vrot.slane %v1218, 7
  %v1275 = vsel %vm408, %v1272, %v1274
  %v1276 = vrot.slane %v1222, 7
  %v1277 = vsel %vm408, %v1274, %v1276
  %v1278 = vrot.slane %v1226, 7
  %v1279 = vsel %vm408, %v1276, %v1278
  %v1280 = vrot.slane %v1230, 7
  %v1281 = vsel %vm408, %v1278, %v1280
  %v1282 = vrot.slane %v1234, 7
  %v1283 = vsel %vm408, %v1280, %v1282
  %v1284 = vrot.slane %v1238, 7
  %v1285 = vsel %vm408, %v1282, %v1284
  %v1286 = vrot.slane %v1242, 7
  %v1287 = vsel %vm408, %v1284, %v1286
  %v1288 = vrot.slane %v1246, 7
  %v1289 = vsel %vm408, %v1286, %v1288
  %v1290 = vrot.slane %v1250, 7
  %v1291 = vsel %vm408, %v1288, %v1290
  %v1292 = vrot.slane %v1254, 7
  %v1293 = vsel %vm408, %v1290, %v1292
  %v1294 = vrot.slane %v1258, 7
  %v1295 = vsel %vm408, %v1292, %v1294
  %v1296 = vrot.slane %v1262, 7
  %v1297 = vsel %vm408, %v1294, %v1296
  %v1298 = vrot.slane %v1266, 7
  %v1299 = vsel %vm408, %v1296, %v1298
  %v1300 = vrot.slane %v1270, 7
  %v1301 = vsel %vm408, %v1298, %v1300
  %v1319 = vmul.f32 %v36, %v1271
  %v1320 = vmul.f32 %v37, %v1273
  %v1321 = vmul.f32 %v38, %v1275
  %v1322 = vmul.f32 %v39, %v1277
  %v1323 = vmul.f32 %v40, %v1279
  %v1324 = vmul.f32 %v41, %v1281
  %v1325 = vmul.f32 %v42, %v1283
  %v1326 = vmul.f32 %v43, %v1285
  %v1327 = vmul.f32 %v44, %v1287
  %v1328 = vmul.f32 %v45, %v1289
  %v1329 = vmul.f32 %v46, %v1291
  %v1330 = vmul.f32 %v47, %v1293
  %v1331 = vmul.f32 %v48, %v1295
  %v1332 = vmul.f32 %v49, %v1297
  %v1333 = vmul.f32 %v50, %v1299
  %v1334 = vmul.f32 %v1301, 0.0
  %v1335 = vmul.f32 %v1300, 0.0
  %v1336 = vpack.c.bf16 %v1320, %v1319
  %v1337 = vpack.c.bf16 %v1322, %v1321
  %v1338 = vpack.c.bf16 %v1324, %v1323
  %v1339 = vpack.c.bf16 %v1326, %v1325
  %v1340 = vpack.c.bf16 %v1328, %v1327
  %v1341 = vpack.c.bf16 %v1330, %v1329
  %v1342 = vpack.c.bf16 %v1332, %v1331
  %v1343 = vpack.c.bf16 %v1334, %v1333
  %v1344 = vpack.c.bf16 %v1335, %v1335
  %v1345 = vld [vmem:[%s2] sm:$0x3]
  %s1346 = scalar_lea.vmem %s2, 2
  %v1347 = vld [vmem:[%s1346] sm:$0x3]
  %vm1348 = vcmask 31744
  %v1350 = vsel %vm1348, %v319, 0
  %v1353 = vsel %vm1348, %v320, 0
  %v1356 = vsel %vm1348, %v321, 0
  %v1359 = vsel %vm1348, %v322, 0
  %v1362 = vsel %vm1348, %v323, 0
  %v1365 = vsel %vm1348, %v324, 0
  %v1368 = vsel %vm1348, %v325, 0
  %v1371 = vsel %vm1348, %v326, 0
  %vm1373 = vcmask 1041408
  %v1375 = vsel %vm1373, %v1347, 0
  %1377 = vmatprep.subr.bf16.mxu0 0
  %1378 = vmatpush1.bf16.msra.mxu0 0
  %1379 = vmatprep.subr.bf16.mxu0 0
  %1380 = vmatpush1.bf16.msra.mxu0 0
  %1381 = vmatprep.subr.bf16.mxu0 0
  %1382 = vmatpush1.bf16.msra.mxu0 0
  %1383 = vmatprep.subr.bf16.mxu0 0
  %1384 = vmatpush1.bf16.msra.mxu0 0
  %1385 = vmatprep.subr.bf16.mxu0 0
  %1386 = vmatpush1.bf16.msra.mxu0 0
  %1387 = vmatprep.subr.bf16.mxu0 0
  %1388 = vmatpush1.bf16.msra.mxu0 0
  %1389 = vmatprep.subr.bf16.mxu0 0
  %1390 = vmatpush1.bf16.msra.mxu0 0
  %1391 = vmatprep.subr.bf16.mxu0 0
  %1392 = vmatpush1.bf16.msra.mxu0 %v1375
  %1393 = vmatprep.subr.bf16.mxu0 0
  %1394 = vmatpush2.bf16.msra.mxu0 0
  %1395 = vmatprep.subr.bf16.mxu0 0
  %1396 = vmatpush2.bf16.msra.mxu0 0
  %1397 = vmatprep.subr.bf16.mxu0 0
  %1398 = vmatpush2.bf16.msra.mxu0 0
  %1399 = vmatprep.subr.bf16.mxu0 0
  %1400 = vmatpush2.bf16.msra.mxu0 0
  %1401 = vmatprep.subr.bf16.mxu0 0
  %1402 = vmatpush2.bf16.msra.mxu0 0
  %1403 = vmatprep.subr.bf16.mxu0 0
  %1404 = vmatpush2.bf16.msra.mxu0 0
  %1405 = vmatprep.subr.bf16.mxu0 0
  %1406 = vmatpush2.bf16.msra.mxu0 0
  %1407 = vmatprep.subr.bf16.mxu0 0
  %1408 = vmatpush2.bf16.msra.mxu0 0
  %1409 = vmatprep.mubr.bf16.mxu0 0
  %1410 = vmatmul.mubr.bf16.gmra.mxu0 %v1350
  %v1411 = vpop.f32.mrf.mxu0
  %v1412 = vadd.f32 0.0, %v1411
  %v1413 = vpop.f32.mrf.mxu0
  %v1414 = vpop.f32.mrf.mxu0
  %v1415 = vadd.f32 0.0, %v1414
  %v1416 = vpop.f32.mrf.mxu0
  %1417 = vmatprep.mubr.bf16.mxu0 0
  %1418 = vmatmul.mubr.bf16.gmra.mxu0 %v1353
  %v1419 = vpop.f32.mrf.mxu0
  %v1420 = vadd.f32 0.0, %v1419
  %v1421 = vpop.f32.mrf.mxu0
  %v1422 = vpop.f32.mrf.mxu0
  %v1423 = vadd.f32 0.0, %v1422
  %v1424 = vpop.f32.mrf.mxu0
  %1425 = vmatprep.mubr.bf16.mxu0 0
  %1426 = vmatmul.mubr.bf16.gmra.mxu0 %v1356
  %v1427 = vpop.f32.mrf.mxu0
  %v1428 = vadd.f32 0.0, %v1427
  %v1429 = vpop.f32.mrf.mxu0
  %v1430 = vpop.f32.mrf.mxu0
  %v1431 = vadd.f32 0.0, %v1430
  %v1432 = vpop.f32.mrf.mxu0
  %1433 = vmatprep.mubr.bf16.mxu0 0
  %1434 = vmatmul.mubr.bf16.gmra.mxu0 %v1359
  %v1435 = vpop.f32.mrf.mxu0
  %v1436 = vadd.f32 0.0, %v1435
  %v1437 = vpop.f32.mrf.mxu0
  %v1438 = vpop.f32.mrf.mxu0
  %v1439 = vadd.f32 0.0, %v1438
  %v1440 = vpop.f32.mrf.mxu0
  %1441 = vmatprep.mubr.bf16.mxu0 0
  %1442 = vmatmul.mubr.bf16.gmra.mxu0 %v1362
  %v1443 = vpop.f32.mrf.mxu0
  %v1444 = vadd.f32 0.0, %v1443
  %v1445 = vpop.f32.mrf.mxu0
  %v1446 = vpop.f32.mrf.mxu0
  %v1447 = vadd.f32 0.0, %v1446
  %v1448 = vpop.f32.mrf.mxu0
  %1449 = vmatprep.mubr.bf16.mxu0 0
  %1450 = vmatmul.mubr.bf16.gmra.mxu0 %v1365
  %v1451 = vpop.f32.mrf.mxu0
  %v1452 = vadd.f32 0.0, %v1451
  %v1453 = vpop.f32.mrf.mxu0
  %v1454 = vpop.f32.mrf.mxu0
  %v1455 = vadd.f32 0.0, %v1454
  %v1456 = vpop.f32.mrf.mxu0
  %1457 = vmatprep.mubr.bf16.mxu0 0
  %1458 = vmatmul.mubr.bf16.gmra.mxu0 %v1368
  %v1459 = vpop.f32.mrf.mxu0
  %v1460 = vadd.f32 0.0, %v1459
  %v1461 = vpop.f32.mrf.mxu0
  %v1462 = vpop.f32.mrf.mxu0
  %v1463 = vadd.f32 0.0, %v1462
  %v1464 = vpop.f32.mrf.mxu0
  %1465 = vmatprep.mubr.bf16.mxu0 0
  %1466 = vmatmul.mubr.bf16.gmra.mxu0 %v1371
  %v1467 = vpop.f32.mrf.mxu0
  %v1468 = vadd.f32 0.0, %v1467
  %v1469 = vpop.f32.mrf.mxu0
  %v1470 = vpop.f32.mrf.mxu0
  %v1471 = vadd.f32 0.0, %v1470
  %v1472 = vpop.f32.mrf.mxu0
  %1473 = vdwg.mxu0
  %vm1474 = vsmask.f32 4352
  %v1476 = vshrl.u32 %v197, 16
  %v1478 = vrot.slane %v1476, 3
  %v1479 = vshll.u32 %v197, 16
  %v1481 = vrot.slane %v1479, 4
  %v1482 = vor.u32 %v1478, %v1481
  %v1484 = vshrl.u32 %v198, 16
  %v1486 = vrot.slane %v1484, 3
  %v1487 = vshll.u32 %v198, 16
  %v1489 = vrot.slane %v1487, 4
  %v1490 = vor.u32 %v1486, %v1489
  %v1491 = vsel %vm1474, %v1482, %v1490
  %v1493 = vshrl.u32 %v199, 16
  %v1495 = vrot.slane %v1493, 3
  %v1496 = vshll.u32 %v199, 16
  %v1498 = vrot.slane %v1496, 4
  %v1499 = vor.u32 %v1495, %v1498
  %v1500 = vsel %vm1474, %v1490, %v1499
  %v1502 = vshrl.u32 %v200, 16
  %v1504 = vrot.slane %v1502, 3
  %v1505 = vshll.u32 %v200, 16
  %v1507 = vrot.slane %v1505, 4
  %v1508 = vor.u32 %v1504, %v1507
  %v1509 = vsel %vm1474, %v1499, %v1508
  %v1511 = vshrl.u32 %v201, 16
  %v1513 = vrot.slane %v1511, 3
  %v1514 = vshll.u32 %v201, 16
  %v1516 = vrot.slane %v1514, 4
  %v1517 = vor.u32 %v1513, %v1516
  %v1518 = vsel %vm1474, %v1508, %v1517
  %v1520 = vshrl.u32 %v202, 16
  %v1522 = vrot.slane %v1520, 3
  %v1523 = vshll.u32 %v202, 16
  %v1525 = vrot.slane %v1523, 4
  %v1526 = vor.u32 %v1522, %v1525
  %v1527 = vsel %vm1474, %v1517, %v1526
  %v1529 = vshrl.u32 %v203, 16
  %v1531 = vrot.slane %v1529, 3
  %v1532 = vshll.u32 %v203, 16
  %v1534 = vrot.slane %v1532, 4
  %v1535 = vor.u32 %v1531, %v1534
  %v1536 = vsel %vm1474, %v1526, %v1535
  %v1538 = vshrl.u32 %v204, 16
  %v1540 = vrot.slane %v1538, 3
  %v1541 = vshll.u32 %v204, 16
  %v1543 = vrot.slane %v1541, 4
  %v1544 = vor.u32 %v1540, %v1543
  %v1545 = vsel %vm1474, %v1535, %v1544
  %v1547 = vshrl.u32 %v205, 16
  %v1549 = vrot.slane %v1547, 3
  %v1550 = vshll.u32 %v205, 16
  %v1552 = vrot.slane %v1550, 4
  %v1553 = vor.u32 %v1549, %v1552
  %v1554 = vsel %vm1474, %v1544, %v1553
  %v1556 = vsel %vm1348, %v1491, 0
  %v1559 = vsel %vm1348, %v1500, 0
  %v1562 = vsel %vm1348, %v1509, 0
  %v1565 = vsel %vm1348, %v1518, 0
  %v1568 = vsel %vm1348, %v1527, 0
  %v1571 = vsel %vm1348, %v1536, 0
  %v1574 = vsel %vm1348, %v1545, 0
  %v1577 = vsel %vm1348, %v1554, 0
  %v1580 = vsel %vm1373, %v1345, 0
  %1582 = vmatprep.subr.bf16.mxu0 0
  %1583 = vmatpush1.bf16.msra.mxu0 0
  %1584 = vmatprep.subr.bf16.mxu0 0
  %1585 = vmatpush1.bf16.msra.mxu0 0
  %1586 = vmatprep.subr.bf16.mxu0 0
  %1587 = vmatpush1.bf16.msra.mxu0 0
  %1588 = vmatprep.subr.bf16.mxu0 0
  %1589 = vmatpush1.bf16.msra.mxu0 0
  %1590 = vmatprep.subr.bf16.mxu0 0
  %1591 = vmatpush1.bf16.msra.mxu0 0
  %1592 = vmatprep.subr.bf16.mxu0 0
  %1593 = vmatpush1.bf16.msra.mxu0 0
  %1594 = vmatprep.subr.bf16.mxu0 0
  %1595 = vmatpush1.bf16.msra.mxu0 0
  %1596 = vmatprep.subr.bf16.mxu0 0
  %1597 = vmatpush1.bf16.msra.mxu0 %v1580
  %1598 = vmatprep.subr.bf16.mxu0 0
  %1599 = vmatpush2.bf16.msra.mxu0 0
  %1600 = vmatprep.subr.bf16.mxu0 0
  %1601 = vmatpush2.bf16.msra.mxu0 0
  %1602 = vmatprep.subr.bf16.mxu0 0
  %1603 = vmatpush2.bf16.msra.mxu0 0
  %1604 = vmatprep.subr.bf16.mxu0 0
  %1605 = vmatpush2.bf16.msra.mxu0 0
  %1606 = vmatprep.subr.bf16.mxu0 0
  %1607 = vmatpush2.bf16.msra.mxu0 0
  %1608 = vmatprep.subr.bf16.mxu0 0
  %1609 = vmatpush2.bf16.msra.mxu0 0
  %1610 = vmatprep.subr.bf16.mxu0 0
  %1611 = vmatpush2.bf16.msra.mxu0 0
  %1612 = vmatprep.subr.bf16.mxu0 0
  %1613 = vmatpush2.bf16.msra.mxu0 0
  %1614 = vmatprep.mubr.bf16.mxu0 0
  %1615 = vmatmul.mubr.bf16.gmra.mxu0 %v1556
  %v1616 = vpop.f32.mrf.mxu0
  %v1617 = vadd.f32 %v1412, %v1616
  %v1618 = vpop.f32.mrf.mxu0
  %v1619 = vpop.f32.mrf.mxu0
  %v1620 = vadd.f32 %v1415, %v1619
  %v1621 = vpop.f32.mrf.mxu0
  %1622 = vmatprep.mubr.bf16.mxu0 0
  %1623 = vmatmul.mubr.bf16.gmra.mxu0 %v1559
  %v1624 = vpop.f32.mrf.mxu0
  %v1625 = vadd.f32 %v1420, %v1624
  %v1626 = vpop.f32.mrf.mxu0
  %v1627 = vpop.f32.mrf.mxu0
  %v1628 = vadd.f32 %v1423, %v1627
  %v1629 = vpop.f32.mrf.mxu0
  %1630 = vmatprep.mubr.bf16.mxu0 0
  %1631 = vmatmul.mubr.bf16.gmra.mxu0 %v1562
  %v1632 = vpop.f32.mrf.mxu0
  %v1633 = vadd.f32 %v1428, %v1632
  %v1634 = vpop.f32.mrf.mxu0
  %v1635 = vpop.f32.mrf.mxu0
  %v1636 = vadd.f32 %v1431, %v1635
  %v1637 = vpop.f32.mrf.mxu0
  %1638 = vmatprep.mubr.bf16.mxu0 0
  %1639 = vmatmul.mubr.bf16.gmra.mxu0 %v1565
  %v1640 = vpop.f32.mrf.mxu0
  %v1641 = vadd.f32 %v1436, %v1640
  %v1642 = vpop.f32.mrf.mxu0
  %v1643 = vpop.f32.mrf.mxu0
  %v1644 = vadd.f32 %v1439, %v1643
  %v1645 = vpop.f32.mrf.mxu0
  %1646 = vmatprep.mubr.bf16.mxu0 0
  %1647 = vmatmul.mubr.bf16.gmra.mxu0 %v1568
  %v1648 = vpop.f32.mrf.mxu0
  %v1649 = vadd.f32 %v1444, %v1648
  %v1650 = vpop.f32.mrf.mxu0
  %v1651 = vpop.f32.mrf.mxu0
  %v1652 = vadd.f32 %v1447, %v1651
  %v1653 = vpop.f32.mrf.mxu0
  %1654 = vmatprep.mubr.bf16.mxu0 0
  %1655 = vmatmul.mubr.bf16.gmra.mxu0 %v1571
  %v1656 = vpop.f32.mrf.mxu0
  %v1657 = vadd.f32 %v1452, %v1656
  %v1658 = vpop.f32.mrf.mxu0
  %v1659 = vpop.f32.mrf.mxu0
  %v1660 = vadd.f32 %v1455, %v1659
  %v1661 = vpop.f32.mrf.mxu0
  %1662 = vmatprep.mubr.bf16.mxu0 0
  %1663 = vmatmul.mubr.bf16.gmra.mxu0 %v1574
  %v1664 = vpop.f32.mrf.mxu0
  %v1665 = vadd.f32 %v1460, %v1664
  %v1666 = vpop.f32.mrf.mxu0
  %v1667 = vpop.f32.mrf.mxu0
  %v1668 = vadd.f32 %v1463, %v1667
  %v1669 = vpop.f32.mrf.mxu0
  %1670 = vmatprep.mubr.bf16.mxu0 0
  %1671 = vmatmul.mubr.bf16.gmra.mxu0 %v1577
  %v1672 = vpop.f32.mrf.mxu0
  %v1673 = vadd.f32 %v1468, %v1672
  %v1674 = vpop.f32.mrf.mxu0
  %v1675 = vpop.f32.mrf.mxu0
  %v1676 = vadd.f32 %v1471, %v1675
  %v1677 = vpop.f32.mrf.mxu0
  %1678 = vdwg.mxu0
  %s1679 = scalar_lea.vmem %s2, 4
  %v1680 = vld [vmem:[%s1679] sm:$0x3]
  %vm1681 = vsmask.f32 7424
  %v1683 = vshrl.u32 %v474, 16
  %v1685 = vshll.u32 %v474, 16
  %v1687 = vrot.slane %v1685, 1
  %v1688 = vor.u32 %v1683, %v1687
  %v1690 = vshll.u32 %v475, 16
  %v1692 = vrot.slane %v1690, 1
  %v1693 = vsel %vm1681, %v1688, %v1692
  %v1694 = vshrl.u32 %v475, 16
  %v1696 = vor.u32 %v1694, %v1692
  %v1698 = vshll.u32 %v476, 16
  %v1700 = vrot.slane %v1698, 1
  %v1701 = vsel %vm1681, %v1696, %v1700
  %v1702 = vshrl.u32 %v476, 16
  %v1704 = vor.u32 %v1702, %v1700
  %v1706 = vshll.u32 %v477, 16
  %v1708 = vrot.slane %v1706, 1
  %v1709 = vsel %vm1681, %v1704, %v1708
  %v1710 = vshrl.u32 %v477, 16
  %v1712 = vor.u32 %v1710, %v1708
  %v1714 = vshll.u32 %v478, 16
  %v1716 = vrot.slane %v1714, 1
  %v1717 = vsel %vm1681, %v1712, %v1716
  %v1718 = vshrl.u32 %v478, 16
  %v1720 = vor.u32 %v1718, %v1716
  %v1722 = vshll.u32 %v479, 16
  %v1724 = vrot.slane %v1722, 1
  %v1725 = vsel %vm1681, %v1720, %v1724
  %v1726 = vshrl.u32 %v479, 16
  %v1728 = vor.u32 %v1726, %v1724
  %v1730 = vshll.u32 %v480, 16
  %v1732 = vrot.slane %v1730, 1
  %v1733 = vsel %vm1681, %v1728, %v1732
  %v1734 = vshrl.u32 %v480, 16
  %v1736 = vor.u32 %v1734, %v1732
  %v1738 = vshll.u32 %v481, 16
  %v1740 = vrot.slane %v1738, 1
  %v1741 = vsel %vm1681, %v1736, %v1740
  %v1742 = vshrl.u32 %v481, 16
  %v1744 = vor.u32 %v1742, %v1740
  %v1746 = vshll.u32 %v482, 16
  %v1748 = vrot.slane %v1746, 1
  %v1749 = vsel %vm1681, %v1744, %v1748
  %v1751 = vsel %vm1348, %v1693, 0
  %v1754 = vsel %vm1348, %v1701, 0
  %v1757 = vsel %vm1348, %v1709, 0
  %v1760 = vsel %vm1348, %v1717, 0
  %v1763 = vsel %vm1348, %v1725, 0
  %v1766 = vsel %vm1348, %v1733, 0
  %v1769 = vsel %vm1348, %v1741, 0
  %v1772 = vsel %vm1348, %v1749, 0
  %v1775 = vsel %vm1373, %v1680, 0
  %1777 = vmatprep.subr.bf16.mxu0 0
  %1778 = vmatpush1.bf16.msra.mxu0 0
  %1779 = vmatprep.subr.bf16.mxu0 0
  %1780 = vmatpush1.bf16.msra.mxu0 0
  %1781 = vmatprep.subr.bf16.mxu0 0
  %1782 = vmatpush1.bf16.msra.mxu0 0
  %1783 = vmatprep.subr.bf16.mxu0 0
  %1784 = vmatpush1.bf16.msra.mxu0 0
  %1785 = vmatprep.subr.bf16.mxu0 0
  %1786 = vmatpush1.bf16.msra.mxu0 0
  %1787 = vmatprep.subr.bf16.mxu0 0
  %1788 = vmatpush1.bf16.msra.mxu0 0
  %1789 = vmatprep.subr.bf16.mxu0 0
  %1790 = vmatpush1.bf16.msra.mxu0 0
  %1791 = vmatprep.subr.bf16.mxu0 0
  %1792 = vmatpush1.bf16.msra.mxu0 %v1775
  %1793 = vmatprep.subr.bf16.mxu0 0
  %1794 = vmatpush2.bf16.msra.mxu0 0
  %1795 = vmatprep.subr.bf16.mxu0 0
  %1796 = vmatpush2.bf16.msra.mxu0 0
  %1797 = vmatprep.subr.bf16.mxu0 0
  %1798 = vmatpush2.bf16.msra.mxu0 0
  %1799 = vmatprep.subr.bf16.mxu0 0
  %1800 = vmatpush2.bf16.msra.mxu0 0
  %1801 = vmatprep.subr.bf16.mxu0 0
  %1802 = vmatpush2.bf16.msra.mxu0 0
  %1803 = vmatprep.subr.bf16.mxu0 0
  %1804 = vmatpush2.bf16.msra.mxu0 0
  %1805 = vmatprep.subr.bf16.mxu0 0
  %1806 = vmatpush2.bf16.msra.mxu0 0
  %1807 = vmatprep.subr.bf16.mxu0 0
  %1808 = vmatpush2.bf16.msra.mxu0 0
  %1809 = vmatprep.mubr.bf16.mxu0 0
  %1810 = vmatmul.mubr.bf16.gmra.mxu0 %v1751
  %v1811 = vpop.f32.mrf.mxu0
  %v1812 = vadd.f32 0.0, %v1811
  %v1813 = vpop.f32.mrf.mxu0
  %v1814 = vpop.f32.mrf.mxu0
  %v1815 = vadd.f32 0.0, %v1814
  %v1816 = vpop.f32.mrf.mxu0
  %1817 = vmatprep.mubr.bf16.mxu0 0
  %1818 = vmatmul.mubr.bf16.gmra.mxu0 %v1754
  %v1819 = vpop.f32.mrf.mxu0
  %v1820 = vadd.f32 0.0, %v1819
  %v1821 = vpop.f32.mrf.mxu0
  %v1822 = vpop.f32.mrf.mxu0
  %v1823 = vadd.f32 0.0, %v1822
  %v1824 = vpop.f32.mrf.mxu0
  %1825 = vmatprep.mubr.bf16.mxu0 0
  %1826 = vmatmul.mubr.bf16.gmra.mxu0 %v1757
  %v1827 = vpop.f32.mrf.mxu0
  %v1828 = vadd.f32 0.0, %v1827
  %v1829 = vpop.f32.mrf.mxu0
  %v1830 = vpop.f32.mrf.mxu0
  %v1831 = vadd.f32 0.0, %v1830
  %v1832 = vpop.f32.mrf.mxu0
  %1833 = vmatprep.mubr.bf16.mxu0 0
  %1834 = vmatmul.mubr.bf16.gmra.mxu0 %v1760
  %v1835 = vpop.f32.mrf.mxu0
  %v1836 = vadd.f32 0.0, %v1835
  %v1837 = vpop.f32.mrf.mxu0
  %v1838 = vpop.f32.mrf.mxu0
  %v1839 = vadd.f32 0.0, %v1838
  %v1840 = vpop.f32.mrf.mxu0
  %1841 = vmatprep.mubr.bf16.mxu0 0
  %1842 = vmatmul.mubr.bf16.gmra.mxu0 %v1763
  %v1843 = vpop.f32.mrf.mxu0
  %v1844 = vadd.f32 0.0, %v1843
  %v1845 = vpop.f32.mrf.mxu0
  %v1846 = vpop.f32.mrf.mxu0
  %v1847 = vadd.f32 0.0, %v1846
  %v1848 = vpop.f32.mrf.mxu0
  %1849 = vmatprep.mubr.bf16.mxu0 0
  %1850 = vmatmul.mubr.bf16.gmra.mxu0 %v1766
  %v1851 = vpop.f32.mrf.mxu0
  %v1852 = vadd.f32 0.0, %v1851
  %v1853 = vpop.f32.mrf.mxu0
  %v1854 = vpop.f32.mrf.mxu0
  %v1855 = vadd.f32 0.0, %v1854
  %v1856 = vpop.f32.mrf.mxu0
  %1857 = vmatprep.mubr.bf16.mxu0 0
  %1858 = vmatmul.mubr.bf16.gmra.mxu0 %v1769
  %v1859 = vpop.f32.mrf.mxu0
  %v1860 = vadd.f32 0.0, %v1859
  %v1861 = vpop.f32.mrf.mxu0
  %v1862 = vpop.f32.mrf.mxu0
  %v1863 = vadd.f32 0.0, %v1862
  %v1864 = vpop.f32.mrf.mxu0
  %1865 = vmatprep.mubr.bf16.mxu0 0
  %1866 = vmatmul.mubr.bf16.gmra.mxu0 %v1772
  %v1867 = vpop.f32.mrf.mxu0
  %v1868 = vadd.f32 0.0, %v1867
  %v1869 = vpop.f32.mrf.mxu0
  %v1870 = vpop.f32.mrf.mxu0
  %v1871 = vadd.f32 0.0, %v1870
  %v1872 = vpop.f32.mrf.mxu0
  %1873 = vdwg.mxu0
  %v1874 = vadd.f32 %v1617, %v1812
  %v1875 = vadd.f32 %v1620, %v1815
  %v1876 = vadd.f32 %v1625, %v1820
  %v1877 = vadd.f32 %v1628, %v1823
  %v1878 = vadd.f32 %v1633, %v1828
  %v1879 = vadd.f32 %v1636, %v1831
  %v1880 = vadd.f32 %v1641, %v1836
  %v1881 = vadd.f32 %v1644, %v1839
  %v1882 = vadd.f32 %v1649, %v1844
  %v1883 = vadd.f32 %v1652, %v1847
  %v1884 = vadd.f32 %v1657, %v1852
  %v1885 = vadd.f32 %v1660, %v1855
  %v1886 = vadd.f32 %v1665, %v1860
  %v1887 = vadd.f32 %v1668, %v1863
  %v1888 = vadd.f32 %v1673, %v1868
  %v1889 = vadd.f32 %v1676, %v1871
  %s1890 = scalar_lea.vmem %s2, 6
  %v1891 = vld [vmem:[%s1890] sm:$0x3]
  %v1893 = vshrl.u32 %v629, 16
  %v1895 = vrot.slane %v1893, 3
  %v1896 = vshll.u32 %v629, 16
  %v1898 = vrot.slane %v1896, 4
  %v1899 = vor.u32 %v1895, %v1898
  %v1901 = vshrl.u32 %v630, 16
  %v1903 = vrot.slane %v1901, 3
  %v1904 = vshll.u32 %v630, 16
  %v1906 = vrot.slane %v1904, 4
  %v1907 = vor.u32 %v1903, %v1906
  %v1908 = vsel %vm1474, %v1899, %v1907
  %v1910 = vshrl.u32 %v631, 16
  %v1912 = vrot.slane %v1910, 3
  %v1913 = vshll.u32 %v631, 16
  %v1915 = vrot.slane %v1913, 4
  %v1916 = vor.u32 %v1912, %v1915
  %v1917 = vsel %vm1474, %v1907, %v1916
  %v1919 = vshrl.u32 %v632, 16
  %v1921 = vrot.slane %v1919, 3
  %v1922 = vshll.u32 %v632, 16
  %v1924 = vrot.slane %v1922, 4
  %v1925 = vor.u32 %v1921, %v1924
  %v1926 = vsel %vm1474, %v1916, %v1925
  %v1928 = vshrl.u32 %v633, 16
  %v1930 = vrot.slane %v1928, 3
  %v1931 = vshll.u32 %v633, 16
  %v1933 = vrot.slane %v1931, 4
  %v1934 = vor.u32 %v1930, %v1933
  %v1935 = vsel %vm1474, %v1925, %v1934
  %v1937 = vshrl.u32 %v634, 16
  %v1939 = vrot.slane %v1937, 3
  %v1940 = vshll.u32 %v634, 16
  %v1942 = vrot.slane %v1940, 4
  %v1943 = vor.u32 %v1939, %v1942
  %v1944 = vsel %vm1474, %v1934, %v1943
  %v1946 = vshrl.u32 %v635, 16
  %v1948 = vrot.slane %v1946, 3
  %v1949 = vshll.u32 %v635, 16
  %v1951 = vrot.slane %v1949, 4
  %v1952 = vor.u32 %v1948, %v1951
  %v1953 = vsel %vm1474, %v1943, %v1952
  %v1955 = vshrl.u32 %v636, 16
  %v1957 = vrot.slane %v1955, 3
  %v1958 = vshll.u32 %v636, 16
  %v1960 = vrot.slane %v1958, 4
  %v1961 = vor.u32 %v1957, %v1960
  %v1962 = vsel %vm1474, %v1952, %v1961
  %v1964 = vshrl.u32 %v637, 16
  %v1966 = vrot.slane %v1964, 3
  %v1967 = vshll.u32 %v637, 16
  %v1969 = vrot.slane %v1967, 4
  %v1970 = vor.u32 %v1966, %v1969
  %v1971 = vsel %vm1474, %v1961, %v1970
  %v1973 = vsel %vm1348, %v1908, 0
  %v1976 = vsel %vm1348, %v1917, 0
  %v1979 = vsel %vm1348, %v1926, 0
  %v1982 = vsel %vm1348, %v1935, 0
  %v1985 = vsel %vm1348, %v1944, 0
  %v1988 = vsel %vm1348, %v1953, 0
  %v1991 = vsel %vm1348, %v1962, 0
  %v1994 = vsel %vm1348, %v1971, 0
  %v1997 = vsel %vm1373, %v1891, 0
  %1999 = vmatprep.subr.bf16.mxu0 0
  %2000 = vmatpush1.bf16.msra.mxu0 0
  %2001 = vmatprep.subr.bf16.mxu0 0
  %2002 = vmatpush1.bf16.msra.mxu0 0
  %2003 = vmatprep.subr.bf16.mxu0 0
  %2004 = vmatpush1.bf16.msra.mxu0 0
  %2005 = vmatprep.subr.bf16.mxu0 0
  %2006 = vmatpush1.bf16.msra.mxu0 0
  %2007 = vmatprep.subr.bf16.mxu0 0
  %2008 = vmatpush1.bf16.msra.mxu0 0
  %2009 = vmatprep.subr.bf16.mxu0 0
  %2010 = vmatpush1.bf16.msra.mxu0 0
  %2011 = vmatprep.subr.bf16.mxu0 0
  %2012 = vmatpush1.bf16.msra.mxu0 0
  %2013 = vmatprep.subr.bf16.mxu0 0
  %2014 = vmatpush1.bf16.msra.mxu0 %v1997
  %2015 = vmatprep.subr.bf16.mxu0 0
  %2016 = vmatpush2.bf16.msra.mxu0 0
  %2017 = vmatprep.subr.bf16.mxu0 0
  %2018 = vmatpush2.bf16.msra.mxu0 0
  %2019 = vmatprep.subr.bf16.mxu0 0
  %2020 = vmatpush2.bf16.msra.mxu0 0
  %2021 = vmatprep.subr.bf16.mxu0 0
  %2022 = vmatpush2.bf16.msra.mxu0 0
  %2023 = vmatprep.subr.bf16.mxu0 0
  %2024 = vmatpush2.bf16.msra.mxu0 0
  %2025 = vmatprep.subr.bf16.mxu0 0
  %2026 = vmatpush2.bf16.msra.mxu0 0
  %2027 = vmatprep.subr.bf16.mxu0 0
  %2028 = vmatpush2.bf16.msra.mxu0 0
  %2029 = vmatprep.subr.bf16.mxu0 0
  %2030 = vmatpush2.bf16.msra.mxu0 0
  %2031 = vmatprep.mubr.bf16.mxu0 0
  %2032 = vmatmul.mubr.bf16.gmra.mxu0 %v1973
  %v2033 = vpop.f32.mrf.mxu0
  %v2034 = vadd.f32 0.0, %v2033
  %v2035 = vpop.f32.mrf.mxu0
  %v2036 = vpop.f32.mrf.mxu0
  %v2037 = vadd.f32 0.0, %v2036
  %v2038 = vpop.f32.mrf.mxu0
  %2039 = vmatprep.mubr.bf16.mxu0 0
  %2040 = vmatmul.mubr.bf16.gmra.mxu0 %v1976
  %v2041 = vpop.f32.mrf.mxu0
  %v2042 = vadd.f32 0.0, %v2041
  %v2043 = vpop.f32.mrf.mxu0
  %v2044 = vpop.f32.mrf.mxu0
  %v2045 = vadd.f32 0.0, %v2044
  %v2046 = vpop.f32.mrf.mxu0
  %2047 = vmatprep.mubr.bf16.mxu0 0
  %2048 = vmatmul.mubr.bf16.gmra.mxu0 %v1979
  %v2049 = vpop.f32.mrf.mxu0
  %v2050 = vadd.f32 0.0, %v2049
  %v2051 = vpop.f32.mrf.mxu0
  %v2052 = vpop.f32.mrf.mxu0
  %v2053 = vadd.f32 0.0, %v2052
  %v2054 = vpop.f32.mrf.mxu0
  %2055 = vmatprep.mubr.bf16.mxu0 0
  %2056 = vmatmul.mubr.bf16.gmra.mxu0 %v1982
  %v2057 = vpop.f32.mrf.mxu0
  %v2058 = vadd.f32 0.0, %v2057
  %v2059 = vpop.f32.mrf.mxu0
  %v2060 = vpop.f32.mrf.mxu0
  %v2061 = vadd.f32 0.0, %v2060
  %v2062 = vpop.f32.mrf.mxu0
  %2063 = vmatprep.mubr.bf16.mxu0 0
  %2064 = vmatmul.mubr.bf16.gmra.mxu0 %v1985
  %v2065 = vpop.f32.mrf.mxu0
  %v2066 = vadd.f32 0.0, %v2065
  %v2067 = vpop.f32.mrf.mxu0
  %v2068 = vpop.f32.mrf.mxu0
  %v2069 = vadd.f32 0.0, %v2068
  %v2070 = vpop.f32.mrf.mxu0
  %2071 = vmatprep.mubr.bf16.mxu0 0
  %2072 = vmatmul.mubr.bf16.gmra.mxu0 %v1988
  %v2073 = vpop.f32.mrf.mxu0
  %v2074 = vadd.f32 0.0, %v2073
  %v2075 = vpop.f32.mrf.mxu0
  %v2076 = vpop.f32.mrf.mxu0
  %v2077 = vadd.f32 0.0, %v2076
  %v2078 = vpop.f32.mrf.mxu0
  %2079 = vmatprep.mubr.bf16.mxu0 0
  %2080 = vmatmul.mubr.bf16.gmra.mxu0 %v1991
  %v2081 = vpop.f32.mrf.mxu0
  %v2082 = vadd.f32 0.0, %v2081
  %v2083 = vpop.f32.mrf.mxu0
  %v2084 = vpop.f32.mrf.mxu0
  %v2085 = vadd.f32 0.0, %v2084
  %v2086 = vpop.f32.mrf.mxu0
  %2087 = vmatprep.mubr.bf16.mxu0 0
  %2088 = vmatmul.mubr.bf16.gmra.mxu0 %v1994
  %v2089 = vpop.f32.mrf.mxu0
  %v2090 = vadd.f32 0.0, %v2089
  %v2091 = vpop.f32.mrf.mxu0
  %v2092 = vpop.f32.mrf.mxu0
  %v2093 = vadd.f32 0.0, %v2092
  %v2094 = vpop.f32.mrf.mxu0
  %2095 = vdwg.mxu0
  %v2096 = vadd.f32 %v1874, %v2034
  %v2097 = vadd.f32 %v1875, %v2037
  %v2098 = vadd.f32 %v1876, %v2042
  %v2099 = vadd.f32 %v1877, %v2045
  %v2100 = vadd.f32 %v1878, %v2050
  %v2101 = vadd.f32 %v1879, %v2053
  %v2102 = vadd.f32 %v1880, %v2058
  %v2103 = vadd.f32 %v1881, %v2061
  %v2104 = vadd.f32 %v1882, %v2066
  %v2105 = vadd.f32 %v1883, %v2069
  %v2106 = vadd.f32 %v1884, %v2074
  %v2107 = vadd.f32 %v1885, %v2077
  %v2108 = vadd.f32 %v1886, %v2082
  %v2109 = vadd.f32 %v1887, %v2085
  %v2110 = vadd.f32 %v1888, %v2090
  %v2111 = vadd.f32 %v1889, %v2093
  %s2112 = scalar_lea.vmem %s2, 8
  %v2113 = vld [vmem:[%s2112] sm:$0x3]
  %v2115 = vsel %vm1348, %v751, 0
  %v2118 = vsel %vm1348, %v752, 0
  %v2121 = vsel %vm1348, %v753, 0
  %v2124 = vsel %vm1348, %v754, 0
  %v2127 = vsel %vm1348, %v755, 0
  %v2130 = vsel %vm1348, %v756, 0
  %v2133 = vsel %vm1348, %v757, 0
  %v2136 = vsel %vm1348, %v758, 0
  %v2139 = vsel %vm1373, %v2113, 0
  %2141 = vmatprep.subr.bf16.mxu0 0
  %2142 = vmatpush1.bf16.msra.mxu0 0
  %2143 = vmatprep.subr.bf16.mxu0 0
  %2144 = vmatpush1.bf16.msra.mxu0 0
  %2145 = vmatprep.subr.bf16.mxu0 0
  %2146 = vmatpush1.bf16.msra.mxu0 0
  %2147 = vmatprep.subr.bf16.mxu0 0
  %2148 = vmatpush1.bf16.msra.mxu0 0
  %2149 = vmatprep.subr.bf16.mxu0 0
  %2150 = vmatpush1.bf16.msra.mxu0 0
  %2151 = vmatprep.subr.bf16.mxu0 0
  %2152 = vmatpush1.bf16.msra.mxu0 0
  %2153 = vmatprep.subr.bf16.mxu0 0
  %2154 = vmatpush1.bf16.msra.mxu0 0
  %2155 = vmatprep.subr.bf16.mxu0 0
  %2156 = vmatpush1.bf16.msra.mxu0 %v2139
  %2157 = vmatprep.subr.bf16.mxu0 0
  %2158 = vmatpush2.bf16.msra.mxu0 0
  %2159 = vmatprep.subr.bf16.mxu0 0
  %2160 = vmatpush2.bf16.msra.mxu0 0
  %2161 = vmatprep.subr.bf16.mxu0 0
  %2162 = vmatpush2.bf16.msra.mxu0 0
  %2163 = vmatprep.subr.bf16.mxu0 0
  %2164 = vmatpush2.bf16.msra.mxu0 0
  %2165 = vmatprep.subr.bf16.mxu0 0
  %2166 = vmatpush2.bf16.msra.mxu0 0
  %2167 = vmatprep.subr.bf16.mxu0 0
  %2168 = vmatpush2.bf16.msra.mxu0 0
  %2169 = vmatprep.subr.bf16.mxu0 0
  %2170 = vmatpush2.bf16.msra.mxu0 0
  %2171 = vmatprep.subr.bf16.mxu0 0
  %2172 = vmatpush2.bf16.msra.mxu0 0
  %2173 = vmatprep.mubr.bf16.mxu0 0
  %2174 = vmatmul.mubr.bf16.gmra.mxu0 %v2115
  %v2175 = vpop.f32.mrf.mxu0
  %v2176 = vadd.f32 0.0, %v2175
  %v2177 = vpop.f32.mrf.mxu0
  %v2178 = vpop.f32.mrf.mxu0
  %v2179 = vadd.f32 0.0, %v2178
  %v2180 = vpop.f32.mrf.mxu0
  %2181 = vmatprep.mubr.bf16.mxu0 0
  %2182 = vmatmul.mubr.bf16.gmra.mxu0 %v2118
  %v2183 = vpop.f32.mrf.mxu0
  %v2184 = vadd.f32 0.0, %v2183
  %v2185 = vpop.f32.mrf.mxu0
  %v2186 = vpop.f32.mrf.mxu0
  %v2187 = vadd.f32 0.0, %v2186
  %v2188 = vpop.f32.mrf.mxu0
  %2189 = vmatprep.mubr.bf16.mxu0 0
  %2190 = vmatmul.mubr.bf16.gmra.mxu0 %v2121
  %v2191 = vpop.f32.mrf.mxu0
  %v2192 = vadd.f32 0.0, %v2191
  %v2193 = vpop.f32.mrf.mxu0
  %v2194 = vpop.f32.mrf.mxu0
  %v2195 = vadd.f32 0.0, %v2194
  %v2196 = vpop.f32.mrf.mxu0
  %2197 = vmatprep.mubr.bf16.mxu0 0
  %2198 = vmatmul.mubr.bf16.gmra.mxu0 %v2124
  %v2199 = vpop.f32.mrf.mxu0
  %v2200 = vadd.f32 0.0, %v2199
  %v2201 = vpop.f32.mrf.mxu0
  %v2202 = vpop.f32.mrf.mxu0
  %v2203 = vadd.f32 0.0, %v2202
  %v2204 = vpop.f32.mrf.mxu0
  %2205 = vmatprep.mubr.bf16.mxu0 0
  %2206 = vmatmul.mubr.bf16.gmra.mxu0 %v2127
  %v2207 = vpop.f32.mrf.mxu0
  %v2208 = vadd.f32 0.0, %v2207
  %v2209 = vpop.f32.mrf.mxu0
  %v2210 = vpop.f32.mrf.mxu0
  %v2211 = vadd.f32 0.0, %v2210
  %v2212 = vpop.f32.mrf.mxu0
  %2213 = vmatprep.mubr.bf16.mxu0 0
  %2214 = vmatmul.mubr.bf16.gmra.mxu0 %v2130
  %v2215 = vpop.f32.mrf.mxu0
  %v2216 = vadd.f32 0.0, %v2215
  %v2217 = vpop.f32.mrf.mxu0
  %v2218 = vpop.f32.mrf.mxu0
  %v2219 = vadd.f32 0.0, %v2218
  %v2220 = vpop.f32.mrf.mxu0
  %2221 = vmatprep.mubr.bf16.mxu0 0
  %2222 = vmatmul.mubr.bf16.gmra.mxu0 %v2133
  %v2223 = vpop.f32.mrf.mxu0
  %v2224 = vadd.f32 0.0, %v2223
  %v2225 = vpop.f32.mrf.mxu0
  %v2226 = vpop.f32.mrf.mxu0
  %v2227 = vadd.f32 0.0, %v2226
  %v2228 = vpop.f32.mrf.mxu0
  %2229 = vmatprep.mubr.bf16.mxu0 0
  %2230 = vmatmul.mubr.bf16.gmra.mxu0 %v2136
  %v2231 = vpop.f32.mrf.mxu0
  %v2232 = vadd.f32 0.0, %v2231
  %v2233 = vpop.f32.mrf.mxu0
  %v2234 = vpop.f32.mrf.mxu0
  %v2235 = vadd.f32 0.0, %v2234
  %v2236 = vpop.f32.mrf.mxu0
  %2237 = vdwg.mxu0
  %v2238 = vadd.f32 %v2096, %v2176
  %v2239 = vadd.f32 %v2097, %v2179
  %v2240 = vadd.f32 %v2098, %v2184
  %v2241 = vadd.f32 %v2099, %v2187
  %v2242 = vadd.f32 %v2100, %v2192
  %v2243 = vadd.f32 %v2101, %v2195
  %v2244 = vadd.f32 %v2102, %v2200
  %v2245 = vadd.f32 %v2103, %v2203
  %v2246 = vadd.f32 %v2104, %v2208
  %v2247 = vadd.f32 %v2105, %v2211
  %v2248 = vadd.f32 %v2106, %v2216
  %v2249 = vadd.f32 %v2107, %v2219
  %v2250 = vadd.f32 %v2108, %v2224
  %v2251 = vadd.f32 %v2109, %v2227
  %v2252 = vadd.f32 %v2110, %v2232
  %v2253 = vadd.f32 %v2111, %v2235
  %s2254 = scalar_lea.vmem %s2, 10
  %v2255 = vld [vmem:[%s2254] sm:$0x3]
  %v2257 = vshrl.u32 %v905, 16
  %v2259 = vshll.u32 %v905, 16
  %v2261 = vrot.slane %v2259, 1
  %v2262 = vor.u32 %v2257, %v2261
  %v2264 = vshll.u32 %v906, 16
  %v2266 = vrot.slane %v2264, 1
  %v2267 = vsel %vm1681, %v2262, %v2266
  %v2268 = vshrl.u32 %v906, 16
  %v2270 = vor.u32 %v2268, %v2266
  %v2272 = vshll.u32 %v907, 16
  %v2274 = vrot.slane %v2272, 1
  %v2275 = vsel %vm1681, %v2270, %v2274
  %v2276 = vshrl.u32 %v907, 16
  %v2278 = vor.u32 %v2276, %v2274
  %v2280 = vshll.u32 %v908, 16
  %v2282 = vrot.slane %v2280, 1
  %v2283 = vsel %vm1681, %v2278, %v2282
  %v2284 = vshrl.u32 %v908, 16
  %v2286 = vor.u32 %v2284, %v2282
  %v2288 = vshll.u32 %v909, 16
  %v2290 = vrot.slane %v2288, 1
  %v2291 = vsel %vm1681, %v2286, %v2290
  %v2292 = vshrl.u32 %v909, 16
  %v2294 = vor.u32 %v2292, %v2290
  %v2296 = vshll.u32 %v910, 16
  %v2298 = vrot.slane %v2296, 1
  %v2299 = vsel %vm1681, %v2294, %v2298
  %v2300 = vshrl.u32 %v910, 16
  %v2302 = vor.u32 %v2300, %v2298
  %v2304 = vshll.u32 %v911, 16
  %v2306 = vrot.slane %v2304, 1
  %v2307 = vsel %vm1681, %v2302, %v2306
  %v2308 = vshrl.u32 %v911, 16
  %v2310 = vor.u32 %v2308, %v2306
  %v2312 = vshll.u32 %v912, 16
  %v2314 = vrot.slane %v2312, 1
  %v2315 = vsel %vm1681, %v2310, %v2314
  %v2316 = vshrl.u32 %v912, 16
  %v2318 = vor.u32 %v2316, %v2314
  %v2320 = vshll.u32 %v913, 16
  %v2322 = vrot.slane %v2320, 1
  %v2323 = vsel %vm1681, %v2318, %v2322
  %v2325 = vsel %vm1348, %v2267, 0
  %v2328 = vsel %vm1348, %v2275, 0
  %v2331 = vsel %vm1348, %v2283, 0
  %v2334 = vsel %vm1348, %v2291, 0
  %v2337 = vsel %vm1348, %v2299, 0
  %v2340 = vsel %vm1348, %v2307, 0
  %v2343 = vsel %vm1348, %v2315, 0
  %v2346 = vsel %vm1348, %v2323, 0
  %v2349 = vsel %vm1373, %v2255, 0
  %2351 = vmatprep.subr.bf16.mxu0 0
  %2352 = vmatpush1.bf16.msra.mxu0 0
  %2353 = vmatprep.subr.bf16.mxu0 0
  %2354 = vmatpush1.bf16.msra.mxu0 0
  %2355 = vmatprep.subr.bf16.mxu0 0
  %2356 = vmatpush1.bf16.msra.mxu0 0
  %2357 = vmatprep.subr.bf16.mxu0 0
  %2358 = vmatpush1.bf16.msra.mxu0 0
  %2359 = vmatprep.subr.bf16.mxu0 0
  %2360 = vmatpush1.bf16.msra.mxu0 0
  %2361 = vmatprep.subr.bf16.mxu0 0
  %2362 = vmatpush1.bf16.msra.mxu0 0
  %2363 = vmatprep.subr.bf16.mxu0 0
  %2364 = vmatpush1.bf16.msra.mxu0 0
  %2365 = vmatprep.subr.bf16.mxu0 0
  %2366 = vmatpush1.bf16.msra.mxu0 %v2349
  %2367 = vmatprep.subr.bf16.mxu0 0
  %2368 = vmatpush2.bf16.msra.mxu0 0
  %2369 = vmatprep.subr.bf16.mxu0 0
  %2370 = vmatpush2.bf16.msra.mxu0 0
  %2371 = vmatprep.subr.bf16.mxu0 0
  %2372 = vmatpush2.bf16.msra.mxu0 0
  %2373 = vmatprep.subr.bf16.mxu0 0
  %2374 = vmatpush2.bf16.msra.mxu0 0
  %2375 = vmatprep.subr.bf16.mxu0 0
  %2376 = vmatpush2.bf16.msra.mxu0 0
  %2377 = vmatprep.subr.bf16.mxu0 0
  %2378 = vmatpush2.bf16.msra.mxu0 0
  %2379 = vmatprep.subr.bf16.mxu0 0
  %2380 = vmatpush2.bf16.msra.mxu0 0
  %2381 = vmatprep.subr.bf16.mxu0 0
  %2382 = vmatpush2.bf16.msra.mxu0 0
  %2383 = vmatprep.mubr.bf16.mxu0 0
  %2384 = vmatmul.mubr.bf16.gmra.mxu0 %v2325
  %v2385 = vpop.f32.mrf.mxu0
  %v2386 = vadd.f32 0.0, %v2385
  %v2387 = vpop.f32.mrf.mxu0
  %v2388 = vpop.f32.mrf.mxu0
  %v2389 = vadd.f32 0.0, %v2388
  %v2390 = vpop.f32.mrf.mxu0
  %2391 = vmatprep.mubr.bf16.mxu0 0
  %2392 = vmatmul.mubr.bf16.gmra.mxu0 %v2328
  %v2393 = vpop.f32.mrf.mxu0
  %v2394 = vadd.f32 0.0, %v2393
  %v2395 = vpop.f32.mrf.mxu0
  %v2396 = vpop.f32.mrf.mxu0
  %v2397 = vadd.f32 0.0, %v2396
  %v2398 = vpop.f32.mrf.mxu0
  %2399 = vmatprep.mubr.bf16.mxu0 0
  %2400 = vmatmul.mubr.bf16.gmra.mxu0 %v2331
  %v2401 = vpop.f32.mrf.mxu0
  %v2402 = vadd.f32 0.0, %v2401
  %v2403 = vpop.f32.mrf.mxu0
  %v2404 = vpop.f32.mrf.mxu0
  %v2405 = vadd.f32 0.0, %v2404
  %v2406 = vpop.f32.mrf.mxu0
  %2407 = vmatprep.mubr.bf16.mxu0 0
  %2408 = vmatmul.mubr.bf16.gmra.mxu0 %v2334
  %v2409 = vpop.f32.mrf.mxu0
  %v2410 = vadd.f32 0.0, %v2409
  %v2411 = vpop.f32.mrf.mxu0
  %v2412 = vpop.f32.mrf.mxu0
  %v2413 = vadd.f32 0.0, %v2412
  %v2414 = vpop.f32.mrf.mxu0
  %2415 = vmatprep.mubr.bf16.mxu0 0
  %2416 = vmatmul.mubr.bf16.gmra.mxu0 %v2337
  %v2417 = vpop.f32.mrf.mxu0
  %v2418 = vadd.f32 0.0, %v2417
  %v2419 = vpop.f32.mrf.mxu0
  %v2420 = vpop.f32.mrf.mxu0
  %v2421 = vadd.f32 0.0, %v2420
  %v2422 = vpop.f32.mrf.mxu0
  %2423 = vmatprep.mubr.bf16.mxu0 0
  %2424 = vmatmul.mubr.bf16.gmra.mxu0 %v2340
  %v2425 = vpop.f32.mrf.mxu0
  %v2426 = vadd.f32 0.0, %v2425
  %v2427 = vpop.f32.mrf.mxu0
  %v2428 = vpop.f32.mrf.mxu0
  %v2429 = vadd.f32 0.0, %v2428
  %v2430 = vpop.f32.mrf.mxu0
  %2431 = vmatprep.mubr.bf16.mxu0 0
  %2432 = vmatmul.mubr.bf16.gmra.mxu0 %v2343
  %v2433 = vpop.f32.mrf.mxu0
  %v2434 = vadd.f32 0.0, %v2433
  %v2435 = vpop.f32.mrf.mxu0
  %v2436 = vpop.f32.mrf.mxu0
  %v2437 = vadd.f32 0.0, %v2436
  %v2438 = vpop.f32.mrf.mxu0
  %2439 = vmatprep.mubr.bf16.mxu0 0
  %2440 = vmatmul.mubr.bf16.gmra.mxu0 %v2346
  %v2441 = vpop.f32.mrf.mxu0
  %v2442 = vadd.f32 0.0, %v2441
  %v2443 = vpop.f32.mrf.mxu0
  %v2444 = vpop.f32.mrf.mxu0
  %v2445 = vadd.f32 0.0, %v2444
  %v2446 = vpop.f32.mrf.mxu0
  %2447 = vdwg.mxu0
  %v2448 = vadd.f32 %v2238, %v2386
  %v2449 = vadd.f32 %v2239, %v2389
  %v2450 = vadd.f32 %v2240, %v2394
  %v2451 = vadd.f32 %v2241, %v2397
  %v2452 = vadd.f32 %v2242, %v2402
  %v2453 = vadd.f32 %v2243, %v2405
  %v2454 = vadd.f32 %v2244, %v2410
  %v2455 = vadd.f32 %v2245, %v2413
  %v2456 = vadd.f32 %v2246, %v2418
  %v2457 = vadd.f32 %v2247, %v2421
  %v2458 = vadd.f32 %v2248, %v2426
  %v2459 = vadd.f32 %v2249, %v2429
  %v2460 = vadd.f32 %v2250, %v2434
  %v2461 = vadd.f32 %v2251, %v2437
  %v2462 = vadd.f32 %v2252, %v2442
  %v2463 = vadd.f32 %v2253, %v2445
  %s2464 = scalar_lea.vmem %s2, 12
  %v2465 = vld [vmem:[%s2464] sm:$0x3]
  %v2467 = vshrl.u32 %v1060, 16
  %v2469 = vrot.slane %v2467, 3
  %v2470 = vshll.u32 %v1060, 16
  %v2472 = vrot.slane %v2470, 4
  %v2473 = vor.u32 %v2469, %v2472
  %v2475 = vshrl.u32 %v1061, 16
  %v2477 = vrot.slane %v2475, 3
  %v2478 = vshll.u32 %v1061, 16
  %v2480 = vrot.slane %v2478, 4
  %v2481 = vor.u32 %v2477, %v2480
  %v2482 = vsel %vm1474, %v2473, %v2481
  %v2484 = vshrl.u32 %v1062, 16
  %v2486 = vrot.slane %v2484, 3
  %v2487 = vshll.u32 %v1062, 16
  %v2489 = vrot.slane %v2487, 4
  %v2490 = vor.u32 %v2486, %v2489
  %v2491 = vsel %vm1474, %v2481, %v2490
  %v2493 = vshrl.u32 %v1063, 16
  %v2495 = vrot.slane %v2493, 3
  %v2496 = vshll.u32 %v1063, 16
  %v2498 = vrot.slane %v2496, 4
  %v2499 = vor.u32 %v2495, %v2498
  %v2500 = vsel %vm1474, %v2490, %v2499
  %v2502 = vshrl.u32 %v1064, 16
  %v2504 = vrot.slane %v2502, 3
  %v2505 = vshll.u32 %v1064, 16
  %v2507 = vrot.slane %v2505, 4
  %v2508 = vor.u32 %v2504, %v2507
  %v2509 = vsel %vm1474, %v2499, %v2508
  %v2511 = vshrl.u32 %v1065, 16
  %v2513 = vrot.slane %v2511, 3
  %v2514 = vshll.u32 %v1065, 16
  %v2516 = vrot.slane %v2514, 4
  %v2517 = vor.u32 %v2513, %v2516
  %v2518 = vsel %vm1474, %v2508, %v2517
  %v2520 = vshrl.u32 %v1066, 16
  %v2522 = vrot.slane %v2520, 3
  %v2523 = vshll.u32 %v1066, 16
  %v2525 = vrot.slane %v2523, 4
  %v2526 = vor.u32 %v2522, %v2525
  %v2527 = vsel %vm1474, %v2517, %v2526
  %v2529 = vshrl.u32 %v1067, 16
  %v2531 = vrot.slane %v2529, 3
  %v2532 = vshll.u32 %v1067, 16
  %v2534 = vrot.slane %v2532, 4
  %v2535 = vor.u32 %v2531, %v2534
  %v2536 = vsel %vm1474, %v2526, %v2535
  %v2538 = vshrl.u32 %v1068, 16
  %v2540 = vrot.slane %v2538, 3
  %v2541 = vshll.u32 %v1068, 16
  %v2543 = vrot.slane %v2541, 4
  %v2544 = vor.u32 %v2540, %v2543
  %v2545 = vsel %vm1474, %v2535, %v2544
  %v2547 = vsel %vm1348, %v2482, 0
  %v2550 = vsel %vm1348, %v2491, 0
  %v2553 = vsel %vm1348, %v2500, 0
  %v2556 = vsel %vm1348, %v2509, 0
  %v2559 = vsel %vm1348, %v2518, 0
  %v2562 = vsel %vm1348, %v2527, 0
  %v2565 = vsel %vm1348, %v2536, 0
  %v2568 = vsel %vm1348, %v2545, 0
  %v2571 = vsel %vm1373, %v2465, 0
  %2573 = vmatprep.subr.bf16.mxu0 0
  %2574 = vmatpush1.bf16.msra.mxu0 0
  %2575 = vmatprep.subr.bf16.mxu0 0
  %2576 = vmatpush1.bf16.msra.mxu0 0
  %2577 = vmatprep.subr.bf16.mxu0 0
  %2578 = vmatpush1.bf16.msra.mxu0 0
  %2579 = vmatprep.subr.bf16.mxu0 0
  %2580 = vmatpush1.bf16.msra.mxu0 0
  %2581 = vmatprep.subr.bf16.mxu0 0
  %2582 = vmatpush1.bf16.msra.mxu0 0
  %2583 = vmatprep.subr.bf16.mxu0 0
  %2584 = vmatpush1.bf16.msra.mxu0 0
  %2585 = vmatprep.subr.bf16.mxu0 0
  %2586 = vmatpush1.bf16.msra.mxu0 0
  %2587 = vmatprep.subr.bf16.mxu0 0
  %2588 = vmatpush1.bf16.msra.mxu0 %v2571
  %2589 = vmatprep.subr.bf16.mxu0 0
  %2590 = vmatpush2.bf16.msra.mxu0 0
  %2591 = vmatprep.subr.bf16.mxu0 0
  %2592 = vmatpush2.bf16.msra.mxu0 0
  %2593 = vmatprep.subr.bf16.mxu0 0
  %2594 = vmatpush2.bf16.msra.mxu0 0
  %2595 = vmatprep.subr.bf16.mxu0 0
  %2596 = vmatpush2.bf16.msra.mxu0 0
  %2597 = vmatprep.subr.bf16.mxu0 0
  %2598 = vmatpush2.bf16.msra.mxu0 0
  %2599 = vmatprep.subr.bf16.mxu0 0
  %2600 = vmatpush2.bf16.msra.mxu0 0
  %2601 = vmatprep.subr.bf16.mxu0 0
  %2602 = vmatpush2.bf16.msra.mxu0 0
  %2603 = vmatprep.subr.bf16.mxu0 0
  %2604 = vmatpush2.bf16.msra.mxu0 0
  %2605 = vmatprep.mubr.bf16.mxu0 0
  %2606 = vmatmul.mubr.bf16.gmra.mxu0 %v2547
  %v2607 = vpop.f32.mrf.mxu0
  %v2608 = vadd.f32 0.0, %v2607
  %v2609 = vpop.f32.mrf.mxu0
  %v2610 = vpop.f32.mrf.mxu0
  %v2611 = vadd.f32 0.0, %v2610
  %v2612 = vpop.f32.mrf.mxu0
  %2613 = vmatprep.mubr.bf16.mxu0 0
  %2614 = vmatmul.mubr.bf16.gmra.mxu0 %v2550
  %v2615 = vpop.f32.mrf.mxu0
  %v2616 = vadd.f32 0.0, %v2615
  %v2617 = vpop.f32.mrf.mxu0
  %v2618 = vpop.f32.mrf.mxu0
  %v2619 = vadd.f32 0.0, %v2618
  %v2620 = vpop.f32.mrf.mxu0
  %2621 = vmatprep.mubr.bf16.mxu0 0
  %2622 = vmatmul.mubr.bf16.gmra.mxu0 %v2553
  %v2623 = vpop.f32.mrf.mxu0
  %v2624 = vadd.f32 0.0, %v2623
  %v2625 = vpop.f32.mrf.mxu0
  %v2626 = vpop.f32.mrf.mxu0
  %v2627 = vadd.f32 0.0, %v2626
  %v2628 = vpop.f32.mrf.mxu0
  %2629 = vmatprep.mubr.bf16.mxu0 0
  %2630 = vmatmul.mubr.bf16.gmra.mxu0 %v2556
  %v2631 = vpop.f32.mrf.mxu0
  %v2632 = vadd.f32 0.0, %v2631
  %v2633 = vpop.f32.mrf.mxu0
  %v2634 = vpop.f32.mrf.mxu0
  %v2635 = vadd.f32 0.0, %v2634
  %v2636 = vpop.f32.mrf.mxu0
  %2637 = vmatprep.mubr.bf16.mxu0 0
  %2638 = vmatmul.mubr.bf16.gmra.mxu0 %v2559
  %v2639 = vpop.f32.mrf.mxu0
  %v2640 = vadd.f32 0.0, %v2639
  %v2641 = vpop.f32.mrf.mxu0
  %v2642 = vpop.f32.mrf.mxu0
  %v2643 = vadd.f32 0.0, %v2642
  %v2644 = vpop.f32.mrf.mxu0
  %2645 = vmatprep.mubr.bf16.mxu0 0
  %2646 = vmatmul.mubr.bf16.gmra.mxu0 %v2562
  %v2647 = vpop.f32.mrf.mxu0
  %v2648 = vadd.f32 0.0, %v2647
  %v2649 = vpop.f32.mrf.mxu0
  %v2650 = vpop.f32.mrf.mxu0
  %v2651 = vadd.f32 0.0, %v2650
  %v2652 = vpop.f32.mrf.mxu0
  %2653 = vmatprep.mubr.bf16.mxu0 0
  %2654 = vmatmul.mubr.bf16.gmra.mxu0 %v2565
  %v2655 = vpop.f32.mrf.mxu0
  %v2656 = vadd.f32 0.0, %v2655
  %v2657 = vpop.f32.mrf.mxu0
  %v2658 = vpop.f32.mrf.mxu0
  %v2659 = vadd.f32 0.0, %v2658
  %v2660 = vpop.f32.mrf.mxu0
  %2661 = vmatprep.mubr.bf16.mxu0 0
  %2662 = vmatmul.mubr.bf16.gmra.mxu0 %v2568
  %v2663 = vpop.f32.mrf.mxu0
  %v2664 = vadd.f32 0.0, %v2663
  %v2665 = vpop.f32.mrf.mxu0
  %v2666 = vpop.f32.mrf.mxu0
  %v2667 = vadd.f32 0.0, %v2666
  %v2668 = vpop.f32.mrf.mxu0
  %2669 = vdwg.mxu0
  %v2670 = vadd.f32 %v2448, %v2608
  %v2671 = vadd.f32 %v2449, %v2611
  %v2672 = vadd.f32 %v2450, %v2616
  %v2673 = vadd.f32 %v2451, %v2619
  %v2674 = vadd.f32 %v2452, %v2624
  %v2675 = vadd.f32 %v2453, %v2627
  %v2676 = vadd.f32 %v2454, %v2632
  %v2677 = vadd.f32 %v2455, %v2635
  %v2678 = vadd.f32 %v2456, %v2640
  %v2679 = vadd.f32 %v2457, %v2643
  %v2680 = vadd.f32 %v2458, %v2648
  %v2681 = vadd.f32 %v2459, %v2651
  %v2682 = vadd.f32 %v2460, %v2656
  %v2683 = vadd.f32 %v2461, %v2659
  %v2684 = vadd.f32 %v2462, %v2664
  %v2685 = vadd.f32 %v2463, %v2667
  %s2686 = scalar_lea.vmem %s2, 14
  %v2687 = vld [vmem:[%s2686] sm:$0x3]
  %v2689 = vsel %vm1348, %v1182, 0
  %v2692 = vsel %vm1348, %v1183, 0
  %v2695 = vsel %vm1348, %v1184, 0
  %v2698 = vsel %vm1348, %v1185, 0
  %v2701 = vsel %vm1348, %v1186, 0
  %v2704 = vsel %vm1348, %v1187, 0
  %v2707 = vsel %vm1348, %v1188, 0
  %v2710 = vsel %vm1348, %v1189, 0
  %v2713 = vsel %vm1373, %v2687, 0
  %2715 = vmatprep.subr.bf16.mxu0 0
  %2716 = vmatpush1.bf16.msra.mxu0 0
  %2717 = vmatprep.subr.bf16.mxu0 0
  %2718 = vmatpush1.bf16.msra.mxu0 0
  %2719 = vmatprep.subr.bf16.mxu0 0
  %2720 = vmatpush1.bf16.msra.mxu0 0
  %2721 = vmatprep.subr.bf16.mxu0 0
  %2722 = vmatpush1.bf16.msra.mxu0 0
  %2723 = vmatprep.subr.bf16.mxu0 0
  %2724 = vmatpush1.bf16.msra.mxu0 0
  %2725 = vmatprep.subr.bf16.mxu0 0
  %2726 = vmatpush1.bf16.msra.mxu0 0
  %2727 = vmatprep.subr.bf16.mxu0 0
  %2728 = vmatpush1.bf16.msra.mxu0 0
  %2729 = vmatprep.subr.bf16.mxu0 0
  %2730 = vmatpush1.bf16.msra.mxu0 %v2713
  %2731 = vmatprep.subr.bf16.mxu0 0
  %2732 = vmatpush2.bf16.msra.mxu0 0
  %2733 = vmatprep.subr.bf16.mxu0 0
  %2734 = vmatpush2.bf16.msra.mxu0 0
  %2735 = vmatprep.subr.bf16.mxu0 0
  %2736 = vmatpush2.bf16.msra.mxu0 0
  %2737 = vmatprep.subr.bf16.mxu0 0
  %2738 = vmatpush2.bf16.msra.mxu0 0
  %2739 = vmatprep.subr.bf16.mxu0 0
  %2740 = vmatpush2.bf16.msra.mxu0 0
  %2741 = vmatprep.subr.bf16.mxu0 0
  %2742 = vmatpush2.bf16.msra.mxu0 0
  %2743 = vmatprep.subr.bf16.mxu0 0
  %2744 = vmatpush2.bf16.msra.mxu0 0
  %2745 = vmatprep.subr.bf16.mxu0 0
  %2746 = vmatpush2.bf16.msra.mxu0 0
  %2747 = vmatprep.mubr.bf16.mxu0 0
  %2748 = vmatmul.mubr.bf16.gmra.mxu0 %v2689
  %v2749 = vpop.f32.mrf.mxu0
  %v2750 = vadd.f32 0.0, %v2749
  %v2751 = vpop.f32.mrf.mxu0
  %v2752 = vpop.f32.mrf.mxu0
  %v2753 = vadd.f32 0.0, %v2752
  %v2754 = vpop.f32.mrf.mxu0
  %2755 = vmatprep.mubr.bf16.mxu0 0
  %2756 = vmatmul.mubr.bf16.gmra.mxu0 %v2692
  %v2757 = vpop.f32.mrf.mxu0
  %v2758 = vadd.f32 0.0, %v2757
  %v2759 = vpop.f32.mrf.mxu0
  %v2760 = vpop.f32.mrf.mxu0
  %v2761 = vadd.f32 0.0, %v2760
  %v2762 = vpop.f32.mrf.mxu0
  %2763 = vmatprep.mubr.bf16.mxu0 0
  %2764 = vmatmul.mubr.bf16.gmra.mxu0 %v2695
  %v2765 = vpop.f32.mrf.mxu0
  %v2766 = vadd.f32 0.0, %v2765
  %v2767 = vpop.f32.mrf.mxu0
  %v2768 = vpop.f32.mrf.mxu0
  %v2769 = vadd.f32 0.0, %v2768
  %v2770 = vpop.f32.mrf.mxu0
  %2771 = vmatprep.mubr.bf16.mxu0 0
  %2772 = vmatmul.mubr.bf16.gmra.mxu0 %v2698
  %v2773 = vpop.f32.mrf.mxu0
  %v2774 = vadd.f32 0.0, %v2773
  %v2775 = vpop.f32.mrf.mxu0
  %v2776 = vpop.f32.mrf.mxu0
  %v2777 = vadd.f32 0.0, %v2776
  %v2778 = vpop.f32.mrf.mxu0
  %2779 = vmatprep.mubr.bf16.mxu0 0
  %2780 = vmatmul.mubr.bf16.gmra.mxu0 %v2701
  %v2781 = vpop.f32.mrf.mxu0
  %v2782 = vadd.f32 0.0, %v2781
  %v2783 = vpop.f32.mrf.mxu0
  %v2784 = vpop.f32.mrf.mxu0
  %v2785 = vadd.f32 0.0, %v2784
  %v2786 = vpop.f32.mrf.mxu0
  %2787 = vmatprep.mubr.bf16.mxu0 0
  %2788 = vmatmul.mubr.bf16.gmra.mxu0 %v2704
  %v2789 = vpop.f32.mrf.mxu0
  %v2790 = vadd.f32 0.0, %v2789
  %v2791 = vpop.f32.mrf.mxu0
  %v2792 = vpop.f32.mrf.mxu0
  %v2793 = vadd.f32 0.0, %v2792
  %v2794 = vpop.f32.mrf.mxu0
  %2795 = vmatprep.mubr.bf16.mxu0 0
  %2796 = vmatmul.mubr.bf16.gmra.mxu0 %v2707
  %v2797 = vpop.f32.mrf.mxu0
  %v2798 = vadd.f32 0.0, %v2797
  %v2799 = vpop.f32.mrf.mxu0
  %v2800 = vpop.f32.mrf.mxu0
  %v2801 = vadd.f32 0.0, %v2800
  %v2802 = vpop.f32.mrf.mxu0
  %2803 = vmatprep.mubr.bf16.mxu0 0
  %2804 = vmatmul.mubr.bf16.gmra.mxu0 %v2710
  %v2805 = vpop.f32.mrf.mxu0
  %v2806 = vadd.f32 0.0, %v2805
  %v2807 = vpop.f32.mrf.mxu0
  %v2808 = vpop.f32.mrf.mxu0
  %v2809 = vadd.f32 0.0, %v2808
  %v2810 = vpop.f32.mrf.mxu0
  %2811 = vdwg.mxu0
  %v2812 = vadd.f32 %v2670, %v2750
  %v2813 = vadd.f32 %v2671, %v2753
  %v2814 = vadd.f32 %v2672, %v2758
  %v2815 = vadd.f32 %v2673, %v2761
  %v2816 = vadd.f32 %v2674, %v2766
  %v2817 = vadd.f32 %v2675, %v2769
  %v2818 = vadd.f32 %v2676, %v2774
  %v2819 = vadd.f32 %v2677, %v2777
  %v2820 = vadd.f32 %v2678, %v2782
  %v2821 = vadd.f32 %v2679, %v2785
  %v2822 = vadd.f32 %v2680, %v2790
  %v2823 = vadd.f32 %v2681, %v2793
  %v2824 = vadd.f32 %v2682, %v2798
  %v2825 = vadd.f32 %v2683, %v2801
  %v2826 = vadd.f32 %v2684, %v2806
  %v2827 = vadd.f32 %v2685, %v2809
  %s2828 = scalar_lea.vmem %s2, 16
  %v2829 = vld [vmem:[%s2828] sm:$0x3]
  %v2831 = vshrl.u32 %v1336, 16
  %v2833 = vshll.u32 %v1336, 16
  %v2835 = vrot.slane %v2833, 1
  %v2836 = vor.u32 %v2831, %v2835
  %v2838 = vshll.u32 %v1337, 16
  %v2840 = vrot.slane %v2838, 1
  %v2841 = vsel %vm1681, %v2836, %v2840
  %v2842 = vshrl.u32 %v1337, 16
  %v2844 = vor.u32 %v2842, %v2840
  %v2846 = vshll.u32 %v1338, 16
  %v2848 = vrot.slane %v2846, 1
  %v2849 = vsel %vm1681, %v2844, %v2848
  %v2850 = vshrl.u32 %v1338, 16
  %v2852 = vor.u32 %v2850, %v2848
  %v2854 = vshll.u32 %v1339, 16
  %v2856 = vrot.slane %v2854, 1
  %v2857 = vsel %vm1681, %v2852, %v2856
  %v2858 = vshrl.u32 %v1339, 16
  %v2860 = vor.u32 %v2858, %v2856
  %v2862 = vshll.u32 %v1340, 16
  %v2864 = vrot.slane %v2862, 1
  %v2865 = vsel %vm1681, %v2860, %v2864
  %v2866 = vshrl.u32 %v1340, 16
  %v2868 = vor.u32 %v2866, %v2864
  %v2870 = vshll.u32 %v1341, 16
  %v2872 = vrot.slane %v2870, 1
  %v2873 = vsel %vm1681, %v2868, %v2872
  %v2874 = vshrl.u32 %v1341, 16
  %v2876 = vor.u32 %v2874, %v2872
  %v2878 = vshll.u32 %v1342, 16
  %v2880 = vrot.slane %v2878, 1
  %v2881 = vsel %vm1681, %v2876, %v2880
  %v2882 = vshrl.u32 %v1342, 16
  %v2884 = vor.u32 %v2882, %v2880
  %v2886 = vshll.u32 %v1343, 16
  %v2888 = vrot.slane %v2886, 1
  %v2889 = vsel %vm1681, %v2884, %v2888
  %v2890 = vshrl.u32 %v1343, 16
  %v2892 = vor.u32 %v2890, %v2888
  %v2894 = vshll.u32 %v1344, 16
  %v2896 = vrot.slane %v2894, 1
  %v2897 = vsel %vm1681, %v2892, %v2896
  %v2899 = vsel %vm1348, %v2841, 0
  %v2902 = vsel %vm1348, %v2849, 0
  %v2905 = vsel %vm1348, %v2857, 0
  %v2908 = vsel %vm1348, %v2865, 0
  %v2911 = vsel %vm1348, %v2873, 0
  %v2914 = vsel %vm1348, %v2881, 0
  %v2917 = vsel %vm1348, %v2889, 0
  %v2920 = vsel %vm1348, %v2897, 0
  %v2923 = vsel %vm1373, %v2829, 0
  %2925 = vmatprep.subr.bf16.mxu0 0
  %2926 = vmatpush1.bf16.msra.mxu0 0
  %2927 = vmatprep.subr.bf16.mxu0 0
  %2928 = vmatpush1.bf16.msra.mxu0 0
  %2929 = vmatprep.subr.bf16.mxu0 0
  %2930 = vmatpush1.bf16.msra.mxu0 0
  %2931 = vmatprep.subr.bf16.mxu0 0
  %2932 = vmatpush1.bf16.msra.mxu0 0
  %2933 = vmatprep.subr.bf16.mxu0 0
  %2934 = vmatpush1.bf16.msra.mxu0 0
  %2935 = vmatprep.subr.bf16.mxu0 0
  %2936 = vmatpush1.bf16.msra.mxu0 0
  %2937 = vmatprep.subr.bf16.mxu0 0
  %2938 = vmatpush1.bf16.msra.mxu0 0
  %2939 = vmatprep.subr.bf16.mxu0 0
  %2940 = vmatpush1.bf16.msra.mxu0 %v2923
  %2941 = vmatprep.subr.bf16.mxu0 0
  %2942 = vmatpush2.bf16.msra.mxu0 0
  %2943 = vmatprep.subr.bf16.mxu0 0
  %2944 = vmatpush2.bf16.msra.mxu0 0
  %2945 = vmatprep.subr.bf16.mxu0 0
  %2946 = vmatpush2.bf16.msra.mxu0 0
  %2947 = vmatprep.subr.bf16.mxu0 0
  %2948 = vmatpush2.bf16.msra.mxu0 0
  %2949 = vmatprep.subr.bf16.mxu0 0
  %2950 = vmatpush2.bf16.msra.mxu0 0
  %2951 = vmatprep.subr.bf16.mxu0 0
  %2952 = vmatpush2.bf16.msra.mxu0 0
  %2953 = vmatprep.subr.bf16.mxu0 0
  %2954 = vmatpush2.bf16.msra.mxu0 0
  %2955 = vmatprep.subr.bf16.mxu0 0
  %2956 = vmatpush2.bf16.msra.mxu0 0
  %2957 = vmatprep.mubr.bf16.mxu0 0
  %2958 = vmatmul.mubr.bf16.gmra.mxu0 %v2899
  %v2959 = vpop.f32.mrf.mxu0
  %v2960 = vadd.f32 0.0, %v2959
  %v2961 = vpop.f32.mrf.mxu0
  %v2962 = vpop.f32.mrf.mxu0
  %v2963 = vadd.f32 0.0, %v2962
  %v2964 = vpop.f32.mrf.mxu0
  %2965 = vmatprep.mubr.bf16.mxu0 0
  %2966 = vmatmul.mubr.bf16.gmra.mxu0 %v2902
  %v2967 = vpop.f32.mrf.mxu0
  %v2968 = vadd.f32 0.0, %v2967
  %v2969 = vpop.f32.mrf.mxu0
  %v2970 = vpop.f32.mrf.mxu0
  %v2971 = vadd.f32 0.0, %v2970
  %v2972 = vpop.f32.mrf.mxu0
  %2973 = vmatprep.mubr.bf16.mxu0 0
  %2974 = vmatmul.mubr.bf16.gmra.mxu0 %v2905
  %v2975 = vpop.f32.mrf.mxu0
  %v2976 = vadd.f32 0.0, %v2975
  %v2977 = vpop.f32.mrf.mxu0
  %v2978 = vpop.f32.mrf.mxu0
  %v2979 = vadd.f32 0.0, %v2978
  %v2980 = vpop.f32.mrf.mxu0
  %2981 = vmatprep.mubr.bf16.mxu0 0
  %2982 = vmatmul.mubr.bf16.gmra.mxu0 %v2908
  %v2983 = vpop.f32.mrf.mxu0
  %v2984 = vadd.f32 0.0, %v2983
  %v2985 = vpop.f32.mrf.mxu0
  %v2986 = vpop.f32.mrf.mxu0
  %v2987 = vadd.f32 0.0, %v2986
  %v2988 = vpop.f32.mrf.mxu0
  %2989 = vmatprep.mubr.bf16.mxu0 0
  %2990 = vmatmul.mubr.bf16.gmra.mxu0 %v2911
  %v2991 = vpop.f32.mrf.mxu0
  %v2992 = vadd.f32 0.0, %v2991
  %v2993 = vpop.f32.mrf.mxu0
  %v2994 = vpop.f32.mrf.mxu0
  %v2995 = vadd.f32 0.0, %v2994
  %v2996 = vpop.f32.mrf.mxu0
  %2997 = vmatprep.mubr.bf16.mxu0 0
  %2998 = vmatmul.mubr.bf16.gmra.mxu0 %v2914
  %v2999 = vpop.f32.mrf.mxu0
  %v3000 = vadd.f32 0.0, %v2999
  %v3001 = vpop.f32.mrf.mxu0
  %v3002 = vpop.f32.mrf.mxu0
  %v3003 = vadd.f32 0.0, %v3002
  %v3004 = vpop.f32.mrf.mxu0
  %3005 = vmatprep.mubr.bf16.mxu0 0
  %3006 = vmatmul.mubr.bf16.gmra.mxu0 %v2917
  %v3007 = vpop.f32.mrf.mxu0
  %v3008 = vadd.f32 0.0, %v3007
  %v3009 = vpop.f32.mrf.mxu0
  %v3010 = vpop.f32.mrf.mxu0
  %v3011 = vadd.f32 0.0, %v3010
  %v3012 = vpop.f32.mrf.mxu0
  %3013 = vmatprep.mubr.bf16.mxu0 0
  %3014 = vmatmul.mubr.bf16.gmra.mxu0 %v2920
  %v3015 = vpop.f32.mrf.mxu0
  %v3016 = vadd.f32 0.0, %v3015
  %v3017 = vpop.f32.mrf.mxu0
  %v3018 = vpop.f32.mrf.mxu0
  %v3019 = vadd.f32 0.0, %v3018
  %v3020 = vpop.f32.mrf.mxu0
  %3021 = vdwg.mxu0
  %v3022 = vadd.f32 %v2812, %v2960
  %v3023 = vadd.f32 %v2813, %v2963
  %v3024 = vadd.f32 %v2814, %v2968
  %v3025 = vadd.f32 %v2815, %v2971
  %v3026 = vadd.f32 %v2816, %v2976
  %v3027 = vadd.f32 %v2817, %v2979
  %v3028 = vadd.f32 %v2818, %v2984
  %v3029 = vadd.f32 %v2819, %v2987
  %v3030 = vadd.f32 %v2820, %v2992
  %v3031 = vadd.f32 %v2821, %v2995
  %v3032 = vadd.f32 %v2822, %v3000
  %v3033 = vadd.f32 %v2823, %v3003
  %v3034 = vadd.f32 %v2824, %v3008
  %v3035 = vadd.f32 %v2825, %v3011
  %v3036 = vadd.f32 %v2826, %v3016
  %v3037 = vadd.f32 %v2827, %v3019
  %v3038 = vld [vmem:[%s3] sm:$0x1]
  %v3040 = vlaneseq
  %v3041 = vshrl.u32 %v3040, 7
  %v3042 = vsub.s32 0, %v3041
  %v3043 = vrot.slane %v3038, %v3042
  %v3045 = vadd.f32 %v3022, %v3043
  %v3046 = vadd.f32 %v3023, %v3043
  %v3047 = vadd.f32 %v3024, %v3043
  %v3048 = vadd.f32 %v3025, %v3043
  %v3049 = vadd.f32 %v3026, %v3043
  %v3050 = vadd.f32 %v3027, %v3043
  %v3051 = vadd.f32 %v3028, %v3043
  %v3052 = vadd.f32 %v3029, %v3043
  %v3053 = vadd.f32 %v3030, %v3043
  %v3054 = vadd.f32 %v3031, %v3043
  %v3055 = vadd.f32 %v3032, %v3043
  %v3056 = vadd.f32 %v3033, %v3043
  %v3057 = vadd.f32 %v3034, %v3043
  %v3058 = vadd.f32 %v3035, %v3043
  %v3059 = vadd.f32 %v3036, %v3043
  %v3060 = vadd.f32 %v3037, %v3043
  %vm3061 = vcmp.ge.f32.partialorder %v3045, 0.0
  %vm3062 = vcmp.ge.f32.partialorder %v3046, 0.0
  %vm3063 = vcmp.ge.f32.partialorder %v3047, 0.0
  %vm3064 = vcmp.ge.f32.partialorder %v3048, 0.0
  %vm3065 = vcmp.ge.f32.partialorder %v3049, 0.0
  %vm3066 = vcmp.ge.f32.partialorder %v3050, 0.0
  %vm3067 = vcmp.ge.f32.partialorder %v3051, 0.0
  %vm3068 = vcmp.ge.f32.partialorder %v3052, 0.0
  %vm3069 = vcmp.ge.f32.partialorder %v3053, 0.0
  %vm3070 = vcmp.ge.f32.partialorder %v3054, 0.0
  %vm3071 = vcmp.ge.f32.partialorder %v3055, 0.0
  %vm3072 = vcmp.ge.f32.partialorder %v3056, 0.0
  %vm3073 = vcmp.ge.f32.partialorder %v3057, 0.0
  %vm3074 = vcmp.ge.f32.partialorder %v3058, 0.0
  %vm3075 = vcmp.ge.f32.partialorder %v3059, 0.0
  %vm3076 = vcmp.ge.f32.partialorder %v3060, 0.0
  %v3077 = vmul.f32 %v3045, 0.01
  %v3078 = vmul.f32 %v3046, 0.01
  %v3079 = vmul.f32 %v3047, 0.01
  %v3080 = vmul.f32 %v3048, 0.01
  %v3081 = vmul.f32 %v3049, 0.01
  %v3082 = vmul.f32 %v3050, 0.01
  %v3083 = vmul.f32 %v3051, 0.01
  %v3084 = vmul.f32 %v3052, 0.01
  %v3085 = vmul.f32 %v3053, 0.01
  %v3086 = vmul.f32 %v3054, 0.01
  %v3087 = vmul.f32 %v3055, 0.01
  %v3088 = vmul.f32 %v3056, 0.01
  %v3089 = vmul.f32 %v3057, 0.01
  %v3090 = vmul.f32 %v3058, 0.01
  %v3091 = vmul.f32 %v3059, 0.01
  %v3092 = vmul.f32 %v3060, 0.01
  %v3093 = vsel %vm3061, %v3045, %v3077
  %v3094 = vsel %vm3062, %v3046, %v3078
  %v3095 = vsel %vm3063, %v3047, %v3079
  %v3096 = vsel %vm3064, %v3048, %v3080
  %v3097 = vsel %vm3065, %v3049, %v3081
  %v3098 = vsel %vm3066, %v3050, %v3082
  %v3099 = vsel %vm3067, %v3051, %v3083
  %v3100 = vsel %vm3068, %v3052, %v3084
  %v3101 = vsel %vm3069, %v3053, %v3085
  %v3102 = vsel %vm3070, %v3054, %v3086
  %v3103 = vsel %vm3071, %v3055, %v3087
  %v3104 = vsel %vm3072, %v3056, %v3088
  %v3105 = vsel %vm3073, %v3057, %v3089
  %v3106 = vsel %vm3074, %v3058, %v3090
  %v3107 = vsel %vm3075, %v3059, %v3091
  %v3108 = vsel %vm3076, %v3060, %v3092
  %v3109 = vmul.f32 %v3093, %v136
  %v3110 = vmul.f32 %v3094, %v138
  %v3111 = vmul.f32 %v3095, %v140
  %v3112 = vmul.f32 %v3096, %v142
  %v3113 = vmul.f32 %v3097, %v144
  %v3114 = vmul.f32 %v3098, %v146
  %v3115 = vmul.f32 %v3099, %v148
  %v3116 = vmul.f32 %v3100, %v150
  %v3117 = vmul.f32 %v3101, %v152
  %v3118 = vmul.f32 %v3102, %v154
  %v3119 = vmul.f32 %v3103, %v156
  %v3120 = vmul.f32 %v3104, %v158
  %v3121 = vmul.f32 %v3105, %v160
  %v3122 = vmul.f32 %v3106, %v162
  %v3123 = vmul.f32 %v3107, %v161
  %v3124 = vpack.c.bf16 %v3110, %v3109
  %v3125 = vpack.c.bf16 %v3112, %v3111
  %v3126 = vpack.c.bf16 %v3114, %v3113
  %v3127 = vpack.c.bf16 %v3116, %v3115
  %v3128 = vpack.c.bf16 %v3118, %v3117
  %v3129 = vpack.c.bf16 %v3120, %v3119
  %v3130 = vpack.c.bf16 %v3122, %v3121
  %v3131 = vpack.c.bf16 %v3123, %v3123
  %v3132 = vmul.f32 %v3093, %v231
  %v3133 = vmul.f32 %v3094, %v236
  %v3134 = vmul.f32 %v3095, %v241
  %v3135 = vmul.f32 %v3096, %v246
  %v3136 = vmul.f32 %v3097, %v251
  %v3137 = vmul.f32 %v3098, %v256
  %v3138 = vmul.f32 %v3099, %v261
  %v3139 = vmul.f32 %v3100, %v266
  %v3140 = vmul.f32 %v3101, %v271
  %v3141 = vmul.f32 %v3102, %v276
  %v3142 = vmul.f32 %v3103, %v281
  %v3143 = vmul.f32 %v3104, %v286
  %v3144 = vmul.f32 %v3105, %v291
  %v3145 = vmul.f32 %v3106, %v296
  %v3146 = vmul.f32 %v3107, %v301
  %v3147 = vpack.c.bf16 %v3132, %v303
  %v3148 = vpack.c.bf16 %v3134, %v3133
  %v3149 = vpack.c.bf16 %v3136, %v3135
  %v3150 = vpack.c.bf16 %v3138, %v3137
  %v3151 = vpack.c.bf16 %v3140, %v3139
  %v3152 = vpack.c.bf16 %v3142, %v3141
  %v3153 = vpack.c.bf16 %v3144, %v3143
  %v3154 = vpack.c.bf16 %v3146, %v3145
  %v3155 = vmul.f32 %v3093, %v411
  %v3156 = vmul.f32 %v3094, %v413
  %v3157 = vmul.f32 %v3095, %v415
  %v3158 = vmul.f32 %v3096, %v417
  %v3159 = vmul.f32 %v3097, %v419
  %v3160 = vmul.f32 %v3098, %v421
  %v3161 = vmul.f32 %v3099, %v423
  %v3162 = vmul.f32 %v3100, %v425
  %v3163 = vmul.f32 %v3101, %v427
  %v3164 = vmul.f32 %v3102, %v429
  %v3165 = vmul.f32 %v3103, %v431
  %v3166 = vmul.f32 %v3104, %v433
  %v3167 = vmul.f32 %v3105, %v435
  %v3168 = vmul.f32 %v3106, %v437
  %v3169 = vmul.f32 %v3107, %v439
  %v3170 = vmul.f32 %v3108, %v438
  %v3171 = vpack.c.bf16 %v3155, %v457
  %v3172 = vpack.c.bf16 %v3157, %v3156
  %v3173 = vpack.c.bf16 %v3159, %v3158
  %v3174 = vpack.c.bf16 %v3161, %v3160
  %v3175 = vpack.c.bf16 %v3163, %v3162
  %v3176 = vpack.c.bf16 %v3165, %v3164
  %v3177 = vpack.c.bf16 %v3167, %v3166
  %v3178 = vpack.c.bf16 %v3169, %v3168
  %v3179 = vpack.c.bf16 %v3170, %v3170
  %v3180 = vmul.f32 %v3093, %v566
  %v3181 = vmul.f32 %v3094, %v568
  %v3182 = vmul.f32 %v3095, %v570
  %v3183 = vmul.f32 %v3096, %v572
  %v3184 = vmul.f32 %v3097, %v574
  %v3185 = vmul.f32 %v3098, %v576
  %v3186 = vmul.f32 %v3099, %v578
  %v3187 = vmul.f32 %v3100, %v580
  %v3188 = vmul.f32 %v3101, %v582
  %v3189 = vmul.f32 %v3102, %v584
  %v3190 = vmul.f32 %v3103, %v586
  %v3191 = vmul.f32 %v3104, %v588
  %v3192 = vmul.f32 %v3105, %v590
  %v3193 = vmul.f32 %v3106, %v592
  %v3194 = vmul.f32 %v3107, %v594
  %v3195 = vmul.f32 %v3108, %v593
  %v3196 = vpack.c.bf16 %v3180, %v612
  %v3197 = vpack.c.bf16 %v3182, %v3181
  %v3198 = vpack.c.bf16 %v3184, %v3183
  %v3199 = vpack.c.bf16 %v3186, %v3185
  %v3200 = vpack.c.bf16 %v3188, %v3187
  %v3201 = vpack.c.bf16 %v3190, %v3189
  %v3202 = vpack.c.bf16 %v3192, %v3191
  %v3203 = vpack.c.bf16 %v3194, %v3193
  %v3204 = vpack.c.bf16 %v3195, %v3195
  %v3205 = vmul.f32 %v3093, %v658
  %v3206 = vmul.f32 %v3094, %v663
  %v3207 = vmul.f32 %v3095, %v668
  %v3208 = vmul.f32 %v3096, %v673
  %v3209 = vmul.f32 %v3097, %v678
  %v3210 = vmul.f32 %v3098, %v683
  %v3211 = vmul.f32 %v3099, %v688
  %v3212 = vmul.f32 %v3100, %v693
  %v3213 = vmul.f32 %v3101, %v698
  %v3214 = vmul.f32 %v3102, %v703
  %v3215 = vmul.f32 %v3103, %v708
  %v3216 = vmul.f32 %v3104, %v713
  %v3217 = vmul.f32 %v3105, %v718
  %v3218 = vmul.f32 %v3106, %v723
  %v3219 = vmul.f32 %v3107, %v728
  %v3220 = vmul.f32 %v3108, %v733
  %v3221 = vpack.c.bf16 %v3206, %v3205
  %v3222 = vpack.c.bf16 %v3208, %v3207
  %v3223 = vpack.c.bf16 %v3210, %v3209
  %v3224 = vpack.c.bf16 %v3212, %v3211
  %v3225 = vpack.c.bf16 %v3214, %v3213
  %v3226 = vpack.c.bf16 %v3216, %v3215
  %v3227 = vpack.c.bf16 %v3218, %v3217
  %v3228 = vpack.c.bf16 %v3220, %v3219
  %v3229 = vmul.f32 %v3093, %v840
  %v3230 = vmul.f32 %v3094, %v842
  %v3231 = vmul.f32 %v3095, %v844
  %v3232 = vmul.f32 %v3096, %v846
  %v3233 = vmul.f32 %v3097, %v848
  %v3234 = vmul.f32 %v3098, %v850
  %v3235 = vmul.f32 %v3099, %v852
  %v3236 = vmul.f32 %v3100, %v854
  %v3237 = vmul.f32 %v3101, %v856
  %v3238 = vmul.f32 %v3102, %v858
  %v3239 = vmul.f32 %v3103, %v860
  %v3240 = vmul.f32 %v3104, %v862
  %v3241 = vmul.f32 %v3105, %v864
  %v3242 = vmul.f32 %v3106, %v866
  %v3243 = vmul.f32 %v3107, %v868
  %v3244 = vmul.f32 %v3108, %v870
  %v3245 = vpack.c.bf16 %v3230, %v3229
  %v3246 = vpack.c.bf16 %v3232, %v3231
  %v3247 = vpack.c.bf16 %v3234, %v3233
  %v3248 = vpack.c.bf16 %v3236, %v3235
  %v3249 = vpack.c.bf16 %v3238, %v3237
  %v3250 = vpack.c.bf16 %v3240, %v3239
  %v3251 = vpack.c.bf16 %v3242, %v3241
  %v3252 = vpack.c.bf16 %v3244, %v3243
  %v3253 = vmul.f32 %v3093, %v995
  %v3254 = vmul.f32 %v3094, %v997
  %v3255 = vmul.f32 %v3095, %v999
  %v3256 = vmul.f32 %v3096, %v1001
  %v3257 = vmul.f32 %v3097, %v1003
  %v3258 = vmul.f32 %v3098, %v1005
  %v3259 = vmul.f32 %v3099, %v1007
  %v3260 = vmul.f32 %v3100, %v1009
  %v3261 = vmul.f32 %v3101, %v1011
  %v3262 = vmul.f32 %v3102, %v1013
  %v3263 = vmul.f32 %v3103, %v1015
  %v3264 = vmul.f32 %v3104, %v1017
  %v3265 = vmul.f32 %v3105, %v1019
  %v3266 = vmul.f32 %v3106, %v1021
  %v3267 = vmul.f32 %v3107, %v1023
  %v3268 = vmul.f32 %v3108, %v1025
  %v3269 = vpack.c.bf16 %v3254, %v3253
  %v3270 = vpack.c.bf16 %v3256, %v3255
  %v3271 = vpack.c.bf16 %v3258, %v3257
  %v3272 = vpack.c.bf16 %v3260, %v3259
  %v3273 = vpack.c.bf16 %v3262, %v3261
  %v3274 = vpack.c.bf16 %v3264, %v3263
  %v3275 = vpack.c.bf16 %v3266, %v3265
  %v3276 = vpack.c.bf16 %v3268, %v3267
  %v3277 = vmul.f32 %v3094, %v1089
  %v3278 = vmul.f32 %v3095, %v1094
  %v3279 = vmul.f32 %v3096, %v1099
  %v3280 = vmul.f32 %v3097, %v1104
  %v3281 = vmul.f32 %v3098, %v1109
  %v3282 = vmul.f32 %v3099, %v1114
  %v3283 = vmul.f32 %v3100, %v1119
  %v3284 = vmul.f32 %v3101, %v1124
  %v3285 = vmul.f32 %v3102, %v1129
  %v3286 = vmul.f32 %v3103, %v1134
  %v3287 = vmul.f32 %v3104, %v1139
  %v3288 = vmul.f32 %v3105, %v1144
  %v3289 = vmul.f32 %v3106, %v1149
  %v3290 = vmul.f32 %v3107, %v1154
  %v3291 = vmul.f32 %v3108, %v1159
  %v3292 = vpack.c.bf16 %v3278, %v3277
  %v3293 = vpack.c.bf16 %v3280, %v3279
  %v3294 = vpack.c.bf16 %v3282, %v3281
  %v3295 = vpack.c.bf16 %v3284, %v3283
  %v3296 = vpack.c.bf16 %v3286, %v3285
  %v3297 = vpack.c.bf16 %v3288, %v3287
  %v3298 = vpack.c.bf16 %v3290, %v3289
  %v3299 = vpack.c.bf16 %v1181, %v3291
  %v3300 = vmul.f32 %v3094, %v1271
  %v3301 = vmul.f32 %v3095, %v1273
  %v3302 = vmul.f32 %v3096, %v1275
  %v3303 = vmul.f32 %v3097, %v1277
  %v3304 = vmul.f32 %v3098, %v1279
  %v3305 = vmul.f32 %v3099, %v1281
  %v3306 = vmul.f32 %v3100, %v1283
  %v3307 = vmul.f32 %v3101, %v1285
  %v3308 = vmul.f32 %v3102, %v1287
  %v3309 = vmul.f32 %v3103, %v1289
  %v3310 = vmul.f32 %v3104, %v1291
  %v3311 = vmul.f32 %v3105, %v1293
  %v3312 = vmul.f32 %v3106, %v1295
  %v3313 = vmul.f32 %v3107, %v1297
  %v3314 = vmul.f32 %v3108, %v1299
  %v3315 = vpack.c.bf16 %v3301, %v3300
  %v3316 = vpack.c.bf16 %v3303, %v3302
  %v3317 = vpack.c.bf16 %v3305, %v3304
  %v3318 = vpack.c.bf16 %v3307, %v3306
  %v3319 = vpack.c.bf16 %v3309, %v3308
  %v3320 = vpack.c.bf16 %v3311, %v3310
  %v3321 = vpack.c.bf16 %v3313, %v3312
  %v3322 = vpack.c.bf16 %v1334, %v3314
  %vm3323 = vsmask.f32 3328
  %v3325 = vshrl.u32 %v3147, 16
  %v3327 = vrot.slane %v3325, 4
  %v3328 = vshll.u32 %v3147, 16
  %v3330 = vrot.slane %v3328, 5
  %v3331 = vor.u32 %v3327, %v3330
  %v3333 = vshrl.u32 %v3148, 16
  %v3335 = vrot.slane %v3333, 4
  %v3336 = vshll.u32 %v3148, 16
  %v3338 = vrot.slane %v3336, 5
  %v3339 = vor.u32 %v3335, %v3338
  %v3340 = vsel %vm3323, %v3331, %v3339
  %v3342 = vshrl.u32 %v3149, 16
  %v3344 = vrot.slane %v3342, 4
  %v3345 = vshll.u32 %v3149, 16
  %v3347 = vrot.slane %v3345, 5
  %v3348 = vor.u32 %v3344, %v3347
  %v3349 = vsel %vm3323, %v3339, %v3348
  %v3351 = vshrl.u32 %v3150, 16
  %v3353 = vrot.slane %v3351, 4
  %v3354 = vshll.u32 %v3150, 16
  %v3356 = vrot.slane %v3354, 5
  %v3357 = vor.u32 %v3353, %v3356
  %v3358 = vsel %vm3323, %v3348, %v3357
  %v3360 = vshrl.u32 %v3151, 16
  %v3362 = vrot.slane %v3360, 4
  %v3363 = vshll.u32 %v3151, 16
  %v3365 = vrot.slane %v3363, 5
  %v3366 = vor.u32 %v3362, %v3365
  %v3367 = vsel %vm3323, %v3357, %v3366
  %v3369 = vshrl.u32 %v3152, 16
  %v3371 = vrot.slane %v3369, 4
  %v3372 = vshll.u32 %v3152, 16
  %v3374 = vrot.slane %v3372, 5
  %v3375 = vor.u32 %v3371, %v3374
  %v3376 = vsel %vm3323, %v3366, %v3375
  %v3378 = vshrl.u32 %v3153, 16
  %v3380 = vrot.slane %v3378, 4
  %v3381 = vshll.u32 %v3153, 16
  %v3383 = vrot.slane %v3381, 5
  %v3384 = vor.u32 %v3380, %v3383
  %v3385 = vsel %vm3323, %v3375, %v3384
  %v3387 = vshrl.u32 %v3154, 16
  %v3389 = vrot.slane %v3387, 4
  %v3390 = vshll.u32 %v3154, 16
  %v3392 = vrot.slane %v3390, 5
  %v3393 = vor.u32 %v3389, %v3392
  %v3394 = vsel %vm3323, %v3384, %v3393
  %vm3404 = vcmask 1042432
  %v3405 = vrot.slane %v3171, 5
  %v3406 = vrot.slane %v3172, 5
  %v3407 = vsel %vm3404, %v3405, %v3406
  %v3408 = vrot.slane %v3173, 5
  %v3409 = vsel %vm3404, %v3406, %v3408
  %v3410 = vrot.slane %v3174, 5
  %v3411 = vsel %vm3404, %v3408, %v3410
  %v3412 = vrot.slane %v3175, 5
  %v3413 = vsel %vm3404, %v3410, %v3412
  %v3414 = vrot.slane %v3176, 5
  %v3415 = vsel %vm3404, %v3412, %v3414
  %v3416 = vrot.slane %v3177, 5
  %v3417 = vsel %vm3404, %v3414, %v3416
  %v3418 = vrot.slane %v3178, 5
  %v3419 = vsel %vm3404, %v3416, %v3418
  %v3420 = vrot.slane %v3179, 5
  %v3421 = vsel %vm3404, %v3418, %v3420
  %v3423 = vshrl.u32 %v3221, 16
  %v3425 = vrot.slane %v3423, 4
  %v3426 = vshll.u32 %v3221, 16
  %v3428 = vrot.slane %v3426, 5
  %v3429 = vor.u32 %v3425, %v3428
  %v3431 = vshrl.u32 %v3222, 16
  %v3433 = vrot.slane %v3431, 4
  %v3434 = vshll.u32 %v3222, 16
  %v3436 = vrot.slane %v3434, 5
  %v3437 = vor.u32 %v3433, %v3436
  %v3438 = vsel %vm3323, %v3429, %v3437
  %v3440 = vshrl.u32 %v3223, 16
  %v3442 = vrot.slane %v3440, 4
  %v3443 = vshll.u32 %v3223, 16
  %v3445 = vrot.slane %v3443, 5
  %v3446 = vor.u32 %v3442, %v3445
  %v3447 = vsel %vm3323, %v3437, %v3446
  %v3449 = vshrl.u32 %v3224, 16
  %v3451 = vrot.slane %v3449, 4
  %v3452 = vshll.u32 %v3224, 16
  %v3454 = vrot.slane %v3452, 5
  %v3455 = vor.u32 %v3451, %v3454
  %v3456 = vsel %vm3323, %v3446, %v3455
  %v3458 = vshrl.u32 %v3225, 16
  %v3460 = vrot.slane %v3458, 4
  %v3461 = vshll.u32 %v3225, 16
  %v3463 = vrot.slane %v3461, 5
  %v3464 = vor.u32 %v3460, %v3463
  %v3465 = vsel %vm3323, %v3455, %v3464
  %v3467 = vshrl.u32 %v3226, 16
  %v3469 = vrot.slane %v3467, 4
  %v3470 = vshll.u32 %v3226, 16
  %v3472 = vrot.slane %v3470, 5
  %v3473 = vor.u32 %v3469, %v3472
  %v3474 = vsel %vm3323, %v3464, %v3473
  %v3476 = vshrl.u32 %v3227, 16
  %v3478 = vrot.slane %v3476, 4
  %v3479 = vshll.u32 %v3227, 16
  %v3481 = vrot.slane %v3479, 5
  %v3482 = vor.u32 %v3478, %v3481
  %v3483 = vsel %vm3323, %v3473, %v3482
  %v3485 = vshrl.u32 %v3228, 16
  %v3487 = vrot.slane %v3485, 4
  %v3488 = vshll.u32 %v3228, 16
  %v3490 = vrot.slane %v3488, 5
  %v3491 = vor.u32 %v3487, %v3490
  %v3492 = vsel %vm3323, %v3482, %v3491
  %v3502 = vrot.slane %v3245, 5
  %v3503 = vrot.slane %v3246, 5
  %v3504 = vsel %vm3404, %v3502, %v3503
  %v3505 = vrot.slane %v3247, 5
  %v3506 = vsel %vm3404, %v3503, %v3505
  %v3507 = vrot.slane %v3248, 5
  %v3508 = vsel %vm3404, %v3505, %v3507
  %v3509 = vrot.slane %v3249, 5
  %v3510 = vsel %vm3404, %v3507, %v3509
  %v3511 = vrot.slane %v3250, 5
  %v3512 = vsel %vm3404, %v3509, %v3511
  %v3513 = vrot.slane %v3251, 5
  %v3514 = vsel %vm3404, %v3511, %v3513
  %v3515 = vrot.slane %v3252, 5
  %v3516 = vsel %vm3404, %v3513, %v3515
  %v3517 = vrot.slane %v913, 5
  %v3518 = vsel %vm3404, %v3515, %v3517
  %v3520 = vshrl.u32 %v3292, 16
  %v3522 = vrot.slane %v3520, 4
  %v3523 = vshll.u32 %v3292, 16
  %v3525 = vrot.slane %v3523, 5
  %v3526 = vor.u32 %v3522, %v3525
  %v3528 = vshrl.u32 %v3293, 16
  %v3530 = vrot.slane %v3528, 4
  %v3531 = vshll.u32 %v3293, 16
  %v3533 = vrot.slane %v3531, 5
  %v3534 = vor.u32 %v3530, %v3533
  %v3535 = vsel %vm3323, %v3526, %v3534
  %v3537 = vshrl.u32 %v3294, 16
  %v3539 = vrot.slane %v3537, 4
  %v3540 = vshll.u32 %v3294, 16
  %v3542 = vrot.slane %v3540, 5
  %v3543 = vor.u32 %v3539, %v3542
  %v3544 = vsel %vm3323, %v3534, %v3543
  %v3546 = vshrl.u32 %v3295, 16
  %v3548 = vrot.slane %v3546, 4
  %v3549 = vshll.u32 %v3295, 16
  %v3551 = vrot.slane %v3549, 5
  %v3552 = vor.u32 %v3548, %v3551
  %v3553 = vsel %vm3323, %v3543, %v3552
  %v3555 = vshrl.u32 %v3296, 16
  %v3557 = vrot.slane %v3555, 4
  %v3558 = vshll.u32 %v3296, 16
  %v3560 = vrot.slane %v3558, 5
  %v3561 = vor.u32 %v3557, %v3560
  %v3562 = vsel %vm3323, %v3552, %v3561
  %v3564 = vshrl.u32 %v3297, 16
  %v3566 = vrot.slane %v3564, 4
  %v3567 = vshll.u32 %v3297, 16
  %v3569 = vrot.slane %v3567, 5
  %v3570 = vor.u32 %v3566, %v3569
  %v3571 = vsel %vm3323, %v3561, %v3570
  %v3573 = vshrl.u32 %v3298, 16
  %v3575 = vrot.slane %v3573, 4
  %v3576 = vshll.u32 %v3298, 16
  %v3578 = vrot.slane %v3576, 5
  %v3579 = vor.u32 %v3575, %v3578
  %v3580 = vsel %vm3323, %v3570, %v3579
  %v3582 = vshrl.u32 %v3299, 16
  %v3584 = vrot.slane %v3582, 4
  %v3585 = vshll.u32 %v3299, 16
  %v3587 = vrot.slane %v3585, 5
  %v3588 = vor.u32 %v3584, %v3587
  %v3589 = vsel %vm3323, %v3579, %v3588
  %v3599 = vrot.slane %v3315, 5
  %v3600 = vrot.slane %v3316, 5
  %v3601 = vsel %vm3404, %v3599, %v3600
  %v3602 = vrot.slane %v3317, 5
  %v3603 = vsel %vm3404, %v3600, %v3602
  %v3604 = vrot.slane %v3318, 5
  %v3605 = vsel %vm3404, %v3602, %v3604
  %v3606 = vrot.slane %v3319, 5
  %v3607 = vsel %vm3404, %v3604, %v3606
  %v3608 = vrot.slane %v3320, 5
  %v3609 = vsel %vm3404, %v3606, %v3608
  %v3610 = vrot.slane %v3321, 5
  %v3611 = vsel %vm3404, %v3608, %v3610
  %v3612 = vrot.slane %v3322, 5
  %v3613 = vsel %vm3404, %v3610, %v3612
  %v3614 = vrot.slane %v1344, 5
  %v3615 = vsel %vm3404, %v3612, %v3614
  %v3616 = vld [vmem:[%s4] sm:$0xff]
  %v3617 = vld [vmem:[%s4 + $0x8] sm:$0xff]
  %v3618 = vld [vmem:[%s4 + $0x10] sm:$0xff]
  %v3619 = vld [vmem:[%s4 + $0x18] sm:$0xff]
  %v3620 = vld [vmem:[%s4 + $0x20] sm:$0xff]
  %v3621 = vld [vmem:[%s4 + $0x28] sm:$0xff]
  %v3622 = vld [vmem:[%s4 + $0x30] sm:$0xff]
  %v3623 = vld [vmem:[%s4 + $0x38] sm:$0xff]
  %v3624 = vld [vmem:[%s4 + $0x40] sm:$0xff]
  %v3625 = vld [vmem:[%s4 + $0x48] sm:$0xff]
  %v3626 = vld [vmem:[%s4 + $0x50] sm:$0xff]
  %v3627 = vld [vmem:[%s4 + $0x58] sm:$0xff]
  %v3628 = vld [vmem:[%s4 + $0x60] sm:$0xff]
  %v3629 = vld [vmem:[%s4 + $0x68] sm:$0xff]
  %v3630 = vld [vmem:[%s4 + $0x70] sm:$0xff]
  %v3631 = vld [vmem:[%s4 + $0x78] sm:$0xff]
  %v3632 = vld [vmem:[%s4 + $0x80] sm:$0xff]
  %v3633 = vld [vmem:[%s4 + $0x88] sm:$0xff]
  %v3634 = vld [vmem:[%s4 + $0x90] sm:$0xff]
  %v3635 = vld [vmem:[%s4 + $0x98] sm:$0xff]
  %v3636 = vld [vmem:[%s4 + $0xa0] sm:$0xff]
  %v3637 = vld [vmem:[%s4 + $0xa8] sm:$0xff]
  %v3638 = vld [vmem:[%s4 + $0xb0] sm:$0xff]
  %v3639 = vld [vmem:[%s4 + $0xb8] sm:$0xff]
  %v3640 = vld [vmem:[%s4 + $0xc0] sm:$0xff]
  %v3641 = vld [vmem:[%s4 + $0xc8] sm:$0xff]
  %v3642 = vld [vmem:[%s4 + $0xd0] sm:$0xff]
  %v3643 = vld [vmem:[%s4 + $0xd8] sm:$0xff]
  %v3644 = vld [vmem:[%s4 + $0xe0] sm:$0xff]
  %v3645 = vld [vmem:[%s4 + $0xe8] sm:$0xff]
  %v3646 = vld [vmem:[%s4 + $0xf0] sm:$0xff]
  %v3647 = vld [vmem:[%s4 + $0xf8] sm:$0xff]
  %v3648 = vld [vmem:[%s4 + $0x100] sm:$0xff]
  %v3649 = vld [vmem:[%s4 + $0x108] sm:$0xff]
  %v3650 = vld [vmem:[%s4 + $0x110] sm:$0xff]
  %v3651 = vld [vmem:[%s4 + $0x118] sm:$0xff]
  %v3652 = vld [vmem:[%s4 + $0x120] sm:$0xff]
  %v3653 = vld [vmem:[%s4 + $0x128] sm:$0xff]
  %v3654 = vld [vmem:[%s4 + $0x130] sm:$0xff]
  %v3655 = vld [vmem:[%s4 + $0x138] sm:$0xff]
  %v3656 = vld [vmem:[%s4 + $0x140] sm:$0xff]
  %v3657 = vld [vmem:[%s4 + $0x148] sm:$0xff]
  %v3658 = vld [vmem:[%s4 + $0x150] sm:$0xff]
  %v3659 = vld [vmem:[%s4 + $0x158] sm:$0xff]
  %v3660 = vld [vmem:[%s4 + $0x160] sm:$0xff]
  %v3661 = vld [vmem:[%s4 + $0x168] sm:$0xff]
  %v3662 = vld [vmem:[%s4 + $0x170] sm:$0xff]
  %v3663 = vld [vmem:[%s4 + $0x178] sm:$0xff]
  %v3664 = vld [vmem:[%s4 + $0x180] sm:$0xff]
  %v3665 = vld [vmem:[%s4 + $0x188] sm:$0xff]
  %v3666 = vld [vmem:[%s4 + $0x190] sm:$0xff]
  %v3667 = vld [vmem:[%s4 + $0x198] sm:$0xff]
  %v3668 = vld [vmem:[%s4 + $0x1a0] sm:$0xff]
  %v3669 = vld [vmem:[%s4 + $0x1a8] sm:$0xff]
  %v3670 = vld [vmem:[%s4 + $0x1b0] sm:$0xff]
  %v3671 = vld [vmem:[%s4 + $0x1b8] sm:$0xff]
  %v3672 = vld [vmem:[%s4 + $0x1c0] sm:$0xff]
  %v3673 = vld [vmem:[%s4 + $0x1c8] sm:$0xff]
  %v3674 = vld [vmem:[%s4 + $0x1d0] sm:$0xff]
  %v3675 = vld [vmem:[%s4 + $0x1d8] sm:$0xff]
  %v3676 = vld [vmem:[%s4 + $0x1e0] sm:$0xff]
  %v3677 = vld [vmem:[%s4 + $0x1e8] sm:$0xff]
  %v3678 = vld [vmem:[%s4 + $0x1f0] sm:$0xff]
  %v3679 = vld [vmem:[%s4 + $0x1f8] sm:$0xff]
  %v3680 = vld [vmem:[%s4 + $0x200] sm:$0xff]
  %v3681 = vld [vmem:[%s4 + $0x208] sm:$0xff]
  %v3682 = vld [vmem:[%s4 + $0x210] sm:$0xff]
  %v3683 = vld [vmem:[%s4 + $0x218] sm:$0xff]
  %v3684 = vld [vmem:[%s4 + $0x220] sm:$0xff]
  %v3685 = vld [vmem:[%s4 + $0x228] sm:$0xff]
  %v3686 = vld [vmem:[%s4 + $0x230] sm:$0xff]
  %v3687 = vld [vmem:[%s4 + $0x238] sm:$0xff]
  %v3688 = vld [vmem:[%s4 + $0x240] sm:$0xff]
  %v3689 = vld [vmem:[%s4 + $0x248] sm:$0xff]
  %v3690 = vld [vmem:[%s4 + $0x250] sm:$0xff]
  %v3691 = vld [vmem:[%s4 + $0x258] sm:$0xff]
  %v3692 = vld [vmem:[%s4 + $0x260] sm:$0xff]
  %v3693 = vld [vmem:[%s4 + $0x268] sm:$0xff]
  %v3694 = vld [vmem:[%s4 + $0x270] sm:$0xff]
  %v3695 = vld [vmem:[%s4 + $0x278] sm:$0xff]
  %v3696 = vld [vmem:[%s4 + $0x280] sm:$0xff]
  %v3697 = vld [vmem:[%s4 + $0x288] sm:$0xff]
  %v3698 = vld [vmem:[%s4 + $0x290] sm:$0xff]
  %v3699 = vld [vmem:[%s4 + $0x298] sm:$0xff]
  %v3700 = vld [vmem:[%s4 + $0x2a0] sm:$0xff]
  %v3701 = vld [vmem:[%s4 + $0x2a8] sm:$0xff]
  %v3702 = vld [vmem:[%s4 + $0x2b0] sm:$0xff]
  %v3703 = vld [vmem:[%s4 + $0x2b8] sm:$0xff]
  %v3704 = vld [vmem:[%s4 + $0x2c0] sm:$0xff]
  %v3705 = vld [vmem:[%s4 + $0x2c8] sm:$0xff]
  %v3706 = vld [vmem:[%s4 + $0x2d0] sm:$0xff]
  %v3707 = vld [vmem:[%s4 + $0x2d8] sm:$0xff]
  %v3708 = vld [vmem:[%s4 + $0x2e0] sm:$0xff]
  %v3709 = vld [vmem:[%s4 + $0x2e8] sm:$0xff]
  %v3710 = vld [vmem:[%s4 + $0x2f0] sm:$0xff]
  %v3711 = vld [vmem:[%s4 + $0x2f8] sm:$0xff]
  %v3712 = vld [vmem:[%s4 + $0x300] sm:$0xff]
  %v3713 = vld [vmem:[%s4 + $0x308] sm:$0xff]
  %v3714 = vld [vmem:[%s4 + $0x310] sm:$0xff]
  %v3715 = vld [vmem:[%s4 + $0x318] sm:$0xff]
  %v3716 = vld [vmem:[%s4 + $0x320] sm:$0xff]
  %v3717 = vld [vmem:[%s4 + $0x328] sm:$0xff]
  %v3718 = vld [vmem:[%s4 + $0x330] sm:$0xff]
  %v3719 = vld [vmem:[%s4 + $0x338] sm:$0xff]
  %v3720 = vld [vmem:[%s4 + $0x340] sm:$0xff]
  %v3721 = vld [vmem:[%s4 + $0x348] sm:$0xff]
  %v3722 = vld [vmem:[%s4 + $0x350] sm:$0xff]
  %v3723 = vld [vmem:[%s4 + $0x358] sm:$0xff]
  %v3724 = vld [vmem:[%s4 + $0x360] sm:$0xff]
  %v3725 = vld [vmem:[%s4 + $0x368] sm:$0xff]
  %v3726 = vld [vmem:[%s4 + $0x370] sm:$0xff]
  %v3727 = vld [vmem:[%s4 + $0x378] sm:$0xff]
  %v3728 = vld [vmem:[%s4 + $0x380] sm:$0xff]
  %v3729 = vld [vmem:[%s4 + $0x388] sm:$0xff]
  %v3730 = vld [vmem:[%s4 + $0x390] sm:$0xff]
  %v3731 = vld [vmem:[%s4 + $0x398] sm:$0xff]
  %v3732 = vld [vmem:[%s4 + $0x3a0] sm:$0xff]
  %v3733 = vld [vmem:[%s4 + $0x3a8] sm:$0xff]
  %v3734 = vld [vmem:[%s4 + $0x3b0] sm:$0xff]
  %v3735 = vld [vmem:[%s4 + $0x3b8] sm:$0xff]
  %v3736 = vld [vmem:[%s4 + $0x3c0] sm:$0xff]
  %v3737 = vld [vmem:[%s4 + $0x3c8] sm:$0xff]
  %v3738 = vld [vmem:[%s4 + $0x3d0] sm:$0xff]
  %v3739 = vld [vmem:[%s4 + $0x3d8] sm:$0xff]
  %v3740 = vld [vmem:[%s4 + $0x3e0] sm:$0xff]
  %v3741 = vld [vmem:[%s4 + $0x3e8] sm:$0xff]
  %v3742 = vld [vmem:[%s4 + $0x3f0] sm:$0xff]
  %v3743 = vld [vmem:[%s4 + $0x3f8] sm:$0xff]
  %v3744 = vld [vmem:[%s4 + $0x400] sm:$0xff]
  %v3745 = vld [vmem:[%s4 + $0x408] sm:$0xff]
  %v3746 = vld [vmem:[%s4 + $0x410] sm:$0xff]
  %v3747 = vld [vmem:[%s4 + $0x418] sm:$0xff]
  %v3748 = vld [vmem:[%s4 + $0x420] sm:$0xff]
  %v3749 = vld [vmem:[%s4 + $0x428] sm:$0xff]
  %v3750 = vld [vmem:[%s4 + $0x430] sm:$0xff]
  %v3751 = vld [vmem:[%s4 + $0x438] sm:$0xff]
  %v3752 = vld [vmem:[%s4 + $0x440] sm:$0xff]
  %v3753 = vld [vmem:[%s4 + $0x448] sm:$0xff]
  %v3754 = vld [vmem:[%s4 + $0x450] sm:$0xff]
  %v3755 = vld [vmem:[%s4 + $0x458] sm:$0xff]
  %v3756 = vld [vmem:[%s4 + $0x460] sm:$0xff]
  %v3757 = vld [vmem:[%s4 + $0x468] sm:$0xff]
  %v3758 = vld [vmem:[%s4 + $0x470] sm:$0xff]
  %v3759 = vld [vmem:[%s4 + $0x478] sm:$0xff]
  %v3760 = vld [vmem:[%s5] sm:$0x3]
  %v3762 = vlaneseq
  %v3763 = vshrl.u32 %v3762, 7
  %v3764 = vsub.s32 0, %v3763
  %v3765 = vrot.slane %v3760, %v3764
  %v3766 = vlaneseq
  %v3767 = vshrl.u32 %v3766, 7
  %v3768 = vsub.s32 1, %v3767
  %v3769 = vrot.slane %v3760, %v3768
  %v3773 = vshrl.u32 %v3124, 16
  %v3775 = vrot.slane %v3773, 3
  %v3776 = vshll.u32 %v3124, 16
  %v3778 = vrot.slane %v3776, 4
  %v3779 = vor.u32 %v3775, %v3778
  %v3780 = vsel %vm1474, %v1482, %v3779
  %v3782 = vshrl.u32 %v3331, 16
  %v3784 = vrot.slane %v3782, 3
  %v3785 = vshll.u32 %v3331, 16
  %v3787 = vrot.slane %v3785, 4
  %v3788 = vor.u32 %v3784, %v3787
  %v3790 = vshrl.u32 %v3340, 16
  %v3792 = vrot.slane %v3790, 3
  %v3793 = vshll.u32 %v3340, 16
  %v3795 = vrot.slane %v3793, 4
  %v3796 = vor.u32 %v3792, %v3795
  %v3797 = vsel %vm1474, %v3788, %v3796
  %v3799 = vshrl.u32 %v3405, 16
  %v3801 = vrot.slane %v3799, 3
  %v3802 = vshll.u32 %v3405, 16
  %v3804 = vrot.slane %v3802, 4
  %v3805 = vor.u32 %v3801, %v3804
  %v3807 = vshrl.u32 %v3407, 16
  %v3809 = vrot.slane %v3807, 3
  %v3810 = vshll.u32 %v3407, 16
  %v3812 = vrot.slane %v3810, 4
  %v3813 = vor.u32 %v3809, %v3812
  %v3814 = vsel %vm1474, %v3805, %v3813
  %v3816 = vshrl.u32 %v3196, 16
  %v3818 = vrot.slane %v3816, 3
  %v3819 = vshll.u32 %v3196, 16
  %v3821 = vrot.slane %v3819, 4
  %v3822 = vor.u32 %v3818, %v3821
  %v3824 = vshrl.u32 %v3197, 16
  %v3826 = vrot.slane %v3824, 3
  %v3827 = vshll.u32 %v3197, 16
  %v3829 = vrot.slane %v3827, 4
  %v3830 = vor.u32 %v3826, %v3829
  %v3831 = vsel %vm1474, %v3822, %v3830
  %v3833 = vshrl.u32 %v3429, 16
  %v3835 = vrot.slane %v3833, 3
  %v3836 = vshll.u32 %v3429, 16
  %v3838 = vrot.slane %v3836, 4
  %v3839 = vor.u32 %v3835, %v3838
  %v3841 = vshrl.u32 %v3438, 16
  %v3843 = vrot.slane %v3841, 3
  %v3844 = vshll.u32 %v3438, 16
  %v3846 = vrot.slane %v3844, 4
  %v3847 = vor.u32 %v3843, %v3846
  %v3848 = vsel %vm1474, %v3839, %v3847
  %v3850 = vshrl.u32 %v3502, 16
  %v3852 = vrot.slane %v3850, 3
  %v3853 = vshll.u32 %v3502, 16
  %v3855 = vrot.slane %v3853, 4
  %v3856 = vor.u32 %v3852, %v3855
  %v3858 = vshrl.u32 %v3504, 16
  %v3860 = vrot.slane %v3858, 3
  %v3861 = vshll.u32 %v3504, 16
  %v3863 = vrot.slane %v3861, 4
  %v3864 = vor.u32 %v3860, %v3863
  %v3865 = vsel %vm1474, %v3856, %v3864
  %v3867 = vshrl.u32 %v3269, 16
  %v3869 = vrot.slane %v3867, 3
  %v3870 = vshll.u32 %v3269, 16
  %v3872 = vrot.slane %v3870, 4
  %v3873 = vor.u32 %v3869, %v3872
  %v3875 = vshrl.u32 %v3270, 16
  %v3877 = vrot.slane %v3875, 3
  %v3878 = vshll.u32 %v3270, 16
  %v3880 = vrot.slane %v3878, 4
  %v3881 = vor.u32 %v3877, %v3880
  %v3882 = vsel %vm1474, %v3873, %v3881
  %v3884 = vshrl.u32 %v3526, 16
  %v3886 = vrot.slane %v3884, 3
  %v3887 = vshll.u32 %v3526, 16
  %v3889 = vrot.slane %v3887, 4
  %v3890 = vor.u32 %v3886, %v3889
  %v3892 = vshrl.u32 %v3535, 16
  %v3894 = vrot.slane %v3892, 3
  %v3895 = vshll.u32 %v3535, 16
  %v3897 = vrot.slane %v3895, 4
  %v3898 = vor.u32 %v3894, %v3897
  %v3899 = vsel %vm1474, %v3890, %v3898
  %v3901 = vshrl.u32 %v3599, 16
  %v3903 = vrot.slane %v3901, 3
  %v3904 = vshll.u32 %v3599, 16
  %v3906 = vrot.slane %v3904, 4
  %v3907 = vor.u32 %v3903, %v3906
  %v3909 = vshrl.u32 %v3601, 16
  %v3911 = vrot.slane %v3909, 3
  %v3912 = vshll.u32 %v3601, 16
  %v3914 = vrot.slane %v3912, 4
  %v3915 = vor.u32 %v3911, %v3914
  %v3916 = vsel %vm1474, %v3907, %v3915
  %v3918 = vshrl.u32 %v3125, 16
  %v3920 = vrot.slane %v3918, 3
  %v3921 = vshll.u32 %v3125, 16
  %v3923 = vrot.slane %v3921, 4
  %v3924 = vor.u32 %v3920, %v3923
  %v3925 = vsel %vm1474, %v3779, %v3924
  %v3927 = vshrl.u32 %v3349, 16
  %v3929 = vrot.slane %v3927, 3
  %v3930 = vshll.u32 %v3349, 16
  %v3932 = vrot.slane %v3930, 4
  %v3933 = vor.u32 %v3929, %v3932
  %v3934 = vsel %vm1474, %v3796, %v3933
  %v3936 = vshrl.u32 %v3409, 16
  %v3938 = vrot.slane %v3936, 3
  %v3939 = vshll.u32 %v3409, 16
  %v3941 = vrot.slane %v3939, 4
  %v3942 = vor.u32 %v3938, %v3941
  %v3943 = vsel %vm1474, %v3813, %v3942
  %v3945 = vshrl.u32 %v3198, 16
  %v3947 = vrot.slane %v3945, 3
  %v3948 = vshll.u32 %v3198, 16
  %v3950 = vrot.slane %v3948, 4
  %v3951 = vor.u32 %v3947, %v3950
  %v3952 = vsel %vm1474, %v3830, %v3951
  %v3954 = vshrl.u32 %v3447, 16
  %v3956 = vrot.slane %v3954, 3
  %v3957 = vshll.u32 %v3447, 16
  %v3959 = vrot.slane %v3957, 4
  %v3960 = vor.u32 %v3956, %v3959
  %v3961 = vsel %vm1474, %v3847, %v3960
  %v3963 = vshrl.u32 %v3506, 16
  %v3965 = vrot.slane %v3963, 3
  %v3966 = vshll.u32 %v3506, 16
  %v3968 = vrot.slane %v3966, 4
  %v3969 = vor.u32 %v3965, %v3968
  %v3970 = vsel %vm1474, %v3864, %v3969
  %v3972 = vshrl.u32 %v3271, 16
  %v3974 = vrot.slane %v3972, 3
  %v3975 = vshll.u32 %v3271, 16
  %v3977 = vrot.slane %v3975, 4
  %v3978 = vor.u32 %v3974, %v3977
  %v3979 = vsel %vm1474, %v3881, %v3978
  %v3981 = vshrl.u32 %v3544, 16
  %v3983 = vrot.slane %v3981, 3
  %v3984 = vshll.u32 %v3544, 16
  %v3986 = vrot.slane %v3984, 4
  %v3987 = vor.u32 %v3983, %v3986
  %v3988 = vsel %vm1474, %v3898, %v3987
  %v3990 = vshrl.u32 %v3603, 16
  %v3992 = vrot.slane %v3990, 3
  %v3993 = vshll.u32 %v3603, 16
  %v3995 = vrot.slane %v3993, 4
  %v3996 = vor.u32 %v3992, %v3995
  %v3997 = vsel %vm1474, %v3915, %v3996
  %v3999 = vshrl.u32 %v3126, 16
  %v4001 = vrot.slane %v3999, 3
  %v4002 = vshll.u32 %v3126, 16
  %v4004 = vrot.slane %v4002, 4
  %v4005 = vor.u32 %v4001, %v4004
  %v4006 = vsel %vm1474, %v3924, %v4005
  %v4008 = vshrl.u32 %v3358, 16
  %v4010 = vrot.slane %v4008, 3
  %v4011 = vshll.u32 %v3358, 16
  %v4013 = vrot.slane %v4011, 4
  %v4014 = vor.u32 %v4010, %v4013
  %v4015 = vsel %vm1474, %v3933, %v4014
  %v4017 = vshrl.u32 %v3411, 16
  %v4019 = vrot.slane %v4017, 3
  %v4020 = vshll.u32 %v3411, 16
  %v4022 = vrot.slane %v4020, 4
  %v4023 = vor.u32 %v4019, %v4022
  %v4024 = vsel %vm1474, %v3942, %v4023
  %v4026 = vshrl.u32 %v3199, 16
  %v4028 = vrot.slane %v4026, 3
  %v4029 = vshll.u32 %v3199, 16
  %v4031 = vrot.slane %v4029, 4
  %v4032 = vor.u32 %v4028, %v4031
  %v4033 = vsel %vm1474, %v3951, %v4032
  %v4035 = vshrl.u32 %v3456, 16
  %v4037 = vrot.slane %v4035, 3
  %v4038 = vshll.u32 %v3456, 16
  %v4040 = vrot.slane %v4038, 4
  %v4041 = vor.u32 %v4037, %v4040
  %v4042 = vsel %vm1474, %v3960, %v4041
  %v4044 = vshrl.u32 %v3508, 16
  %v4046 = vrot.slane %v4044, 3
  %v4047 = vshll.u32 %v3508, 16
  %v4049 = vrot.slane %v4047, 4
  %v4050 = vor.u32 %v4046, %v4049
  %v4051 = vsel %vm1474, %v3969, %v4050
  %v4053 = vshrl.u32 %v3272, 16
  %v4055 = vrot.slane %v4053, 3
  %v4056 = vshll.u32 %v3272, 16
  %v4058 = vrot.slane %v4056, 4
  %v4059 = vor.u32 %v4055, %v4058
  %v4060 = vsel %vm1474, %v3978, %v4059
  %v4062 = vshrl.u32 %v3553, 16
  %v4064 = vrot.slane %v4062, 3
  %v4065 = vshll.u32 %v3553, 16
  %v4067 = vrot.slane %v4065, 4
  %v4068 = vor.u32 %v4064, %v4067
  %v4069 = vsel %vm1474, %v3987, %v4068
  %v4071 = vshrl.u32 %v3605, 16
  %v4073 = vrot.slane %v4071, 3
  %v4074 = vshll.u32 %v3605, 16
  %v4076 = vrot.slane %v4074, 4
  %v4077 = vor.u32 %v4073, %v4076
  %v4078 = vsel %vm1474, %v3996, %v4077
  %v4080 = vshrl.u32 %v3127, 16
  %v4082 = vrot.slane %v4080, 3
  %v4083 = vshll.u32 %v3127, 16
  %v4085 = vrot.slane %v4083, 4
  %v4086 = vor.u32 %v4082, %v4085
  %v4087 = vsel %vm1474, %v4005, %v4086
  %v4089 = vshrl.u32 %v3367, 16
  %v4091 = vrot.slane %v4089, 3
  %v4092 = vshll.u32 %v3367, 16
  %v4094 = vrot.slane %v4092, 4
  %v4095 = vor.u32 %v4091, %v4094
  %v4096 = vsel %vm1474, %v4014, %v4095
  %v4098 = vshrl.u32 %v3413, 16
  %v4100 = vrot.slane %v4098, 3
  %v4101 = vshll.u32 %v3413, 16
  %v4103 = vrot.slane %v4101, 4
  %v4104 = vor.u32 %v4100, %v4103
  %v4105 = vsel %vm1474, %v4023, %v4104
  %v4107 = vshrl.u32 %v3200, 16
  %v4109 = vrot.slane %v4107, 3
  %v4110 = vshll.u32 %v3200, 16
  %v4112 = vrot.slane %v4110, 4
  %v4113 = vor.u32 %v4109, %v4112
  %v4114 = vsel %vm1474, %v4032, %v4113
  %v4116 = vshrl.u32 %v3465, 16
  %v4118 = vrot.slane %v4116, 3
  %v4119 = vshll.u32 %v3465, 16
  %v4121 = vrot.slane %v4119, 4
  %v4122 = vor.u32 %v4118, %v4121
  %v4123 = vsel %vm1474, %v4041, %v4122
  %v4125 = vshrl.u32 %v3510, 16
  %v4127 = vrot.slane %v4125, 3
  %v4128 = vshll.u32 %v3510, 16
  %v4130 = vrot.slane %v4128, 4
  %v4131 = vor.u32 %v4127, %v4130
  %v4132 = vsel %vm1474, %v4050, %v4131
  %v4134 = vshrl.u32 %v3273, 16
  %v4136 = vrot.slane %v4134, 3
  %v4137 = vshll.u32 %v3273, 16
  %v4139 = vrot.slane %v4137, 4
  %v4140 = vor.u32 %v4136, %v4139
  %v4141 = vsel %vm1474, %v4059, %v4140
  %v4143 = vshrl.u32 %v3562, 16
  %v4145 = vrot.slane %v4143, 3
  %v4146 = vshll.u32 %v3562, 16
  %v4148 = vrot.slane %v4146, 4
  %v4149 = vor.u32 %v4145, %v4148
  %v4150 = vsel %vm1474, %v4068, %v4149
  %v4152 = vshrl.u32 %v3607, 16
  %v4154 = vrot.slane %v4152, 3
  %v4155 = vshll.u32 %v3607, 16
  %v4157 = vrot.slane %v4155, 4
  %v4158 = vor.u32 %v4154, %v4157
  %v4159 = vsel %vm1474, %v4077, %v4158
  %v4161 = vshrl.u32 %v3128, 16
  %v4163 = vrot.slane %v4161, 3
  %v4164 = vshll.u32 %v3128, 16
  %v4166 = vrot.slane %v4164, 4
  %v4167 = vor.u32 %v4163, %v4166
  %v4168 = vsel %vm1474, %v4086, %v4167
  %v4170 = vshrl.u32 %v3376, 16
  %v4172 = vrot.slane %v4170, 3
  %v4173 = vshll.u32 %v3376, 16
  %v4175 = vrot.slane %v4173, 4
  %v4176 = vor.u32 %v4172, %v4175
  %v4177 = vsel %vm1474, %v4095, %v4176
  %v4179 = vshrl.u32 %v3415, 16
  %v4181 = vrot.slane %v4179, 3
  %v4182 = vshll.u32 %v3415, 16
  %v4184 = vrot.slane %v4182, 4
  %v4185 = vor.u32 %v4181, %v4184
  %v4186 = vsel %vm1474, %v4104, %v4185
  %v4188 = vshrl.u32 %v3201, 16
  %v4190 = vrot.slane %v4188, 3
  %v4191 = vshll.u32 %v3201, 16
  %v4193 = vrot.slane %v4191, 4
  %v4194 = vor.u32 %v4190, %v4193
  %v4195 = vsel %vm1474, %v4113, %v4194
  %v4197 = vshrl.u32 %v3474, 16
  %v4199 = vrot.slane %v4197, 3
  %v4200 = vshll.u32 %v3474, 16
  %v4202 = vrot.slane %v4200, 4
  %v4203 = vor.u32 %v4199, %v4202
  %v4204 = vsel %vm1474, %v4122, %v4203
  %v4206 = vshrl.u32 %v3512, 16
  %v4208 = vrot.slane %v4206, 3
  %v4209 = vshll.u32 %v3512, 16
  %v4211 = vrot.slane %v4209, 4
  %v4212 = vor.u32 %v4208, %v4211
  %v4213 = vsel %vm1474, %v4131, %v4212
  %v4215 = vshrl.u32 %v3274, 16
  %v4217 = vrot.slane %v4215, 3
  %v4218 = vshll.u32 %v3274, 16
  %v4220 = vrot.slane %v4218, 4
  %v4221 = vor.u32 %v4217, %v4220
  %v4222 = vsel %vm1474, %v4140, %v4221
  %v4224 = vshrl.u32 %v3571, 16
  %v4226 = vrot.slane %v4224, 3
  %v4227 = vshll.u32 %v3571, 16
  %v4229 = vrot.slane %v4227, 4
  %v4230 = vor.u32 %v4226, %v4229
  %v4231 = vsel %vm1474, %v4149, %v4230
  %v4233 = vshrl.u32 %v3609, 16
  %v4235 = vrot.slane %v4233, 3
  %v4236 = vshll.u32 %v3609, 16
  %v4238 = vrot.slane %v4236, 4
  %v4239 = vor.u32 %v4235, %v4238
  %v4240 = vsel %vm1474, %v4158, %v4239
  %v4242 = vshrl.u32 %v3129, 16
  %v4244 = vrot.slane %v4242, 3
  %v4245 = vshll.u32 %v3129, 16
  %v4247 = vrot.slane %v4245, 4
  %v4248 = vor.u32 %v4244, %v4247
  %v4249 = vsel %vm1474, %v4167, %v4248
  %v4251 = vshrl.u32 %v3385, 16
  %v4253 = vrot.slane %v4251, 3
  %v4254 = vshll.u32 %v3385, 16
  %v4256 = vrot.slane %v4254, 4
  %v4257 = vor.u32 %v4253, %v4256
  %v4258 = vsel %vm1474, %v4176, %v4257
  %v4260 = vshrl.u32 %v3417, 16
  %v4262 = vrot.slane %v4260, 3
  %v4263 = vshll.u32 %v3417, 16
  %v4265 = vrot.slane %v4263, 4
  %v4266 = vor.u32 %v4262, %v4265
  %v4267 = vsel %vm1474, %v4185, %v4266
  %v4269 = vshrl.u32 %v3202, 16
  %v4271 = vrot.slane %v4269, 3
  %v4272 = vshll.u32 %v3202, 16
  %v4274 = vrot.slane %v4272, 4
  %v4275 = vor.u32 %v4271, %v4274
  %v4276 = vsel %vm1474, %v4194, %v4275
  %v4278 = vshrl.u32 %v3483, 16
  %v4280 = vrot.slane %v4278, 3
  %v4281 = vshll.u32 %v3483, 16
  %v4283 = vrot.slane %v4281, 4
  %v4284 = vor.u32 %v4280, %v4283
  %v4285 = vsel %vm1474, %v4203, %v4284
  %v4287 = vshrl.u32 %v3514, 16
  %v4289 = vrot.slane %v4287, 3
  %v4290 = vshll.u32 %v3514, 16
  %v4292 = vrot.slane %v4290, 4
  %v4293 = vor.u32 %v4289, %v4292
  %v4294 = vsel %vm1474, %v4212, %v4293
  %v4296 = vshrl.u32 %v3275, 16
  %v4298 = vrot.slane %v4296, 3
  %v4299 = vshll.u32 %v3275, 16
  %v4301 = vrot.slane %v4299, 4
  %v4302 = vor.u32 %v4298, %v4301
  %v4303 = vsel %vm1474, %v4221, %v4302
  %v4305 = vshrl.u32 %v3580, 16
  %v4307 = vrot.slane %v4305, 3
  %v4308 = vshll.u32 %v3580, 16
  %v4310 = vrot.slane %v4308, 4
  %v4311 = vor.u32 %v4307, %v4310
  %v4312 = vsel %vm1474, %v4230, %v4311
  %v4314 = vshrl.u32 %v3611, 16
  %v4316 = vrot.slane %v4314, 3
  %v4317 = vshll.u32 %v3611, 16
  %v4319 = vrot.slane %v4317, 4
  %v4320 = vor.u32 %v4316, %v4319
  %v4321 = vsel %vm1474, %v4239, %v4320
  %v4323 = vshrl.u32 %v3130, 16
  %v4325 = vrot.slane %v4323, 3
  %v4326 = vshll.u32 %v3130, 16
  %v4328 = vrot.slane %v4326, 4
  %v4329 = vor.u32 %v4325, %v4328
  %v4330 = vsel %vm1474, %v4248, %v4329
  %v4332 = vshrl.u32 %v3394, 16
  %v4334 = vrot.slane %v4332, 3
  %v4335 = vshll.u32 %v3394, 16
  %v4337 = vrot.slane %v4335, 4
  %v4338 = vor.u32 %v4334, %v4337
  %v4339 = vsel %vm1474, %v4257, %v4338
  %v4341 = vshrl.u32 %v3419, 16
  %v4343 = vrot.slane %v4341, 3
  %v4344 = vshll.u32 %v3419, 16
  %v4346 = vrot.slane %v4344, 4
  %v4347 = vor.u32 %v4343, %v4346
  %v4348 = vsel %vm1474, %v4266, %v4347
  %v4350 = vshrl.u32 %v3203, 16
  %v4352 = vrot.slane %v4350, 3
  %v4353 = vshll.u32 %v3203, 16
  %v4355 = vrot.slane %v4353, 4
  %v4356 = vor.u32 %v4352, %v4355
  %v4357 = vsel %vm1474, %v4275, %v4356
  %v4359 = vshrl.u32 %v3492, 16
  %v4361 = vrot.slane %v4359, 3
  %v4362 = vshll.u32 %v3492, 16
  %v4364 = vrot.slane %v4362, 4
  %v4365 = vor.u32 %v4361, %v4364
  %v4366 = vsel %vm1474, %v4284, %v4365
  %v4368 = vshrl.u32 %v3516, 16
  %v4370 = vrot.slane %v4368, 3
  %v4371 = vshll.u32 %v3516, 16
  %v4373 = vrot.slane %v4371, 4
  %v4374 = vor.u32 %v4370, %v4373
  %v4375 = vsel %vm1474, %v4293, %v4374
  %v4377 = vshrl.u32 %v3276, 16
  %v4379 = vrot.slane %v4377, 3
  %v4380 = vshll.u32 %v3276, 16
  %v4382 = vrot.slane %v4380, 4
  %v4383 = vor.u32 %v4379, %v4382
  %v4384 = vsel %vm1474, %v4302, %v4383
  %v4386 = vshrl.u32 %v3589, 16
  %v4388 = vrot.slane %v4386, 3
  %v4389 = vshll.u32 %v3589, 16
  %v4391 = vrot.slane %v4389, 4
  %v4392 = vor.u32 %v4388, %v4391
  %v4393 = vsel %vm1474, %v4311, %v4392
  %v4395 = vshrl.u32 %v3613, 16
  %v4397 = vrot.slane %v4395, 3
  %v4398 = vshll.u32 %v3613, 16
  %v4400 = vrot.slane %v4398, 4
  %v4401 = vor.u32 %v4397, %v4400
  %v4402 = vsel %vm1474, %v4320, %v4401
  %v4404 = vshrl.u32 %v3131, 16
  %v4406 = vrot.slane %v4404, 3
  %v4407 = vshll.u32 %v3131, 16
  %v4409 = vrot.slane %v4407, 4
  %v4410 = vor.u32 %v4406, %v4409
  %v4411 = vsel %vm1474, %v4329, %v4410
  %v4413 = vshrl.u32 %v3393, 16
  %v4415 = vrot.slane %v4413, 3
  %v4416 = vshll.u32 %v3393, 16
  %v4418 = vrot.slane %v4416, 4
  %v4419 = vor.u32 %v4415, %v4418
  %v4420 = vsel %vm1474, %v4338, %v4419
  %v4422 = vshrl.u32 %v3421, 16
  %v4424 = vrot.slane %v4422, 3
  %v4425 = vshll.u32 %v3421, 16
  %v4427 = vrot.slane %v4425, 4
  %v4428 = vor.u32 %v4424, %v4427
  %v4429 = vsel %vm1474, %v4347, %v4428
  %v4431 = vshrl.u32 %v3204, 16
  %v4433 = vrot.slane %v4431, 3
  %v4434 = vshll.u32 %v3204, 16
  %v4436 = vrot.slane %v4434, 4
  %v4437 = vor.u32 %v4433, %v4436
  %v4438 = vsel %vm1474, %v4356, %v4437
  %v4440 = vshrl.u32 %v3491, 16
  %v4442 = vrot.slane %v4440, 3
  %v4443 = vshll.u32 %v3491, 16
  %v4445 = vrot.slane %v4443, 4
  %v4446 = vor.u32 %v4442, %v4445
  %v4447 = vsel %vm1474, %v4365, %v4446
  %v4449 = vshrl.u32 %v3518, 16
  %v4451 = vrot.slane %v4449, 3
  %v4452 = vshll.u32 %v3518, 16
  %v4454 = vrot.slane %v4452, 4
  %v4455 = vor.u32 %v4451, %v4454
  %v4456 = vsel %vm1474, %v4374, %v4455
  %v4457 = vsel %vm1474, %v4383, %v2544
  %v4459 = vshrl.u32 %v3588, 16
  %v4461 = vrot.slane %v4459, 3
  %v4462 = vshll.u32 %v3588, 16
  %v4464 = vrot.slane %v4462, 4
  %v4465 = vor.u32 %v4461, %v4464
  %v4466 = vsel %vm1474, %v4392, %v4465
  %v4468 = vshrl.u32 %v3615, 16
  %v4470 = vrot.slane %v4468, 3
  %v4471 = vshll.u32 %v3615, 16
  %v4473 = vrot.slane %v4471, 4
  %v4474 = vor.u32 %v4470, %v4473
  %v4475 = vsel %vm1474, %v4401, %v4474
  %v4692 = vunpack.c.l.b16 %v3616
  %v4693 = vunpack.c.h.b16 %v3616
  %v4694 = vunpack.c.l.b16 %v3617
  %v4695 = vunpack.c.h.b16 %v3617
  %v4696 = vunpack.c.l.b16 %v3618
  %v4697 = vunpack.c.h.b16 %v3618
  %v4698 = vunpack.c.l.b16 %v3619
  %v4699 = vunpack.c.h.b16 %v3619
  %v4700 = vunpack.c.l.b16 %v3620
  %v4701 = vunpack.c.h.b16 %v3620
  %v4702 = vunpack.c.l.b16 %v3621
  %v4703 = vunpack.c.h.b16 %v3621
  %v4704 = vunpack.c.l.b16 %v3622
  %v4705 = vunpack.c.h.b16 %v3622
  %v4706 = vunpack.c.l.b16 %v3623
  %v4707 = vunpack.c.h.b16 %v3623
  %v4708 = vunpack.c.l.b16 %v3624
  %v4709 = vunpack.c.h.b16 %v3624
  %v4710 = vunpack.c.l.b16 %v3625
  %v4711 = vunpack.c.h.b16 %v3625
  %v4712 = vunpack.c.l.b16 %v3626
  %v4713 = vunpack.c.h.b16 %v3626
  %v4714 = vunpack.c.l.b16 %v3627
  %v4715 = vunpack.c.h.b16 %v3627
  %v4716 = vunpack.c.l.b16 %v3628
  %v4717 = vunpack.c.h.b16 %v3628
  %v4718 = vunpack.c.l.b16 %v3629
  %v4719 = vunpack.c.h.b16 %v3629
  %v4720 = vunpack.c.l.b16 %v3630
  %v4721 = vunpack.c.h.b16 %v3630
  %v4722 = vunpack.c.l.b16 %v3631
  %v4723 = vunpack.c.h.b16 %v3631
  %v4724 = vunpack.c.l.b16 %v3632
  %v4725 = vunpack.c.h.b16 %v3632
  %v4726 = vunpack.c.l.b16 %v3633
  %v4727 = vunpack.c.h.b16 %v3633
  %v4728 = vunpack.c.l.b16 %v3634
  %v4729 = vunpack.c.h.b16 %v3634
  %v4730 = vunpack.c.l.b16 %v3635
  %v4731 = vunpack.c.h.b16 %v3635
  %v4732 = vunpack.c.l.b16 %v3636
  %v4733 = vunpack.c.h.b16 %v3636
  %v4734 = vunpack.c.l.b16 %v3637
  %v4735 = vunpack.c.h.b16 %v3637
  %v4736 = vunpack.c.l.b16 %v3638
  %v4737 = vunpack.c.h.b16 %v3638
  %v4738 = vunpack.c.l.b16 %v3639
  %v4739 = vunpack.c.h.b16 %v3639
  %v4740 = vunpack.c.l.b16 %v3640
  %v4741 = vunpack.c.h.b16 %v3640
  %v4742 = vunpack.c.l.b16 %v3641
  %v4743 = vunpack.c.h.b16 %v3641
  %v4744 = vunpack.c.l.b16 %v3642
  %v4745 = vunpack.c.h.b16 %v3642
  %v4746 = vunpack.c.l.b16 %v3643
  %v4747 = vunpack.c.h.b16 %v3643
  %v4748 = vunpack.c.l.b16 %v3644
  %v4749 = vunpack.c.h.b16 %v3644
  %v4750 = vunpack.c.l.b16 %v3645
  %v4751 = vunpack.c.h.b16 %v3645
  %v4752 = vunpack.c.l.b16 %v3646
  %v4753 = vunpack.c.h.b16 %v3646
  %v4754 = vunpack.c.l.b16 %v3647
  %v4755 = vunpack.c.h.b16 %v3647
  %v4756 = vunpack.c.l.b16 %v3648
  %v4757 = vunpack.c.h.b16 %v3648
  %v4758 = vunpack.c.l.b16 %v3649
  %v4759 = vunpack.c.h.b16 %v3649
  %v4760 = vunpack.c.l.b16 %v3650
  %v4761 = vunpack.c.h.b16 %v3650
  %v4762 = vunpack.c.l.b16 %v3651
  %v4763 = vunpack.c.h.b16 %v3651
  %v4764 = vunpack.c.l.b16 %v3652
  %v4765 = vunpack.c.h.b16 %v3652
  %v4766 = vunpack.c.l.b16 %v3653
  %v4767 = vunpack.c.h.b16 %v3653
  %v4768 = vunpack.c.l.b16 %v3654
  %v4769 = vunpack.c.h.b16 %v3654
  %v4770 = vunpack.c.l.b16 %v3655
  %v4771 = vunpack.c.h.b16 %v3655
  %v4772 = vunpack.c.l.b16 %v3656
  %v4773 = vunpack.c.h.b16 %v3656
  %v4774 = vunpack.c.l.b16 %v3657
  %v4775 = vunpack.c.h.b16 %v3657
  %v4776 = vunpack.c.l.b16 %v3658
  %v4777 = vunpack.c.h.b16 %v3658
  %v4778 = vunpack.c.l.b16 %v3659
  %v4779 = vunpack.c.h.b16 %v3659
  %v4780 = vunpack.c.l.b16 %v3660
  %v4781 = vunpack.c.h.b16 %v3660
  %v4782 = vunpack.c.l.b16 %v3661
  %v4783 = vunpack.c.h.b16 %v3661
  %v4784 = vunpack.c.l.b16 %v3662
  %v4785 = vunpack.c.h.b16 %v3662
  %v4786 = vunpack.c.l.b16 %v3663
  %v4787 = vunpack.c.h.b16 %v3663
  %v4788 = vunpack.c.l.b16 %v3664
  %v4789 = vunpack.c.h.b16 %v3664
  %v4790 = vunpack.c.l.b16 %v3665
  %v4791 = vunpack.c.h.b16 %v3665
  %v4792 = vunpack.c.l.b16 %v3666
  %v4793 = vunpack.c.h.b16 %v3666
  %v4794 = vunpack.c.l.b16 %v3667
  %v4795 = vunpack.c.h.b16 %v3667
  %v4796 = vunpack.c.l.b16 %v3668
  %v4797 = vunpack.c.h.b16 %v3668
  %v4798 = vunpack.c.l.b16 %v3669
  %v4799 = vunpack.c.h.b16 %v3669
  %v4800 = vunpack.c.l.b16 %v3670
  %v4801 = vunpack.c.h.b16 %v3670
  %v4802 = vunpack.c.l.b16 %v3671
  %v4803 = vunpack.c.h.b16 %v3671
  %v4804 = vunpack.c.l.b16 %v3672
  %v4805 = vunpack.c.h.b16 %v3672
  %v4806 = vunpack.c.l.b16 %v3673
  %v4807 = vunpack.c.h.b16 %v3673
  %v4808 = vunpack.c.l.b16 %v3674
  %v4809 = vunpack.c.h.b16 %v3674
  %v4810 = vunpack.c.l.b16 %v3675
  %v4811 = vunpack.c.h.b16 %v3675
  %v4812 = vunpack.c.l.b16 %v3676
  %v4813 = vunpack.c.h.b16 %v3676
  %v4814 = vunpack.c.l.b16 %v3677
  %v4815 = vunpack.c.h.b16 %v3677
  %v4816 = vunpack.c.l.b16 %v3678
  %v4817 = vunpack.c.h.b16 %v3678
  %v4818 = vunpack.c.l.b16 %v3679
  %v4819 = vunpack.c.h.b16 %v3679
  %v4820 = vunpack.c.l.b16 %v3680
  %v4821 = vunpack.c.h.b16 %v3680
  %v4822 = vunpack.c.l.b16 %v3681
  %v4823 = vunpack.c.h.b16 %v3681
  %v4824 = vunpack.c.l.b16 %v3682
  %v4825 = vunpack.c.h.b16 %v3682
  %v4826 = vunpack.c.l.b16 %v3683
  %v4827 = vunpack.c.h.b16 %v3683
  %v4828 = vunpack.c.l.b16 %v3684
  %v4829 = vunpack.c.h.b16 %v3684
  %v4830 = vunpack.c.l.b16 %v3685
  %v4831 = vunpack.c.h.b16 %v3685
  %v4832 = vunpack.c.l.b16 %v3686
  %v4833 = vunpack.c.h.b16 %v3686
  %v4834 = vunpack.c.l.b16 %v3687
  %v4835 = vunpack.c.h.b16 %v3687
  %v4836 = vunpack.c.l.b16 %v3688
  %v4837 = vunpack.c.h.b16 %v3688
  %v4838 = vunpack.c.l.b16 %v3689
  %v4839 = vunpack.c.h.b16 %v3689
  %v4840 = vunpack.c.l.b16 %v3690
  %v4841 = vunpack.c.h.b16 %v3690
  %v4842 = vunpack.c.l.b16 %v3691
  %v4843 = vunpack.c.h.b16 %v3691
  %v4844 = vunpack.c.l.b16 %v3692
  %v4845 = vunpack.c.h.b16 %v3692
  %v4846 = vunpack.c.l.b16 %v3693
  %v4847 = vunpack.c.h.b16 %v3693
  %v4848 = vunpack.c.l.b16 %v3694
  %v4849 = vunpack.c.h.b16 %v3694
  %v4850 = vunpack.c.l.b16 %v3695
  %v4851 = vunpack.c.h.b16 %v3695
  %v4852 = vunpack.c.l.b16 %v3696
  %v4853 = vunpack.c.h.b16 %v3696
  %v4854 = vunpack.c.l.b16 %v3697
  %v4855 = vunpack.c.h.b16 %v3697
  %v4856 = vunpack.c.l.b16 %v3698
  %v4857 = vunpack.c.h.b16 %v3698
  %v4858 = vunpack.c.l.b16 %v3699
  %v4859 = vunpack.c.h.b16 %v3699
  %v4860 = vunpack.c.l.b16 %v3700
  %v4861 = vunpack.c.h.b16 %v3700
  %v4862 = vunpack.c.l.b16 %v3701
  %v4863 = vunpack.c.h.b16 %v3701
  %v4864 = vunpack.c.l.b16 %v3702
  %v4865 = vunpack.c.h.b16 %v3702
  %v4866 = vunpack.c.l.b16 %v3703
  %v4867 = vunpack.c.h.b16 %v3703
  %v4868 = vunpack.c.l.b16 %v3704
  %v4869 = vunpack.c.h.b16 %v3704
  %v4870 = vunpack.c.l.b16 %v3705
  %v4871 = vunpack.c.h.b16 %v3705
  %v4872 = vunpack.c.l.b16 %v3706
  %v4873 = vunpack.c.h.b16 %v3706
  %v4874 = vunpack.c.l.b16 %v3707
  %v4875 = vunpack.c.h.b16 %v3707
  %v4876 = vunpack.c.l.b16 %v3708
  %v4877 = vunpack.c.h.b16 %v3708
  %v4878 = vunpack.c.l.b16 %v3709
  %v4879 = vunpack.c.h.b16 %v3709
  %v4880 = vunpack.c.l.b16 %v3710
  %v4881 = vunpack.c.h.b16 %v3710
  %v4882 = vunpack.c.l.b16 %v3711
  %v4883 = vunpack.c.h.b16 %v3711
  %v4884 = vunpack.c.l.b16 %v3712
  %v4885 = vunpack.c.h.b16 %v3712
  %v4886 = vunpack.c.l.b16 %v3713
  %v4887 = vunpack.c.h.b16 %v3713
  %v4888 = vunpack.c.l.b16 %v3714
  %v4889 = vunpack.c.h.b16 %v3714
  %v4890 = vunpack.c.l.b16 %v3715
  %v4891 = vunpack.c.h.b16 %v3715
  %v4892 = vunpack.c.l.b16 %v3716
  %v4893 = vunpack.c.h.b16 %v3716
  %v4894 = vunpack.c.l.b16 %v3717
  %v4895 = vunpack.c.h.b16 %v3717
  %v4896 = vunpack.c.l.b16 %v3718
  %v4897 = vunpack.c.h.b16 %v3718
  %v4898 = vunpack.c.l.b16 %v3719
  %v4899 = vunpack.c.h.b16 %v3719
  %v4900 = vunpack.c.l.b16 %v3720
  %v4901 = vunpack.c.h.b16 %v3720
  %v4902 = vunpack.c.l.b16 %v3721
  %v4903 = vunpack.c.h.b16 %v3721
  %v4904 = vunpack.c.l.b16 %v3722
  %v4905 = vunpack.c.h.b16 %v3722
  %v4906 = vunpack.c.l.b16 %v3723
  %v4907 = vunpack.c.h.b16 %v3723
  %v4908 = vunpack.c.l.b16 %v3724
  %v4909 = vunpack.c.h.b16 %v3724
  %v4910 = vunpack.c.l.b16 %v3725
  %v4911 = vunpack.c.h.b16 %v3725
  %v4912 = vunpack.c.l.b16 %v3726
  %v4913 = vunpack.c.h.b16 %v3726
  %v4914 = vunpack.c.l.b16 %v3727
  %v4915 = vunpack.c.h.b16 %v3727
  %v4916 = vunpack.c.l.b16 %v3728
  %v4917 = vunpack.c.h.b16 %v3728
  %v4918 = vunpack.c.l.b16 %v3729
  %v4919 = vunpack.c.h.b16 %v3729
  %v4920 = vunpack.c.l.b16 %v3730
  %v4921 = vunpack.c.h.b16 %v3730
  %v4922 = vunpack.c.l.b16 %v3731
  %v4923 = vunpack.c.h.b16 %v3731
  %v4924 = vunpack.c.l.b16 %v3732
  %v4925 = vunpack.c.h.b16 %v3732
  %v4926 = vunpack.c.l.b16 %v3733
  %v4927 = vunpack.c.h.b16 %v3733
  %v4928 = vunpack.c.l.b16 %v3734
  %v4929 = vunpack.c.h.b16 %v3734
  %v4930 = vunpack.c.l.b16 %v3735
  %v4931 = vunpack.c.h.b16 %v3735
  %v4932 = vunpack.c.l.b16 %v3736
  %v4933 = vunpack.c.h.b16 %v3736
  %v4934 = vunpack.c.l.b16 %v3737
  %v4935 = vunpack.c.h.b16 %v3737
  %v4936 = vunpack.c.l.b16 %v3738
  %v4937 = vunpack.c.h.b16 %v3738
  %v4938 = vunpack.c.l.b16 %v3739
  %v4939 = vunpack.c.h.b16 %v3739
  %v4940 = vunpack.c.l.b16 %v3740
  %v4941 = vunpack.c.h.b16 %v3740
  %v4942 = vunpack.c.l.b16 %v3741
  %v4943 = vunpack.c.h.b16 %v3741
  %v4944 = vunpack.c.l.b16 %v3742
  %v4945 = vunpack.c.h.b16 %v3742
  %v4946 = vunpack.c.l.b16 %v3743
  %v4947 = vunpack.c.h.b16 %v3743
  %v4948 = vunpack.c.l.b16 %v3744
  %v4949 = vunpack.c.h.b16 %v3744
  %v4950 = vunpack.c.l.b16 %v3745
  %v4951 = vunpack.c.h.b16 %v3745
  %v4952 = vunpack.c.l.b16 %v3746
  %v4953 = vunpack.c.h.b16 %v3746
  %v4954 = vunpack.c.l.b16 %v3747
  %v4955 = vunpack.c.h.b16 %v3747
  %v4956 = vunpack.c.l.b16 %v3748
  %v4957 = vunpack.c.h.b16 %v3748
  %v4958 = vunpack.c.l.b16 %v3749
  %v4959 = vunpack.c.h.b16 %v3749
  %v4960 = vunpack.c.l.b16 %v3750
  %v4961 = vunpack.c.h.b16 %v3750
  %v4962 = vunpack.c.l.b16 %v3751
  %v4963 = vunpack.c.h.b16 %v3751
  %v4964 = vunpack.c.l.b16 %v3752
  %v4965 = vunpack.c.h.b16 %v3752
  %v4966 = vunpack.c.l.b16 %v3753
  %v4967 = vunpack.c.h.b16 %v3753
  %v4968 = vunpack.c.l.b16 %v3754
  %v4969 = vunpack.c.h.b16 %v3754
  %v4970 = vunpack.c.l.b16 %v3755
  %v4971 = vunpack.c.h.b16 %v3755
  %v4972 = vunpack.c.l.b16 %v3756
  %v4973 = vunpack.c.h.b16 %v3756
  %v4974 = vunpack.c.l.b16 %v3757
  %v4975 = vunpack.c.h.b16 %v3757
  %v4976 = vunpack.c.l.b16 %v3758
  %v4977 = vunpack.c.h.b16 %v3758
  %v4978 = vunpack.c.l.b16 %v3759
  %v4979 = vunpack.c.h.b16 %v3759
  %v4980 = vpack.c.b16 %v4694, %v4692
  %v4981 = vpack.c.b16 %v4695, %v4693
  %v4982 = vpack.c.b16 %v4698, %v4696
  %v4983 = vpack.c.b16 %v4699, %v4697
  %v4984 = vpack.c.b16 %v4702, %v4700
  %v4985 = vpack.c.b16 %v4703, %v4701
  %v4986 = vpack.c.b16 %v4706, %v4704
  %v4987 = vpack.c.b16 %v4707, %v4705
  %v4988 = vpack.c.b16 %v4710, %v4708
  %v4989 = vpack.c.b16 %v4711, %v4709
  %v4990 = vpack.c.b16 %v4714, %v4712
  %v4991 = vpack.c.b16 %v4715, %v4713
  %v4992 = vpack.c.b16 %v4718, %v4716
  %v4993 = vpack.c.b16 %v4719, %v4717
  %v4994 = vpack.c.b16 %v4722, %v4720
  %v4995 = vpack.c.b16 %v4723, %v4721
  %v4996 = vpack.c.b16 %v4726, %v4724
  %v4997 = vpack.c.b16 %v4727, %v4725
  %v4998 = vpack.c.b16 %v4730, %v4728
  %v4999 = vpack.c.b16 %v4731, %v4729
  %v5000 = vpack.c.b16 %v4734, %v4732
  %v5001 = vpack.c.b16 %v4735, %v4733
  %v5002 = vpack.c.b16 %v4738, %v4736
  %v5003 = vpack.c.b16 %v4739, %v4737
  %v5004 = vpack.c.b16 %v4742, %v4740
  %v5005 = vpack.c.b16 %v4743, %v4741
  %v5006 = vpack.c.b16 %v4746, %v4744
  %v5007 = vpack.c.b16 %v4747, %v4745
  %v5008 = vpack.c.b16 %v4750, %v4748
  %v5009 = vpack.c.b16 %v4751, %v4749
  %v5010 = vpack.c.b16 %v4754, %v4752
  %v5011 = vpack.c.b16 %v4755, %v4753
  %v5012 = vpack.c.b16 %v4758, %v4756
  %v5013 = vpack.c.b16 %v4759, %v4757
  %v5014 = vpack.c.b16 %v4762, %v4760
  %v5015 = vpack.c.b16 %v4763, %v4761
  %v5016 = vpack.c.b16 %v4766, %v4764
  %v5017 = vpack.c.b16 %v4767, %v4765
  %v5018 = vpack.c.b16 %v4770, %v4768
  %v5019 = vpack.c.b16 %v4771, %v4769
  %v5020 = vpack.c.b16 %v4774, %v4772
  %v5021 = vpack.c.b16 %v4775, %v4773
  %v5022 = vpack.c.b16 %v4778, %v4776
  %v5023 = vpack.c.b16 %v4779, %v4777
  %v5024 = vpack.c.b16 %v4782, %v4780
  %v5025 = vpack.c.b16 %v4783, %v4781
  %v5026 = vpack.c.b16 %v4786, %v4784
  %v5027 = vpack.c.b16 %v4787, %v4785
  %v5028 = vpack.c.b16 %v4790, %v4788
  %v5029 = vpack.c.b16 %v4791, %v4789
  %v5030 = vpack.c.b16 %v4794, %v4792
  %v5031 = vpack.c.b16 %v4795, %v4793
  %v5032 = vpack.c.b16 %v4798, %v4796
  %v5033 = vpack.c.b16 %v4799, %v4797
  %v5034 = vpack.c.b16 %v4802, %v4800
  %v5035 = vpack.c.b16 %v4803, %v4801
  %v5036 = vpack.c.b16 %v4806, %v4804
  %v5037 = vpack.c.b16 %v4807, %v4805
  %v5038 = vpack.c.b16 %v4810, %v4808
  %v5039 = vpack.c.b16 %v4811, %v4809
  %v5040 = vpack.c.b16 %v4814, %v4812
  %v5041 = vpack.c.b16 %v4815, %v4813
  %v5042 = vpack.c.b16 %v4818, %v4816
  %v5043 = vpack.c.b16 %v4819, %v4817
  %v5044 = vpack.c.b16 %v4822, %v4820
  %v5045 = vpack.c.b16 %v4823, %v4821
  %v5046 = vpack.c.b16 %v4826, %v4824
  %v5047 = vpack.c.b16 %v4827, %v4825
  %v5048 = vpack.c.b16 %v4830, %v4828
  %v5049 = vpack.c.b16 %v4831, %v4829
  %v5050 = vpack.c.b16 %v4834, %v4832
  %v5051 = vpack.c.b16 %v4835, %v4833
  %v5052 = vpack.c.b16 %v4838, %v4836
  %v5053 = vpack.c.b16 %v4839, %v4837
  %v5054 = vpack.c.b16 %v4842, %v4840
  %v5055 = vpack.c.b16 %v4843, %v4841
  %v5056 = vpack.c.b16 %v4846, %v4844
  %v5057 = vpack.c.b16 %v4847, %v4845
  %v5058 = vpack.c.b16 %v4850, %v4848
  %v5059 = vpack.c.b16 %v4851, %v4849
  %v5060 = vpack.c.b16 %v4854, %v4852
  %v5061 = vpack.c.b16 %v4855, %v4853
  %v5062 = vpack.c.b16 %v4858, %v4856
  %v5063 = vpack.c.b16 %v4859, %v4857
  %v5064 = vpack.c.b16 %v4862, %v4860
  %v5065 = vpack.c.b16 %v4863, %v4861
  %v5066 = vpack.c.b16 %v4866, %v4864
  %v5067 = vpack.c.b16 %v4867, %v4865
  %v5068 = vpack.c.b16 %v4870, %v4868
  %v5069 = vpack.c.b16 %v4871, %v4869
  %v5070 = vpack.c.b16 %v4874, %v4872
  %v5071 = vpack.c.b16 %v4875, %v4873
  %v5072 = vpack.c.b16 %v4878, %v4876
  %v5073 = vpack.c.b16 %v4879, %v4877
  %v5074 = vpack.c.b16 %v4882, %v4880
  %v5075 = vpack.c.b16 %v4883, %v4881
  %v5076 = vpack.c.b16 %v4886, %v4884
  %v5077 = vpack.c.b16 %v4887, %v4885
  %v5078 = vpack.c.b16 %v4890, %v4888
  %v5079 = vpack.c.b16 %v4891, %v4889
  %v5080 = vpack.c.b16 %v4894, %v4892
  %v5081 = vpack.c.b16 %v4895, %v4893
  %v5082 = vpack.c.b16 %v4898, %v4896
  %v5083 = vpack.c.b16 %v4899, %v4897
  %v5084 = vpack.c.b16 %v4902, %v4900
  %v5085 = vpack.c.b16 %v4903, %v4901
  %v5086 = vpack.c.b16 %v4906, %v4904
  %v5087 = vpack.c.b16 %v4907, %v4905
  %v5088 = vpack.c.b16 %v4910, %v4908
  %v5089 = vpack.c.b16 %v4911, %v4909
  %v5090 = vpack.c.b16 %v4914, %v4912
  %v5091 = vpack.c.b16 %v4915, %v4913
  %v5092 = vpack.c.b16 %v4918, %v4916
  %v5093 = vpack.c.b16 %v4919, %v4917
  %v5094 = vpack.c.b16 %v4922, %v4920
  %v5095 = vpack.c.b16 %v4923, %v4921
  %v5096 = vpack.c.b16 %v4926, %v4924
  %v5097 = vpack.c.b16 %v4927, %v4925
  %v5098 = vpack.c.b16 %v4930, %v4928
  %v5099 = vpack.c.b16 %v4931, %v4929
  %v5100 = vpack.c.b16 %v4934, %v4932
  %v5101 = vpack.c.b16 %v4935, %v4933
  %v5102 = vpack.c.b16 %v4938, %v4936
  %v5103 = vpack.c.b16 %v4939, %v4937
  %v5104 = vpack.c.b16 %v4942, %v4940
  %v5105 = vpack.c.b16 %v4943, %v4941
  %v5106 = vpack.c.b16 %v4946, %v4944
  %v5107 = vpack.c.b16 %v4947, %v4945
  %v5108 = vpack.c.b16 %v4950, %v4948
  %v5109 = vpack.c.b16 %v4951, %v4949
  %v5110 = vpack.c.b16 %v4954, %v4952
  %v5111 = vpack.c.b16 %v4955, %v4953
  %v5112 = vpack.c.b16 %v4958, %v4956
  %v5113 = vpack.c.b16 %v4959, %v4957
  %v5114 = vpack.c.b16 %v4962, %v4960
  %v5115 = vpack.c.b16 %v4963, %v4961
  %v5116 = vpack.c.b16 %v4966, %v4964
  %v5117 = vpack.c.b16 %v4967, %v4965
  %v5118 = vpack.c.b16 %v4970, %v4968
  %v5119 = vpack.c.b16 %v4971, %v4969
  %v5120 = vpack.c.b16 %v4974, %v4972
  %v5121 = vpack.c.b16 %v4975, %v4973
  %v5122 = vpack.c.b16 %v4978, %v4976
  %v5123 = vpack.c.b16 %v4979, %v4977
  %5268 = vmatprep.subr.bf16.mxu0 %v4995
  %5269 = vmatpush1.bf16.msra.mxu0 %v4994
  %5270 = vmatprep.subr.bf16.mxu0 %v4993
  %5271 = vmatpush1.bf16.msra.mxu0 %v4992
  %5272 = vmatprep.subr.bf16.mxu0 %v4991
  %5273 = vmatpush1.bf16.msra.mxu0 %v4990
  %5274 = vmatprep.subr.bf16.mxu0 %v4989
  %5275 = vmatpush1.bf16.msra.mxu0 %v4988
  %5276 = vmatprep.subr.bf16.mxu0 %v4987
  %5277 = vmatpush1.bf16.msra.mxu0 %v4986
  %5278 = vmatprep.subr.bf16.mxu0 %v4985
  %5279 = vmatpush1.bf16.msra.mxu0 %v4984
  %5280 = vmatprep.subr.bf16.mxu0 %v4983
  %5281 = vmatpush1.bf16.msra.mxu0 %v4982
  %5282 = vmatprep.subr.bf16.mxu0 %v4981
  %5283 = vmatpush1.bf16.msra.mxu0 %v4980
  %5284 = vmatprep.subr.bf16.mxu0 %v5011
  %5285 = vmatpush2.bf16.msra.mxu0 %v5010
  %5286 = vmatprep.subr.bf16.mxu0 %v5009
  %5287 = vmatpush2.bf16.msra.mxu0 %v5008
  %5288 = vmatprep.subr.bf16.mxu0 %v5007
  %5289 = vmatpush2.bf16.msra.mxu0 %v5006
  %5290 = vmatprep.subr.bf16.mxu0 %v5005
  %5291 = vmatpush2.bf16.msra.mxu0 %v5004
  %5292 = vmatprep.subr.bf16.mxu0 %v5003
  %5293 = vmatpush2.bf16.msra.mxu0 %v5002
  %5294 = vmatprep.subr.bf16.mxu0 %v5001
  %5295 = vmatpush2.bf16.msra.mxu0 %v5000
  %5296 = vmatprep.subr.bf16.mxu0 %v4999
  %5297 = vmatpush2.bf16.msra.mxu0 %v4998
  %5298 = vmatprep.subr.bf16.mxu0 %v4997
  %5299 = vmatpush2.bf16.msra.mxu0 %v4996
  %5300 = vmatprep.mubr.bf16.mxu0 %v3797
  %5301 = vmatmul.mubr.bf16.gmra.mxu0 %v3780
  %v5302 = vpop.f32.mrf.mxu0
  %v5303 = vadd.f32 %v3765, %v5302
  %v5304 = vpop.f32.mrf.mxu0
  %v5305 = vadd.f32 %v3769, %v5304
  %v5306 = vpop.f32.mrf.mxu0
  %v5307 = vadd.f32 %v3765, %v5306
  %v5308 = vpop.f32.mrf.mxu0
  %v5309 = vadd.f32 %v3769, %v5308
  %5310 = vmatprep.mubr.bf16.mxu0 %v3934
  %5311 = vmatmul.mubr.bf16.gmra.mxu0 %v3925
  %v5312 = vpop.f32.mrf.mxu0
  %v5313 = vadd.f32 %v3765, %v5312
  %v5314 = vpop.f32.mrf.mxu0
  %v5315 = vadd.f32 %v3769, %v5314
  %v5316 = vpop.f32.mrf.mxu0
  %v5317 = vadd.f32 %v3765, %v5316
  %v5318 = vpop.f32.mrf.mxu0
  %v5319 = vadd.f32 %v3769, %v5318
  %5320 = vmatprep.mubr.bf16.mxu0 %v4015
  %5321 = vmatmul.mubr.bf16.gmra.mxu0 %v4006
  %v5322 = vpop.f32.mrf.mxu0
  %v5323 = vadd.f32 %v3765, %v5322
  %v5324 = vpop.f32.mrf.mxu0
  %v5325 = vadd.f32 %v3769, %v5324
  %v5326 = vpop.f32.mrf.mxu0
  %v5327 = vadd.f32 %v3765, %v5326
  %v5328 = vpop.f32.mrf.mxu0
  %v5329 = vadd.f32 %v3769, %v5328
  %5330 = vmatprep.mubr.bf16.mxu0 %v4096
  %5331 = vmatmul.mubr.bf16.gmra.mxu0 %v4087
  %v5332 = vpop.f32.mrf.mxu0
  %v5333 = vadd.f32 %v3765, %v5332
  %v5334 = vpop.f32.mrf.mxu0
  %v5335 = vadd.f32 %v3769, %v5334
  %v5336 = vpop.f32.mrf.mxu0
  %v5337 = vadd.f32 %v3765, %v5336
  %v5338 = vpop.f32.mrf.mxu0
  %v5339 = vadd.f32 %v3769, %v5338
  %5340 = vmatprep.mubr.bf16.mxu0 %v4177
  %5341 = vmatmul.mubr.bf16.gmra.mxu0 %v4168
  %v5342 = vpop.f32.mrf.mxu0
  %v5343 = vadd.f32 %v3765, %v5342
  %v5344 = vpop.f32.mrf.mxu0
  %v5345 = vadd.f32 %v3769, %v5344
  %v5346 = vpop.f32.mrf.mxu0
  %v5347 = vadd.f32 %v3765, %v5346
  %v5348 = vpop.f32.mrf.mxu0
  %v5349 = vadd.f32 %v3769, %v5348
  %5350 = vmatprep.mubr.bf16.mxu0 %v4258
  %5351 = vmatmul.mubr.bf16.gmra.mxu0 %v4249
  %v5352 = vpop.f32.mrf.mxu0
  %v5353 = vadd.f32 %v3765, %v5352
  %v5354 = vpop.f32.mrf.mxu0
  %v5355 = vadd.f32 %v3769, %v5354
  %v5356 = vpop.f32.mrf.mxu0
  %v5357 = vadd.f32 %v3765, %v5356
  %v5358 = vpop.f32.mrf.mxu0
  %v5359 = vadd.f32 %v3769, %v5358
  %5360 = vmatprep.mubr.bf16.mxu0 %v4339
  %5361 = vmatmul.mubr.bf16.gmra.mxu0 %v4330
  %v5362 = vpop.f32.mrf.mxu0
  %v5363 = vadd.f32 %v3765, %v5362
  %v5364 = vpop.f32.mrf.mxu0
  %v5365 = vadd.f32 %v3769, %v5364
  %v5366 = vpop.f32.mrf.mxu0
  %v5367 = vadd.f32 %v3765, %v5366
  %v5368 = vpop.f32.mrf.mxu0
  %v5369 = vadd.f32 %v3769, %v5368
  %5370 = vmatprep.mubr.bf16.mxu0 %v4420
  %5371 = vmatmul.mubr.bf16.gmra.mxu0 %v4411
  %v5372 = vpop.f32.mrf.mxu0
  %v5373 = vadd.f32 %v3765, %v5372
  %v5374 = vpop.f32.mrf.mxu0
  %v5375 = vadd.f32 %v3769, %v5374
  %v5376 = vpop.f32.mrf.mxu0
  %v5377 = vadd.f32 %v3765, %v5376
  %v5378 = vpop.f32.mrf.mxu0
  %v5379 = vadd.f32 %v3769, %v5378
  %5380 = vdwg.mxu0
  %5381 = vmatprep.subr.bf16.mxu0 %v5027
  %5382 = vmatpush1.bf16.msra.mxu0 %v5026
  %5383 = vmatprep.subr.bf16.mxu0 %v5025
  %5384 = vmatpush1.bf16.msra.mxu0 %v5024
  %5385 = vmatprep.subr.bf16.mxu0 %v5023
  %5386 = vmatpush1.bf16.msra.mxu0 %v5022
  %5387 = vmatprep.subr.bf16.mxu0 %v5021
  %5388 = vmatpush1.bf16.msra.mxu0 %v5020
  %5389 = vmatprep.subr.bf16.mxu0 %v5019
  %5390 = vmatpush1.bf16.msra.mxu0 %v5018
  %5391 = vmatprep.subr.bf16.mxu0 %v5017
  %5392 = vmatpush1.bf16.msra.mxu0 %v5016
  %5393 = vmatprep.subr.bf16.mxu0 %v5015
  %5394 = vmatpush1.bf16.msra.mxu0 %v5014
  %5395 = vmatprep.subr.bf16.mxu0 %v5013
  %5396 = vmatpush1.bf16.msra.mxu0 %v5012
  %5397 = vmatprep.subr.bf16.mxu0 %v5043
  %5398 = vmatpush2.bf16.msra.mxu0 %v5042
  %5399 = vmatprep.subr.bf16.mxu0 %v5041
  %5400 = vmatpush2.bf16.msra.mxu0 %v5040
  %5401 = vmatprep.subr.bf16.mxu0 %v5039
  %5402 = vmatpush2.bf16.msra.mxu0 %v5038
  %5403 = vmatprep.subr.bf16.mxu0 %v5037
  %5404 = vmatpush2.bf16.msra.mxu0 %v5036
  %5405 = vmatprep.subr.bf16.mxu0 %v5035
  %5406 = vmatpush2.bf16.msra.mxu0 %v5034
  %5407 = vmatprep.subr.bf16.mxu0 %v5033
  %5408 = vmatpush2.bf16.msra.mxu0 %v5032
  %5409 = vmatprep.subr.bf16.mxu0 %v5031
  %5410 = vmatpush2.bf16.msra.mxu0 %v5030
  %5411 = vmatprep.subr.bf16.mxu0 %v5029
  %5412 = vmatpush2.bf16.msra.mxu0 %v5028
  %5413 = vmatprep.mubr.bf16.mxu0 %v3831
  %5414 = vmatmul.mubr.bf16.gmra.mxu0 %v3814
  %v5415 = vpop.f32.mrf.mxu0
  %v5416 = vadd.f32 %v5303, %v5415
  %v5417 = vpop.f32.mrf.mxu0
  %v5418 = vadd.f32 %v5305, %v5417
  %v5419 = vpop.f32.mrf.mxu0
  %v5420 = vadd.f32 %v5307, %v5419
  %v5421 = vpop.f32.mrf.mxu0
  %v5422 = vadd.f32 %v5309, %v5421
  %5423 = vmatprep.mubr.bf16.mxu0 %v3952
  %5424 = vmatmul.mubr.bf16.gmra.mxu0 %v3943
  %v5425 = vpop.f32.mrf.mxu0
  %v5426 = vadd.f32 %v5313, %v5425
  %v5427 = vpop.f32.mrf.mxu0
  %v5428 = vadd.f32 %v5315, %v5427
  %v5429 = vpop.f32.mrf.mxu0
  %v5430 = vadd.f32 %v5317, %v5429
  %v5431 = vpop.f32.mrf.mxu0
  %v5432 = vadd.f32 %v5319, %v5431
  %5433 = vmatprep.mubr.bf16.mxu0 %v4033
  %5434 = vmatmul.mubr.bf16.gmra.mxu0 %v4024
  %v5435 = vpop.f32.mrf.mxu0
  %v5436 = vadd.f32 %v5323, %v5435
  %v5437 = vpop.f32.mrf.mxu0
  %v5438 = vadd.f32 %v5325, %v5437
  %v5439 = vpop.f32.mrf.mxu0
  %v5440 = vadd.f32 %v5327, %v5439
  %v5441 = vpop.f32.mrf.mxu0
  %v5442 = vadd.f32 %v5329, %v5441
  %5443 = vmatprep.mubr.bf16.mxu0 %v4114
  %5444 = vmatmul.mubr.bf16.gmra.mxu0 %v4105
  %v5445 = vpop.f32.mrf.mxu0
  %v5446 = vadd.f32 %v5333, %v5445
  %v5447 = vpop.f32.mrf.mxu0
  %v5448 = vadd.f32 %v5335, %v5447
  %v5449 = vpop.f32.mrf.mxu0
  %v5450 = vadd.f32 %v5337, %v5449
  %v5451 = vpop.f32.mrf.mxu0
  %v5452 = vadd.f32 %v5339, %v5451
  %5453 = vmatprep.mubr.bf16.mxu0 %v4195
  %5454 = vmatmul.mubr.bf16.gmra.mxu0 %v4186
  %v5455 = vpop.f32.mrf.mxu0
  %v5456 = vadd.f32 %v5343, %v5455
  %v5457 = vpop.f32.mrf.mxu0
  %v5458 = vadd.f32 %v5345, %v5457
  %v5459 = vpop.f32.mrf.mxu0
  %v5460 = vadd.f32 %v5347, %v5459
  %v5461 = vpop.f32.mrf.mxu0
  %v5462 = vadd.f32 %v5349, %v5461
  %5463 = vmatprep.mubr.bf16.mxu0 %v4276
  %5464 = vmatmul.mubr.bf16.gmra.mxu0 %v4267
  %v5465 = vpop.f32.mrf.mxu0
  %v5466 = vadd.f32 %v5353, %v5465
  %v5467 = vpop.f32.mrf.mxu0
  %v5468 = vadd.f32 %v5355, %v5467
  %v5469 = vpop.f32.mrf.mxu0
  %v5470 = vadd.f32 %v5357, %v5469
  %v5471 = vpop.f32.mrf.mxu0
  %v5472 = vadd.f32 %v5359, %v5471
  %5473 = vmatprep.mubr.bf16.mxu0 %v4357
  %5474 = vmatmul.mubr.bf16.gmra.mxu0 %v4348
  %v5475 = vpop.f32.mrf.mxu0
  %v5476 = vadd.f32 %v5363, %v5475
  %v5477 = vpop.f32.mrf.mxu0
  %v5478 = vadd.f32 %v5365, %v5477
  %v5479 = vpop.f32.mrf.mxu0
  %v5480 = vadd.f32 %v5367, %v5479
  %v5481 = vpop.f32.mrf.mxu0
  %v5482 = vadd.f32 %v5369, %v5481
  %5483 = vmatprep.mubr.bf16.mxu0 %v4438
  %5484 = vmatmul.mubr.bf16.gmra.mxu0 %v4429
  %v5485 = vpop.f32.mrf.mxu0
  %v5486 = vadd.f32 %v5373, %v5485
  %v5487 = vpop.f32.mrf.mxu0
  %v5488 = vadd.f32 %v5375, %v5487
  %v5489 = vpop.f32.mrf.mxu0
  %v5490 = vadd.f32 %v5377, %v5489
  %v5491 = vpop.f32.mrf.mxu0
  %v5492 = vadd.f32 %v5379, %v5491
  %5493 = vdwg.mxu0
  %5494 = vmatprep.subr.bf16.mxu0 %v5059
  %5495 = vmatpush1.bf16.msra.mxu0 %v5058
  %5496 = vmatprep.subr.bf16.mxu0 %v5057
  %5497 = vmatpush1.bf16.msra.mxu0 %v5056
  %5498 = vmatprep.subr.bf16.mxu0 %v5055
  %5499 = vmatpush1.bf16.msra.mxu0 %v5054
  %5500 = vmatprep.subr.bf16.mxu0 %v5053
  %5501 = vmatpush1.bf16.msra.mxu0 %v5052
  %5502 = vmatprep.subr.bf16.mxu0 %v5051
  %5503 = vmatpush1.bf16.msra.mxu0 %v5050
  %5504 = vmatprep.subr.bf16.mxu0 %v5049
  %5505 = vmatpush1.bf16.msra.mxu0 %v5048
  %5506 = vmatprep.subr.bf16.mxu0 %v5047
  %5507 = vmatpush1.bf16.msra.mxu0 %v5046
  %5508 = vmatprep.subr.bf16.mxu0 %v5045
  %5509 = vmatpush1.bf16.msra.mxu0 %v5044
  %5510 = vmatprep.subr.bf16.mxu0 %v5075
  %5511 = vmatpush2.bf16.msra.mxu0 %v5074
  %5512 = vmatprep.subr.bf16.mxu0 %v5073
  %5513 = vmatpush2.bf16.msra.mxu0 %v5072
  %5514 = vmatprep.subr.bf16.mxu0 %v5071
  %5515 = vmatpush2.bf16.msra.mxu0 %v5070
  %5516 = vmatprep.subr.bf16.mxu0 %v5069
  %5517 = vmatpush2.bf16.msra.mxu0 %v5068
  %5518 = vmatprep.subr.bf16.mxu0 %v5067
  %5519 = vmatpush2.bf16.msra.mxu0 %v5066
  %5520 = vmatprep.subr.bf16.mxu0 %v5065
  %5521 = vmatpush2.bf16.msra.mxu0 %v5064
  %5522 = vmatprep.subr.bf16.mxu0 %v5063
  %5523 = vmatpush2.bf16.msra.mxu0 %v5062
  %5524 = vmatprep.subr.bf16.mxu0 %v5061
  %5525 = vmatpush2.bf16.msra.mxu0 %v5060
  %5526 = vmatprep.mubr.bf16.mxu0 %v3865
  %5527 = vmatmul.mubr.bf16.gmra.mxu0 %v3848
  %v5528 = vpop.f32.mrf.mxu0
  %v5529 = vadd.f32 %v5416, %v5528
  %v5530 = vpop.f32.mrf.mxu0
  %v5531 = vadd.f32 %v5418, %v5530
  %v5532 = vpop.f32.mrf.mxu0
  %v5533 = vadd.f32 %v5420, %v5532
  %v5534 = vpop.f32.mrf.mxu0
  %v5535 = vadd.f32 %v5422, %v5534
  %5536 = vmatprep.mubr.bf16.mxu0 %v3970
  %5537 = vmatmul.mubr.bf16.gmra.mxu0 %v3961
  %v5538 = vpop.f32.mrf.mxu0
  %v5539 = vadd.f32 %v5426, %v5538
  %v5540 = vpop.f32.mrf.mxu0
  %v5541 = vadd.f32 %v5428, %v5540
  %v5542 = vpop.f32.mrf.mxu0
  %v5543 = vadd.f32 %v5430, %v5542
  %v5544 = vpop.f32.mrf.mxu0
  %v5545 = vadd.f32 %v5432, %v5544
  %5546 = vmatprep.mubr.bf16.mxu0 %v4051
  %5547 = vmatmul.mubr.bf16.gmra.mxu0 %v4042
  %v5548 = vpop.f32.mrf.mxu0
  %v5549 = vadd.f32 %v5436, %v5548
  %v5550 = vpop.f32.mrf.mxu0
  %v5551 = vadd.f32 %v5438, %v5550
  %v5552 = vpop.f32.mrf.mxu0
  %v5553 = vadd.f32 %v5440, %v5552
  %v5554 = vpop.f32.mrf.mxu0
  %v5555 = vadd.f32 %v5442, %v5554
  %5556 = vmatprep.mubr.bf16.mxu0 %v4132
  %5557 = vmatmul.mubr.bf16.gmra.mxu0 %v4123
  %v5558 = vpop.f32.mrf.mxu0
  %v5559 = vadd.f32 %v5446, %v5558
  %v5560 = vpop.f32.mrf.mxu0
  %v5561 = vadd.f32 %v5448, %v5560
  %v5562 = vpop.f32.mrf.mxu0
  %v5563 = vadd.f32 %v5450, %v5562
  %v5564 = vpop.f32.mrf.mxu0
  %v5565 = vadd.f32 %v5452, %v5564
  %5566 = vmatprep.mubr.bf16.mxu0 %v4213
  %5567 = vmatmul.mubr.bf16.gmra.mxu0 %v4204
  %v5568 = vpop.f32.mrf.mxu0
  %v5569 = vadd.f32 %v5456, %v5568
  %v5570 = vpop.f32.mrf.mxu0
  %v5571 = vadd.f32 %v5458, %v5570
  %v5572 = vpop.f32.mrf.mxu0
  %v5573 = vadd.f32 %v5460, %v5572
  %v5574 = vpop.f32.mrf.mxu0
  %v5575 = vadd.f32 %v5462, %v5574
  %5576 = vmatprep.mubr.bf16.mxu0 %v4294
  %5577 = vmatmul.mubr.bf16.gmra.mxu0 %v4285
  %v5578 = vpop.f32.mrf.mxu0
  %v5579 = vadd.f32 %v5466, %v5578
  %v5580 = vpop.f32.mrf.mxu0
  %v5581 = vadd.f32 %v5468, %v5580
  %v5582 = vpop.f32.mrf.mxu0
  %v5583 = vadd.f32 %v5470, %v5582
  %v5584 = vpop.f32.mrf.mxu0
  %v5585 = vadd.f32 %v5472, %v5584
  %5586 = vmatprep.mubr.bf16.mxu0 %v4375
  %5587 = vmatmul.mubr.bf16.gmra.mxu0 %v4366
  %v5588 = vpop.f32.mrf.mxu0
  %v5589 = vadd.f32 %v5476, %v5588
  %v5590 = vpop.f32.mrf.mxu0
  %v5591 = vadd.f32 %v5478, %v5590
  %v5592 = vpop.f32.mrf.mxu0
  %v5593 = vadd.f32 %v5480, %v5592
  %v5594 = vpop.f32.mrf.mxu0
  %v5595 = vadd.f32 %v5482, %v5594
  %5596 = vmatprep.mubr.bf16.mxu0 %v4456
  %5597 = vmatmul.mubr.bf16.gmra.mxu0 %v4447
  %v5598 = vpop.f32.mrf.mxu0
  %v5599 = vadd.f32 %v5486, %v5598
  %v5600 = vpop.f32.mrf.mxu0
  %v5601 = vadd.f32 %v5488, %v5600
  %v5602 = vpop.f32.mrf.mxu0
  %v5603 = vadd.f32 %v5490, %v5602
  %v5604 = vpop.f32.mrf.mxu0
  %v5605 = vadd.f32 %v5492, %v5604
  %5606 = vdwg.mxu0
  %5607 = vmatprep.subr.bf16.mxu0 %v5091
  %5608 = vmatpush1.bf16.msra.mxu0 %v5090
  %5609 = vmatprep.subr.bf16.mxu0 %v5089
  %5610 = vmatpush1.bf16.msra.mxu0 %v5088
  %5611 = vmatprep.subr.bf16.mxu0 %v5087
  %5612 = vmatpush1.bf16.msra.mxu0 %v5086
  %5613 = vmatprep.subr.bf16.mxu0 %v5085
  %5614 = vmatpush1.bf16.msra.mxu0 %v5084
  %5615 = vmatprep.subr.bf16.mxu0 %v5083
  %5616 = vmatpush1.bf16.msra.mxu0 %v5082
  %5617 = vmatprep.subr.bf16.mxu0 %v5081
  %5618 = vmatpush1.bf16.msra.mxu0 %v5080
  %5619 = vmatprep.subr.bf16.mxu0 %v5079
  %5620 = vmatpush1.bf16.msra.mxu0 %v5078
  %5621 = vmatprep.subr.bf16.mxu0 %v5077
  %5622 = vmatpush1.bf16.msra.mxu0 %v5076
  %5623 = vmatprep.subr.bf16.mxu0 %v5107
  %5624 = vmatpush2.bf16.msra.mxu0 %v5106
  %5625 = vmatprep.subr.bf16.mxu0 %v5105
  %5626 = vmatpush2.bf16.msra.mxu0 %v5104
  %5627 = vmatprep.subr.bf16.mxu0 %v5103
  %5628 = vmatpush2.bf16.msra.mxu0 %v5102
  %5629 = vmatprep.subr.bf16.mxu0 %v5101
  %5630 = vmatpush2.bf16.msra.mxu0 %v5100
  %5631 = vmatprep.subr.bf16.mxu0 %v5099
  %5632 = vmatpush2.bf16.msra.mxu0 %v5098
  %5633 = vmatprep.subr.bf16.mxu0 %v5097
  %5634 = vmatpush2.bf16.msra.mxu0 %v5096
  %5635 = vmatprep.subr.bf16.mxu0 %v5095
  %5636 = vmatpush2.bf16.msra.mxu0 %v5094
  %5637 = vmatprep.subr.bf16.mxu0 %v5093
  %5638 = vmatpush2.bf16.msra.mxu0 %v5092
  %5639 = vmatprep.mubr.bf16.mxu0 %v3899
  %5640 = vmatmul.mubr.bf16.gmra.mxu0 %v3882
  %v5641 = vpop.f32.mrf.mxu0
  %v5642 = vadd.f32 %v5529, %v5641
  %v5643 = vpop.f32.mrf.mxu0
  %v5644 = vadd.f32 %v5531, %v5643
  %v5645 = vpop.f32.mrf.mxu0
  %v5646 = vadd.f32 %v5533, %v5645
  %v5647 = vpop.f32.mrf.mxu0
  %v5648 = vadd.f32 %v5535, %v5647
  %5649 = vmatprep.mubr.bf16.mxu0 %v3988
  %5650 = vmatmul.mubr.bf16.gmra.mxu0 %v3979
  %v5651 = vpop.f32.mrf.mxu0
  %v5652 = vadd.f32 %v5539, %v5651
  %v5653 = vpop.f32.mrf.mxu0
  %v5654 = vadd.f32 %v5541, %v5653
  %v5655 = vpop.f32.mrf.mxu0
  %v5656 = vadd.f32 %v5543, %v5655
  %v5657 = vpop.f32.mrf.mxu0
  %v5658 = vadd.f32 %v5545, %v5657
  %5659 = vmatprep.mubr.bf16.mxu0 %v4069
  %5660 = vmatmul.mubr.bf16.gmra.mxu0 %v4060
  %v5661 = vpop.f32.mrf.mxu0
  %v5662 = vadd.f32 %v5549, %v5661
  %v5663 = vpop.f32.mrf.mxu0
  %v5664 = vadd.f32 %v5551, %v5663
  %v5665 = vpop.f32.mrf.mxu0
  %v5666 = vadd.f32 %v5553, %v5665
  %v5667 = vpop.f32.mrf.mxu0
  %v5668 = vadd.f32 %v5555, %v5667
  %5669 = vmatprep.mubr.bf16.mxu0 %v4150
  %5670 = vmatmul.mubr.bf16.gmra.mxu0 %v4141
  %v5671 = vpop.f32.mrf.mxu0
  %v5672 = vadd.f32 %v5559, %v5671
  %v5673 = vpop.f32.mrf.mxu0
  %v5674 = vadd.f32 %v5561, %v5673
  %v5675 = vpop.f32.mrf.mxu0
  %v5676 = vadd.f32 %v5563, %v5675
  %v5677 = vpop.f32.mrf.mxu0
  %v5678 = vadd.f32 %v5565, %v5677
  %5679 = vmatprep.mubr.bf16.mxu0 %v4231
  %5680 = vmatmul.mubr.bf16.gmra.mxu0 %v4222
  %v5681 = vpop.f32.mrf.mxu0
  %v5682 = vadd.f32 %v5569, %v5681
  %v5683 = vpop.f32.mrf.mxu0
  %v5684 = vadd.f32 %v5571, %v5683
  %v5685 = vpop.f32.mrf.mxu0
  %v5686 = vadd.f32 %v5573, %v5685
  %v5687 = vpop.f32.mrf.mxu0
  %v5688 = vadd.f32 %v5575, %v5687
  %5689 = vmatprep.mubr.bf16.mxu0 %v4312
  %5690 = vmatmul.mubr.bf16.gmra.mxu0 %v4303
  %v5691 = vpop.f32.mrf.mxu0
  %v5692 = vadd.f32 %v5579, %v5691
  %v5693 = vpop.f32.mrf.mxu0
  %v5694 = vadd.f32 %v5581, %v5693
  %v5695 = vpop.f32.mrf.mxu0
  %v5696 = vadd.f32 %v5583, %v5695
  %v5697 = vpop.f32.mrf.mxu0
  %v5698 = vadd.f32 %v5585, %v5697
  %5699 = vmatprep.mubr.bf16.mxu0 %v4393
  %5700 = vmatmul.mubr.bf16.gmra.mxu0 %v4384
  %v5701 = vpop.f32.mrf.mxu0
  %v5702 = vadd.f32 %v5589, %v5701
  %v5703 = vpop.f32.mrf.mxu0
  %v5704 = vadd.f32 %v5591, %v5703
  %v5705 = vpop.f32.mrf.mxu0
  %v5706 = vadd.f32 %v5593, %v5705
  %v5707 = vpop.f32.mrf.mxu0
  %v5708 = vadd.f32 %v5595, %v5707
  %5709 = vmatprep.mubr.bf16.mxu0 %v4466
  %5710 = vmatmul.mubr.bf16.gmra.mxu0 %v4457
  %v5711 = vpop.f32.mrf.mxu0
  %v5712 = vadd.f32 %v5599, %v5711
  %v5713 = vpop.f32.mrf.mxu0
  %v5714 = vadd.f32 %v5601, %v5713
  %v5715 = vpop.f32.mrf.mxu0
  %v5716 = vadd.f32 %v5603, %v5715
  %v5717 = vpop.f32.mrf.mxu0
  %v5718 = vadd.f32 %v5605, %v5717
  %5719 = vdwg.mxu0
  %5720 = vmatprep.subr.bf16.mxu0 %v5123
  %5721 = vmatpush1.bf16.msra.mxu0 %v5122
  %5722 = vmatprep.subr.bf16.mxu0 %v5121
  %5723 = vmatpush1.bf16.msra.mxu0 %v5120
  %5724 = vmatprep.subr.bf16.mxu0 %v5119
  %5725 = vmatpush1.bf16.msra.mxu0 %v5118
  %5726 = vmatprep.subr.bf16.mxu0 %v5117
  %5727 = vmatpush1.bf16.msra.mxu0 %v5116
  %5728 = vmatprep.subr.bf16.mxu0 %v5115
  %5729 = vmatpush1.bf16.msra.mxu0 %v5114
  %5730 = vmatprep.subr.bf16.mxu0 %v5113
  %5731 = vmatpush1.bf16.msra.mxu0 %v5112
  %5732 = vmatprep.subr.bf16.mxu0 %v5111
  %5733 = vmatpush1.bf16.msra.mxu0 %v5110
  %5734 = vmatprep.subr.bf16.mxu0 %v5109
  %5735 = vmatpush1.bf16.msra.mxu0 %v5108
  %5736 = vmatprep.subr.bf16.mxu0 0
  %5737 = vmatpush2.bf16.msra.mxu0 0
  %5738 = vmatprep.subr.bf16.mxu0 0
  %5739 = vmatpush2.bf16.msra.mxu0 0
  %5740 = vmatprep.subr.bf16.mxu0 0
  %5741 = vmatpush2.bf16.msra.mxu0 0
  %5742 = vmatprep.subr.bf16.mxu0 0
  %5743 = vmatpush2.bf16.msra.mxu0 0
  %5744 = vmatprep.subr.bf16.mxu0 0
  %5745 = vmatpush2.bf16.msra.mxu0 0
  %5746 = vmatprep.subr.bf16.mxu0 0
  %5747 = vmatpush2.bf16.msra.mxu0 0
  %5748 = vmatprep.subr.bf16.mxu0 0
  %5749 = vmatpush2.bf16.msra.mxu0 0
  %5750 = vmatprep.subr.bf16.mxu0 0
  %5751 = vmatpush2.bf16.msra.mxu0 0
  %5752 = vmatprep.mubr.bf16.mxu0 0
  %5753 = vmatmul.mubr.bf16.gmra.mxu0 %v3916
  %v5754 = vpop.f32.mrf.mxu0
  %v5755 = vadd.f32 %v5642, %v5754
  %v5756 = vpop.f32.mrf.mxu0
  %v5757 = vadd.f32 %v5644, %v5756
  %v5758 = vpop.f32.mrf.mxu0
  %v5759 = vadd.f32 %v5646, %v5758
  %v5760 = vpop.f32.mrf.mxu0
  %v5761 = vadd.f32 %v5648, %v5760
  %5762 = vmatprep.mubr.bf16.mxu0 0
  %5763 = vmatmul.mubr.bf16.gmra.mxu0 %v3997
  %v5764 = vpop.f32.mrf.mxu0
  %v5765 = vadd.f32 %v5652, %v5764
  %v5766 = vpop.f32.mrf.mxu0
  %v5767 = vadd.f32 %v5654, %v5766
  %v5768 = vpop.f32.mrf.mxu0
  %v5769 = vadd.f32 %v5656, %v5768
  %v5770 = vpop.f32.mrf.mxu0
  %v5771 = vadd.f32 %v5658, %v5770
  %5772 = vmatprep.mubr.bf16.mxu0 0
  %5773 = vmatmul.mubr.bf16.gmra.mxu0 %v4078
  %v5774 = vpop.f32.mrf.mxu0
  %v5775 = vadd.f32 %v5662, %v5774
  %v5776 = vpop.f32.mrf.mxu0
  %v5777 = vadd.f32 %v5664, %v5776
  %v5778 = vpop.f32.mrf.mxu0
  %v5779 = vadd.f32 %v5666, %v5778
  %v5780 = vpop.f32.mrf.mxu0
  %v5781 = vadd.f32 %v5668, %v5780
  %5782 = vmatprep.mubr.bf16.mxu0 0
  %5783 = vmatmul.mubr.bf16.gmra.mxu0 %v4159
  %v5784 = vpop.f32.mrf.mxu0
  %v5785 = vadd.f32 %v5672, %v5784
  %v5786 = vpop.f32.mrf.mxu0
  %v5787 = vadd.f32 %v5674, %v5786
  %v5788 = vpop.f32.mrf.mxu0
  %v5789 = vadd.f32 %v5676, %v5788
  %v5790 = vpop.f32.mrf.mxu0
  %v5791 = vadd.f32 %v5678, %v5790
  %5792 = vmatprep.mubr.bf16.mxu0 0
  %5793 = vmatmul.mubr.bf16.gmra.mxu0 %v4240
  %v5794 = vpop.f32.mrf.mxu0
  %v5795 = vadd.f32 %v5682, %v5794
  %v5796 = vpop.f32.mrf.mxu0
  %v5797 = vadd.f32 %v5684, %v5796
  %v5798 = vpop.f32.mrf.mxu0
  %v5799 = vadd.f32 %v5686, %v5798
  %v5800 = vpop.f32.mrf.mxu0
  %v5801 = vadd.f32 %v5688, %v5800
  %5802 = vmatprep.mubr.bf16.mxu0 0
  %5803 = vmatmul.mubr.bf16.gmra.mxu0 %v4321
  %v5804 = vpop.f32.mrf.mxu0
  %v5805 = vadd.f32 %v5692, %v5804
  %v5806 = vpop.f32.mrf.mxu0
  %v5807 = vadd.f32 %v5694, %v5806
  %v5808 = vpop.f32.mrf.mxu0
  %v5809 = vadd.f32 %v5696, %v5808
  %v5810 = vpop.f32.mrf.mxu0
  %v5811 = vadd.f32 %v5698, %v5810
  %5812 = vmatprep.mubr.bf16.mxu0 0
  %5813 = vmatmul.mubr.bf16.gmra.mxu0 %v4402
  %v5814 = vpop.f32.mrf.mxu0
  %v5815 = vadd.f32 %v5702, %v5814
  %v5816 = vpop.f32.mrf.mxu0
  %v5817 = vadd.f32 %v5704, %v5816
  %v5818 = vpop.f32.mrf.mxu0
  %v5819 = vadd.f32 %v5706, %v5818
  %v5820 = vpop.f32.mrf.mxu0
  %v5821 = vadd.f32 %v5708, %v5820
  %5822 = vmatprep.mubr.bf16.mxu0 0
  %5823 = vmatmul.mubr.bf16.gmra.mxu0 %v4475
  %v5824 = vpop.f32.mrf.mxu0
  %v5825 = vadd.f32 %v5712, %v5824
  %v5826 = vpop.f32.mrf.mxu0
  %v5827 = vadd.f32 %v5714, %v5826
  %v5828 = vpop.f32.mrf.mxu0
  %v5829 = vadd.f32 %v5716, %v5828
  %v5830 = vpop.f32.mrf.mxu0
  %v5831 = vadd.f32 %v5718, %v5830
  %5832 = vdwg.mxu0
  %vm5833 = vcmp.ge.f32.partialorder %v5755, 0.0
  %vm5834 = vcmp.ge.f32.partialorder %v5757, 0.0
  %vm5835 = vcmp.ge.f32.partialorder %v5759, 0.0
  %vm5836 = vcmp.ge.f32.partialorder %v5761, 0.0
  %vm5837 = vcmp.ge.f32.partialorder %v5765, 0.0
  %vm5838 = vcmp.ge.f32.partialorder %v5767, 0.0
  %vm5839 = vcmp.ge.f32.partialorder %v5769, 0.0
  %vm5840 = vcmp.ge.f32.partialorder %v5771, 0.0
  %vm5841 = vcmp.ge.f32.partialorder %v5775, 0.0
  %vm5842 = vcmp.ge.f32.partialorder %v5777, 0.0
  %vm5843 = vcmp.ge.f32.partialorder %v5779, 0.0
  %vm5844 = vcmp.ge.f32.partialorder %v5781, 0.0
  %vm5845 = vcmp.ge.f32.partialorder %v5785, 0.0
  %vm5846 = vcmp.ge.f32.partialorder %v5787, 0.0
  %vm5847 = vcmp.ge.f32.partialorder %v5789, 0.0
  %vm5848 = vcmp.ge.f32.partialorder %v5791, 0.0
  %vm5849 = vcmp.ge.f32.partialorder %v5795, 0.0
  %vm5850 = vcmp.ge.f32.partialorder %v5797, 0.0
  %vm5851 = vcmp.ge.f32.partialorder %v5799, 0.0
  %vm5852 = vcmp.ge.f32.partialorder %v5801, 0.0
  %vm5853 = vcmp.ge.f32.partialorder %v5805, 0.0
  %vm5854 = vcmp.ge.f32.partialorder %v5807, 0.0
  %vm5855 = vcmp.ge.f32.partialorder %v5809, 0.0
  %vm5856 = vcmp.ge.f32.partialorder %v5811, 0.0
  %vm5857 = vcmp.ge.f32.partialorder %v5815, 0.0
  %vm5858 = vcmp.ge.f32.partialorder %v5817, 0.0
  %vm5859 = vcmp.ge.f32.partialorder %v5819, 0.0
  %vm5860 = vcmp.ge.f32.partialorder %v5821, 0.0
  %vm5861 = vcmp.ge.f32.partialorder %v5825, 0.0
  %vm5862 = vcmp.ge.f32.partialorder %v5827, 0.0
  %vm5863 = vcmp.ge.f32.partialorder %v5829, 0.0
  %vm5864 = vcmp.ge.f32.partialorder %v5831, 0.0
  %v5865 = vmul.f32 %v5755, 0.01
  %v5866 = vmul.f32 %v5757, 0.01
  %v5867 = vmul.f32 %v5759, 0.01
  %v5868 = vmul.f32 %v5761, 0.01
  %v5869 = vmul.f32 %v5765, 0.01
  %v5870 = vmul.f32 %v5767, 0.01
  %v5871 = vmul.f32 %v5769, 0.01
  %v5872 = vmul.f32 %v5771, 0.01
  %v5873 = vmul.f32 %v5775, 0.01
  %v5874 = vmul.f32 %v5777, 0.01
  %v5875 = vmul.f32 %v5779, 0.01
  %v5876 = vmul.f32 %v5781, 0.01
  %v5877 = vmul.f32 %v5785, 0.01
  %v5878 = vmul.f32 %v5787, 0.01
  %v5879 = vmul.f32 %v5789, 0.01
  %v5880 = vmul.f32 %v5791, 0.01
  %v5881 = vmul.f32 %v5795, 0.01
  %v5882 = vmul.f32 %v5797, 0.01
  %v5883 = vmul.f32 %v5799, 0.01
  %v5884 = vmul.f32 %v5801, 0.01
  %v5885 = vmul.f32 %v5805, 0.01
  %v5886 = vmul.f32 %v5807, 0.01
  %v5887 = vmul.f32 %v5809, 0.01
  %v5888 = vmul.f32 %v5811, 0.01
  %v5889 = vmul.f32 %v5815, 0.01
  %v5890 = vmul.f32 %v5817, 0.01
  %v5891 = vmul.f32 %v5819, 0.01
  %v5892 = vmul.f32 %v5821, 0.01
  %v5893 = vmul.f32 %v5825, 0.01
  %v5894 = vmul.f32 %v5827, 0.01
  %v5895 = vmul.f32 %v5829, 0.01
  %v5896 = vmul.f32 %v5831, 0.01
  %v5897 = vsel %vm5833, %v5755, %v5865
  %v5898 = vsel %vm5834, %v5757, %v5866
  %v5899 = vsel %vm5835, %v5759, %v5867
  %v5900 = vsel %vm5836, %v5761, %v5868
  %v5901 = vsel %vm5837, %v5765, %v5869
  %v5902 = vsel %vm5838, %v5767, %v5870
  %v5903 = vsel %vm5839, %v5769, %v5871
  %v5904 = vsel %vm5840, %v5771, %v5872
  %v5905 = vsel %vm5841, %v5775, %v5873
  %v5906 = vsel %vm5842, %v5777, %v5874
  %v5907 = vsel %vm5843, %v5779, %v5875
  %v5908 = vsel %vm5844, %v5781, %v5876
  %v5909 = vsel %vm5845, %v5785, %v5877
  %v5910 = vsel %vm5846, %v5787, %v5878
  %v5911 = vsel %vm5847, %v5789, %v5879
  %v5912 = vsel %vm5848, %v5791, %v5880
  %v5913 = vsel %vm5849, %v5795, %v5881
  %v5914 = vsel %vm5850, %v5797, %v5882
  %v5915 = vsel %vm5851, %v5799, %v5883
  %v5916 = vsel %vm5852, %v5801, %v5884
  %v5917 = vsel %vm5853, %v5805, %v5885
  %v5918 = vsel %vm5854, %v5807, %v5886
  %v5919 = vsel %vm5855, %v5809, %v5887
  %v5920 = vsel %vm5856, %v5811, %v5888
  %v5921 = vsel %vm5857, %v5815, %v5889
  %v5922 = vsel %vm5858, %v5817, %v5890
  %v5923 = vsel %vm5859, %v5819, %v5891
  %v5924 = vsel %vm5860, %v5821, %v5892
  %v5925 = vsel %vm5861, %v5825, %v5893
  %v5926 = vsel %vm5862, %v5827, %v5894
  %v5927 = vsel %vm5863, %v5829, %v5895
  %v5928 = vsel %vm5864, %v5831, %v5896
  %v5929 = vpack.c.bf16 %v5899, %v5897
  %v5930 = vpack.c.bf16 %v5900, %v5898
  %v5931 = vpack.c.bf16 %v5903, %v5901
  %v5932 = vpack.c.bf16 %v5904, %v5902
  %v5933 = vpack.c.bf16 %v5907, %v5905
  %v5934 = vpack.c.bf16 %v5908, %v5906
  %v5935 = vpack.c.bf16 %v5911, %v5909
  %v5936 = vpack.c.bf16 %v5912, %v5910
  %v5937 = vpack.c.bf16 %v5915, %v5913
  %v5938 = vpack.c.bf16 %v5916, %v5914
  %v5939 = vpack.c.bf16 %v5919, %v5917
  %v5940 = vpack.c.bf16 %v5920, %v5918
  %v5941 = vpack.c.bf16 %v5923, %v5921
  %v5942 = vpack.c.bf16 %v5924, %v5922
  %v5943 = vpack.c.bf16 %v5927, %v5925
  %v5944 = vpack.c.bf16 %v5928, %v5926
  %v5945 = vld [vmem:[%s6] sm:$0x1]
  %5946 = vmatprep.subr.bf16.mxu0 %v5944
  %5947 = vmatpush1.bf16.msra.mxu0 %v5943
  %5948 = vmatprep.subr.bf16.mxu0 %v5942
  %5949 = vmatpush1.bf16.msra.mxu0 %v5941
  %5950 = vmatprep.subr.bf16.mxu0 %v5940
  %5951 = vmatpush1.bf16.msra.mxu0 %v5939
  %5952 = vmatprep.subr.bf16.mxu0 %v5938
  %5953 = vmatpush1.bf16.msra.mxu0 %v5937
  %5954 = vmatprep.subr.bf16.mxu0 %v5936
  %5955 = vmatpush1.bf16.msra.mxu0 %v5935
  %5956 = vmatprep.subr.bf16.mxu0 %v5934
  %5957 = vmatpush1.bf16.msra.mxu0 %v5933
  %5958 = vmatprep.subr.bf16.mxu0 %v5932
  %5959 = vmatpush1.bf16.msra.mxu0 %v5931
  %5960 = vmatprep.subr.bf16.mxu0 %v5930
  %5961 = vmatpush1.bf16.msra.mxu0 %v5929
  %5962 = vmatprep.subr.bf16.mxu0 0
  %5963 = vmatpush2.bf16.msra.mxu0 0
  %5964 = vmatprep.subr.bf16.mxu0 0
  %5965 = vmatpush2.bf16.msra.mxu0 0
  %5966 = vmatprep.subr.bf16.mxu0 0
  %5967 = vmatpush2.bf16.msra.mxu0 0
  %5968 = vmatprep.subr.bf16.mxu0 0
  %5969 = vmatpush2.bf16.msra.mxu0 0
  %5970 = vmatprep.subr.bf16.mxu0 0
  %5971 = vmatpush2.bf16.msra.mxu0 0
  %5972 = vmatprep.subr.bf16.mxu0 0
  %5973 = vmatpush2.bf16.msra.mxu0 0
  %5974 = vmatprep.subr.bf16.mxu0 0
  %5975 = vmatpush2.bf16.msra.mxu0 0
  %5976 = vmatprep.subr.bf16.mxu0 0
  %5977 = vmatpush2.bf16.msra.mxu0 0
  %5978 = vmatprep.mubr.bf16.mxu0 0
  %5979 = vmatmul.mubr.bf16.gmra.mxu0 %v5945
  %v5980 = vpop.f32.mrf.mxu0
  %v5981 = vadd.f32 0.0, %v5980
  %v5982 = vpop.f32.mrf.mxu0
  %v5983 = vadd.f32 0.0, %v5982
  %v5984 = vpop.f32.mrf.mxu0
  %v5985 = vpop.f32.mrf.mxu0
  %5986 = vdwg.mxu0
  %v5987 = vld [vmem:[%s7] sm:$0x3]
  %v5989 = vlaneseq
  %v5990 = vshrl.u32 %v5989, 7
  %v5991 = vsub.s32 0, %v5990
  %v5992 = vrot.slane %v5987, %v5991
  %v5993 = vlaneseq
  %v5994 = vshrl.u32 %v5993, 7
  %v5995 = vsub.s32 1, %v5994
  %v5996 = vrot.slane %v5987, %v5995
  %v5999 = vmul.f32 %v5981, %v5992
  %v6000 = vmul.f32 %v5983, %v5996
  %v6001 = vadd.f32 %v5999, 0.0
  %v6002 = vadd.f32 %v6000, 0.0
  %s6003 = scalar_lea.vmem %s6, 1
  %v6004 = vld [vmem:[%s6003] sm:$0x1]
  %6005 = vmatprep.subr.bf16.mxu0 %v5944
  %6006 = vmatpush1.bf16.msra.mxu0 %v5943
  %6007 = vmatprep.subr.bf16.mxu0 %v5942
  %6008 = vmatpush1.bf16.msra.mxu0 %v5941
  %6009 = vmatprep.subr.bf16.mxu0 %v5940
  %6010 = vmatpush1.bf16.msra.mxu0 %v5939
  %6011 = vmatprep.subr.bf16.mxu0 %v5938
  %6012 = vmatpush1.bf16.msra.mxu0 %v5937
  %6013 = vmatprep.subr.bf16.mxu0 %v5936
  %6014 = vmatpush1.bf16.msra.mxu0 %v5935
  %6015 = vmatprep.subr.bf16.mxu0 %v5934
  %6016 = vmatpush1.bf16.msra.mxu0 %v5933
  %6017 = vmatprep.subr.bf16.mxu0 %v5932
  %6018 = vmatpush1.bf16.msra.mxu0 %v5931
  %6019 = vmatprep.subr.bf16.mxu0 %v5930
  %6020 = vmatpush1.bf16.msra.mxu0 %v5929
  %6021 = vmatprep.subr.bf16.mxu0 0
  %6022 = vmatpush2.bf16.msra.mxu0 0
  %6023 = vmatprep.subr.bf16.mxu0 0
  %6024 = vmatpush2.bf16.msra.mxu0 0
  %6025 = vmatprep.subr.bf16.mxu0 0
  %6026 = vmatpush2.bf16.msra.mxu0 0
  %6027 = vmatprep.subr.bf16.mxu0 0
  %6028 = vmatpush2.bf16.msra.mxu0 0
  %6029 = vmatprep.subr.bf16.mxu0 0
  %6030 = vmatpush2.bf16.msra.mxu0 0
  %6031 = vmatprep.subr.bf16.mxu0 0
  %6032 = vmatpush2.bf16.msra.mxu0 0
  %6033 = vmatprep.subr.bf16.mxu0 0
  %6034 = vmatpush2.bf16.msra.mxu0 0
  %6035 = vmatprep.subr.bf16.mxu0 0
  %6036 = vmatpush2.bf16.msra.mxu0 0
  %6037 = vmatprep.mubr.bf16.mxu0 0
  %6038 = vmatmul.mubr.bf16.gmra.mxu0 %v6004
  %v6039 = vpop.f32.mrf.mxu0
  %v6040 = vadd.f32 0.0, %v6039
  %v6041 = vpop.f32.mrf.mxu0
  %v6042 = vadd.f32 0.0, %v6041
  %v6043 = vpop.f32.mrf.mxu0
  %v6044 = vpop.f32.mrf.mxu0
  %6045 = vdwg.mxu0
  %s6046 = scalar_lea.vmem %s7, 2
  %v6047 = vld [vmem:[%s6046] sm:$0x3]
  %v6049 = vlaneseq
  %v6050 = vshrl.u32 %v6049, 7
  %v6051 = vsub.s32 0, %v6050
  %v6052 = vrot.slane %v6047, %v6051
  %v6053 = vlaneseq
  %v6054 = vshrl.u32 %v6053, 7
  %v6055 = vsub.s32 1, %v6054
  %v6056 = vrot.slane %v6047, %v6055
  %v6059 = vmul.f32 %v6040, %v6052
  %v6060 = vmul.f32 %v6042, %v6056
  %v6061 = vadd.f32 %v6001, %v6059
  %v6062 = vadd.f32 %v6002, %v6060
  %s6063 = scalar_lea.vmem %s6, 2
  %v6064 = vld [vmem:[%s6063] sm:$0x1]
  %6065 = vmatprep.subr.bf16.mxu0 %v5944
  %6066 = vmatpush1.bf16.msra.mxu0 %v5943
  %6067 = vmatprep.subr.bf16.mxu0 %v5942
  %6068 = vmatpush1.bf16.msra.mxu0 %v5941
  %6069 = vmatprep.subr.bf16.mxu0 %v5940
  %6070 = vmatpush1.bf16.msra.mxu0 %v5939
  %6071 = vmatprep.subr.bf16.mxu0 %v5938
  %6072 = vmatpush1.bf16.msra.mxu0 %v5937
  %6073 = vmatprep.subr.bf16.mxu0 %v5936
  %6074 = vmatpush1.bf16.msra.mxu0 %v5935
  %6075 = vmatprep.subr.bf16.mxu0 %v5934
  %6076 = vmatpush1.bf16.msra.mxu0 %v5933
  %6077 = vmatprep.subr.bf16.mxu0 %v5932
  %6078 = vmatpush1.bf16.msra.mxu0 %v5931
  %6079 = vmatprep.subr.bf16.mxu0 %v5930
  %6080 = vmatpush1.bf16.msra.mxu0 %v5929
  %6081 = vmatprep.subr.bf16.mxu0 0
  %6082 = vmatpush2.bf16.msra.mxu0 0
  %6083 = vmatprep.subr.bf16.mxu0 0
  %6084 = vmatpush2.bf16.msra.mxu0 0
  %6085 = vmatprep.subr.bf16.mxu0 0
  %6086 = vmatpush2.bf16.msra.mxu0 0
  %6087 = vmatprep.subr.bf16.mxu0 0
  %6088 = vmatpush2.bf16.msra.mxu0 0
  %6089 = vmatprep.subr.bf16.mxu0 0
  %6090 = vmatpush2.bf16.msra.mxu0 0
  %6091 = vmatprep.subr.bf16.mxu0 0
  %6092 = vmatpush2.bf16.msra.mxu0 0
  %6093 = vmatprep.subr.bf16.mxu0 0
  %6094 = vmatpush2.bf16.msra.mxu0 0
  %6095 = vmatprep.subr.bf16.mxu0 0
  %6096 = vmatpush2.bf16.msra.mxu0 0
  %6097 = vmatprep.mubr.bf16.mxu0 0
  %6098 = vmatmul.mubr.bf16.gmra.mxu0 %v6064
  %v6099 = vpop.f32.mrf.mxu0
  %v6100 = vadd.f32 0.0, %v6099
  %v6101 = vpop.f32.mrf.mxu0
  %v6102 = vadd.f32 0.0, %v6101
  %v6103 = vpop.f32.mrf.mxu0
  %v6104 = vpop.f32.mrf.mxu0
  %6105 = vdwg.mxu0
  %s6106 = scalar_lea.vmem %s7, 4
  %v6107 = vld [vmem:[%s6106] sm:$0x3]
  %v6109 = vlaneseq
  %v6110 = vshrl.u32 %v6109, 7
  %v6111 = vsub.s32 0, %v6110
  %v6112 = vrot.slane %v6107, %v6111
  %v6113 = vlaneseq
  %v6114 = vshrl.u32 %v6113, 7
  %v6115 = vsub.s32 1, %v6114
  %v6116 = vrot.slane %v6107, %v6115
  %v6119 = vmul.f32 %v6100, %v6112
  %v6120 = vmul.f32 %v6102, %v6116
  %v6121 = vadd.f32 %v6061, %v6119
  %v6122 = vadd.f32 %v6062, %v6120
  %s6123 = scalar_lea.vmem %s6, 3
  %v6124 = vld [vmem:[%s6123] sm:$0x1]
  %6125 = vmatprep.subr.bf16.mxu0 %v5944
  %6126 = vmatpush1.bf16.msra.mxu0 %v5943
  %6127 = vmatprep.subr.bf16.mxu0 %v5942
  %6128 = vmatpush1.bf16.msra.mxu0 %v5941
  %6129 = vmatprep.subr.bf16.mxu0 %v5940
  %6130 = vmatpush1.bf16.msra.mxu0 %v5939
  %6131 = vmatprep.subr.bf16.mxu0 %v5938
  %6132 = vmatpush1.bf16.msra.mxu0 %v5937
  %6133 = vmatprep.subr.bf16.mxu0 %v5936
  %6134 = vmatpush1.bf16.msra.mxu0 %v5935
  %6135 = vmatprep.subr.bf16.mxu0 %v5934
  %6136 = vmatpush1.bf16.msra.mxu0 %v5933
  %6137 = vmatprep.subr.bf16.mxu0 %v5932
  %6138 = vmatpush1.bf16.msra.mxu0 %v5931
  %6139 = vmatprep.subr.bf16.mxu0 %v5930
  %6140 = vmatpush1.bf16.msra.mxu0 %v5929
  %6141 = vmatprep.subr.bf16.mxu0 0
  %6142 = vmatpush2.bf16.msra.mxu0 0
  %6143 = vmatprep.subr.bf16.mxu0 0
  %6144 = vmatpush2.bf16.msra.mxu0 0
  %6145 = vmatprep.subr.bf16.mxu0 0
  %6146 = vmatpush2.bf16.msra.mxu0 0
  %6147 = vmatprep.subr.bf16.mxu0 0
  %6148 = vmatpush2.bf16.msra.mxu0 0
  %6149 = vmatprep.subr.bf16.mxu0 0
  %6150 = vmatpush2.bf16.msra.mxu0 0
  %6151 = vmatprep.subr.bf16.mxu0 0
  %6152 = vmatpush2.bf16.msra.mxu0 0
  %6153 = vmatprep.subr.bf16.mxu0 0
  %6154 = vmatpush2.bf16.msra.mxu0 0
  %6155 = vmatprep.subr.bf16.mxu0 0
  %6156 = vmatpush2.bf16.msra.mxu0 0
  %6157 = vmatprep.mubr.bf16.mxu0 0
  %6158 = vmatmul.mubr.bf16.gmra.mxu0 %v6124
  %v6159 = vpop.f32.mrf.mxu0
  %v6160 = vadd.f32 0.0, %v6159
  %v6161 = vpop.f32.mrf.mxu0
  %v6162 = vadd.f32 0.0, %v6161
  %v6163 = vpop.f32.mrf.mxu0
  %v6164 = vpop.f32.mrf.mxu0
  %6165 = vdwg.mxu0
  %s6166 = scalar_lea.vmem %s7, 6
  %v6167 = vld [vmem:[%s6166] sm:$0x3]
  %v6169 = vlaneseq
  %v6170 = vshrl.u32 %v6169, 7
  %v6171 = vsub.s32 0, %v6170
  %v6172 = vrot.slane %v6167, %v6171
  %v6173 = vlaneseq
  %v6174 = vshrl.u32 %v6173, 7
  %v6175 = vsub.s32 1, %v6174
  %v6176 = vrot.slane %v6167, %v6175
  %v6179 = vmul.f32 %v6160, %v6172
  %v6180 = vmul.f32 %v6162, %v6176
  %v6181 = vadd.f32 %v6121, %v6179
  %v6182 = vadd.f32 %v6122, %v6180
  %s6183 = scalar_lea.vmem %s6, 4
  %v6184 = vld [vmem:[%s6183] sm:$0x1]
  %6185 = vmatprep.subr.bf16.mxu0 %v5944
  %6186 = vmatpush1.bf16.msra.mxu0 %v5943
  %6187 = vmatprep.subr.bf16.mxu0 %v5942
  %6188 = vmatpush1.bf16.msra.mxu0 %v5941
  %6189 = vmatprep.subr.bf16.mxu0 %v5940
  %6190 = vmatpush1.bf16.msra.mxu0 %v5939
  %6191 = vmatprep.subr.bf16.mxu0 %v5938
  %6192 = vmatpush1.bf16.msra.mxu0 %v5937
  %6193 = vmatprep.subr.bf16.mxu0 %v5936
  %6194 = vmatpush1.bf16.msra.mxu0 %v5935
  %6195 = vmatprep.subr.bf16.mxu0 %v5934
  %6196 = vmatpush1.bf16.msra.mxu0 %v5933
  %6197 = vmatprep.subr.bf16.mxu0 %v5932
  %6198 = vmatpush1.bf16.msra.mxu0 %v5931
  %6199 = vmatprep.subr.bf16.mxu0 %v5930
  %6200 = vmatpush1.bf16.msra.mxu0 %v5929
  %6201 = vmatprep.subr.bf16.mxu0 0
  %6202 = vmatpush2.bf16.msra.mxu0 0
  %6203 = vmatprep.subr.bf16.mxu0 0
  %6204 = vmatpush2.bf16.msra.mxu0 0
  %6205 = vmatprep.subr.bf16.mxu0 0
  %6206 = vmatpush2.bf16.msra.mxu0 0
  %6207 = vmatprep.subr.bf16.mxu0 0
  %6208 = vmatpush2.bf16.msra.mxu0 0
  %6209 = vmatprep.subr.bf16.mxu0 0
  %6210 = vmatpush2.bf16.msra.mxu0 0
  %6211 = vmatprep.subr.bf16.mxu0 0
  %6212 = vmatpush2.bf16.msra.mxu0 0
  %6213 = vmatprep.subr.bf16.mxu0 0
  %6214 = vmatpush2.bf16.msra.mxu0 0
  %6215 = vmatprep.subr.bf16.mxu0 0
  %6216 = vmatpush2.bf16.msra.mxu0 0
  %6217 = vmatprep.mubr.bf16.mxu0 0
  %6218 = vmatmul.mubr.bf16.gmra.mxu0 %v6184
  %v6219 = vpop.f32.mrf.mxu0
  %v6220 = vadd.f32 0.0, %v6219
  %v6221 = vpop.f32.mrf.mxu0
  %v6222 = vadd.f32 0.0, %v6221
  %v6223 = vpop.f32.mrf.mxu0
  %v6224 = vpop.f32.mrf.mxu0
  %6225 = vdwg.mxu0
  %s6226 = scalar_lea.vmem %s7, 8
  %v6227 = vld [vmem:[%s6226] sm:$0x3]
  %v6229 = vlaneseq
  %v6230 = vshrl.u32 %v6229, 7
  %v6231 = vsub.s32 0, %v6230
  %v6232 = vrot.slane %v6227, %v6231
  %v6233 = vlaneseq
  %v6234 = vshrl.u32 %v6233, 7
  %v6235 = vsub.s32 1, %v6234
  %v6236 = vrot.slane %v6227, %v6235
  %v6239 = vmul.f32 %v6220, %v6232
  %v6240 = vmul.f32 %v6222, %v6236
  %v6241 = vadd.f32 %v6181, %v6239
  %v6242 = vadd.f32 %v6182, %v6240
  %s6243 = scalar_lea.vmem %s6, 5
  %v6244 = vld [vmem:[%s6243] sm:$0x1]
  %6245 = vmatprep.subr.bf16.mxu0 %v5944
  %6246 = vmatpush1.bf16.msra.mxu0 %v5943
  %6247 = vmatprep.subr.bf16.mxu0 %v5942
  %6248 = vmatpush1.bf16.msra.mxu0 %v5941
  %6249 = vmatprep.subr.bf16.mxu0 %v5940
  %6250 = vmatpush1.bf16.msra.mxu0 %v5939
  %6251 = vmatprep.subr.bf16.mxu0 %v5938
  %6252 = vmatpush1.bf16.msra.mxu0 %v5937
  %6253 = vmatprep.subr.bf16.mxu0 %v5936
  %6254 = vmatpush1.bf16.msra.mxu0 %v5935
  %6255 = vmatprep.subr.bf16.mxu0 %v5934
  %6256 = vmatpush1.bf16.msra.mxu0 %v5933
  %6257 = vmatprep.subr.bf16.mxu0 %v5932
  %6258 = vmatpush1.bf16.msra.mxu0 %v5931
  %6259 = vmatprep.subr.bf16.mxu0 %v5930
  %6260 = vmatpush1.bf16.msra.mxu0 %v5929
  %6261 = vmatprep.subr.bf16.mxu0 0
  %6262 = vmatpush2.bf16.msra.mxu0 0
  %6263 = vmatprep.subr.bf16.mxu0 0
  %6264 = vmatpush2.bf16.msra.mxu0 0
  %6265 = vmatprep.subr.bf16.mxu0 0
  %6266 = vmatpush2.bf16.msra.mxu0 0
  %6267 = vmatprep.subr.bf16.mxu0 0
  %6268 = vmatpush2.bf16.msra.mxu0 0
  %6269 = vmatprep.subr.bf16.mxu0 0
  %6270 = vmatpush2.bf16.msra.mxu0 0
  %6271 = vmatprep.subr.bf16.mxu0 0
  %6272 = vmatpush2.bf16.msra.mxu0 0
  %6273 = vmatprep.subr.bf16.mxu0 0
  %6274 = vmatpush2.bf16.msra.mxu0 0
  %6275 = vmatprep.subr.bf16.mxu0 0
  %6276 = vmatpush2.bf16.msra.mxu0 0
  %6277 = vmatprep.mubr.bf16.mxu0 0
  %6278 = vmatmul.mubr.bf16.gmra.mxu0 %v6244
  %v6279 = vpop.f32.mrf.mxu0
  %v6280 = vadd.f32 0.0, %v6279
  %v6281 = vpop.f32.mrf.mxu0
  %v6282 = vadd.f32 0.0, %v6281
  %v6283 = vpop.f32.mrf.mxu0
  %v6284 = vpop.f32.mrf.mxu0
  %6285 = vdwg.mxu0
  %s6286 = scalar_lea.vmem %s7, 10
  %v6287 = vld [vmem:[%s6286] sm:$0x3]
  %v6289 = vlaneseq
  %v6290 = vshrl.u32 %v6289, 7
  %v6291 = vsub.s32 0, %v6290
  %v6292 = vrot.slane %v6287, %v6291
  %v6293 = vlaneseq
  %v6294 = vshrl.u32 %v6293, 7
  %v6295 = vsub.s32 1, %v6294
  %v6296 = vrot.slane %v6287, %v6295
  %v6299 = vmul.f32 %v6280, %v6292
  %v6300 = vmul.f32 %v6282, %v6296
  %v6301 = vadd.f32 %v6241, %v6299
  %v6302 = vadd.f32 %v6242, %v6300
  %s6303 = scalar_lea.vmem %s6, 6
  %v6304 = vld [vmem:[%s6303] sm:$0x1]
  %6305 = vmatprep.subr.bf16.mxu0 %v5944
  %6306 = vmatpush1.bf16.msra.mxu0 %v5943
  %6307 = vmatprep.subr.bf16.mxu0 %v5942
  %6308 = vmatpush1.bf16.msra.mxu0 %v5941
  %6309 = vmatprep.subr.bf16.mxu0 %v5940
  %6310 = vmatpush1.bf16.msra.mxu0 %v5939
  %6311 = vmatprep.subr.bf16.mxu0 %v5938
  %6312 = vmatpush1.bf16.msra.mxu0 %v5937
  %6313 = vmatprep.subr.bf16.mxu0 %v5936
  %6314 = vmatpush1.bf16.msra.mxu0 %v5935
  %6315 = vmatprep.subr.bf16.mxu0 %v5934
  %6316 = vmatpush1.bf16.msra.mxu0 %v5933
  %6317 = vmatprep.subr.bf16.mxu0 %v5932
  %6318 = vmatpush1.bf16.msra.mxu0 %v5931
  %6319 = vmatprep.subr.bf16.mxu0 %v5930
  %6320 = vmatpush1.bf16.msra.mxu0 %v5929
  %6321 = vmatprep.subr.bf16.mxu0 0
  %6322 = vmatpush2.bf16.msra.mxu0 0
  %6323 = vmatprep.subr.bf16.mxu0 0
  %6324 = vmatpush2.bf16.msra.mxu0 0
  %6325 = vmatprep.subr.bf16.mxu0 0
  %6326 = vmatpush2.bf16.msra.mxu0 0
  %6327 = vmatprep.subr.bf16.mxu0 0
  %6328 = vmatpush2.bf16.msra.mxu0 0
  %6329 = vmatprep.subr.bf16.mxu0 0
  %6330 = vmatpush2.bf16.msra.mxu0 0
  %6331 = vmatprep.subr.bf16.mxu0 0
  %6332 = vmatpush2.bf16.msra.mxu0 0
  %6333 = vmatprep.subr.bf16.mxu0 0
  %6334 = vmatpush2.bf16.msra.mxu0 0
  %6335 = vmatprep.subr.bf16.mxu0 0
  %6336 = vmatpush2.bf16.msra.mxu0 0
  %6337 = vmatprep.mubr.bf16.mxu0 0
  %6338 = vmatmul.mubr.bf16.gmra.mxu0 %v6304
  %v6339 = vpop.f32.mrf.mxu0
  %v6340 = vadd.f32 0.0, %v6339
  %v6341 = vpop.f32.mrf.mxu0
  %v6342 = vadd.f32 0.0, %v6341
  %v6343 = vpop.f32.mrf.mxu0
  %v6344 = vpop.f32.mrf.mxu0
  %6345 = vdwg.mxu0
  %s6346 = scalar_lea.vmem %s7, 12
  %v6347 = vld [vmem:[%s6346] sm:$0x3]
  %v6349 = vlaneseq
  %v6350 = vshrl.u32 %v6349, 7
  %v6351 = vsub.s32 0, %v6350
  %v6352 = vrot.slane %v6347, %v6351
  %v6353 = vlaneseq
  %v6354 = vshrl.u32 %v6353, 7
  %v6355 = vsub.s32 1, %v6354
  %v6356 = vrot.slane %v6347, %v6355
  %v6359 = vmul.f32 %v6340, %v6352
  %v6360 = vmul.f32 %v6342, %v6356
  %v6361 = vadd.f32 %v6301, %v6359
  %v6362 = vadd.f32 %v6302, %v6360
  %s6363 = scalar_lea.vmem %s6, 7
  %v6364 = vld [vmem:[%s6363] sm:$0x1]
  %6365 = vmatprep.subr.bf16.mxu0 %v5944
  %6366 = vmatpush1.bf16.msra.mxu0 %v5943
  %6367 = vmatprep.subr.bf16.mxu0 %v5942
  %6368 = vmatpush1.bf16.msra.mxu0 %v5941
  %6369 = vmatprep.subr.bf16.mxu0 %v5940
  %6370 = vmatpush1.bf16.msra.mxu0 %v5939
  %6371 = vmatprep.subr.bf16.mxu0 %v5938
  %6372 = vmatpush1.bf16.msra.mxu0 %v5937
  %6373 = vmatprep.subr.bf16.mxu0 %v5936
  %6374 = vmatpush1.bf16.msra.mxu0 %v5935
  %6375 = vmatprep.subr.bf16.mxu0 %v5934
  %6376 = vmatpush1.bf16.msra.mxu0 %v5933
  %6377 = vmatprep.subr.bf16.mxu0 %v5932
  %6378 = vmatpush1.bf16.msra.mxu0 %v5931
  %6379 = vmatprep.subr.bf16.mxu0 %v5930
  %6380 = vmatpush1.bf16.msra.mxu0 %v5929
  %6381 = vmatprep.subr.bf16.mxu0 0
  %6382 = vmatpush2.bf16.msra.mxu0 0
  %6383 = vmatprep.subr.bf16.mxu0 0
  %6384 = vmatpush2.bf16.msra.mxu0 0
  %6385 = vmatprep.subr.bf16.mxu0 0
  %6386 = vmatpush2.bf16.msra.mxu0 0
  %6387 = vmatprep.subr.bf16.mxu0 0
  %6388 = vmatpush2.bf16.msra.mxu0 0
  %6389 = vmatprep.subr.bf16.mxu0 0
  %6390 = vmatpush2.bf16.msra.mxu0 0
  %6391 = vmatprep.subr.bf16.mxu0 0
  %6392 = vmatpush2.bf16.msra.mxu0 0
  %6393 = vmatprep.subr.bf16.mxu0 0
  %6394 = vmatpush2.bf16.msra.mxu0 0
  %6395 = vmatprep.subr.bf16.mxu0 0
  %6396 = vmatpush2.bf16.msra.mxu0 0
  %6397 = vmatprep.mubr.bf16.mxu0 0
  %6398 = vmatmul.mubr.bf16.gmra.mxu0 %v6364
  %v6399 = vpop.f32.mrf.mxu0
  %v6400 = vadd.f32 0.0, %v6399
  %v6401 = vpop.f32.mrf.mxu0
  %v6402 = vadd.f32 0.0, %v6401
  %v6403 = vpop.f32.mrf.mxu0
  %v6404 = vpop.f32.mrf.mxu0
  %6405 = vdwg.mxu0
  %s6406 = scalar_lea.vmem %s7, 14
  %v6407 = vld [vmem:[%s6406] sm:$0x3]
  %v6409 = vlaneseq
  %v6410 = vshrl.u32 %v6409, 7
  %v6411 = vsub.s32 0, %v6410
  %v6412 = vrot.slane %v6407, %v6411
  %v6413 = vlaneseq
  %v6414 = vshrl.u32 %v6413, 7
  %v6415 = vsub.s32 1, %v6414
  %v6416 = vrot.slane %v6407, %v6415
  %v6419 = vmul.f32 %v6400, %v6412
  %v6420 = vmul.f32 %v6402, %v6416
  %v6421 = vadd.f32 %v6361, %v6419
  %v6422 = vadd.f32 %v6362, %v6420
  %s6423 = scalar_lea.vmem %s6, 8
  %v6424 = vld [vmem:[%s6423] sm:$0x1]
  %6425 = vmatprep.subr.bf16.mxu0 %v5944
  %6426 = vmatpush1.bf16.msra.mxu0 %v5943
  %6427 = vmatprep.subr.bf16.mxu0 %v5942
  %6428 = vmatpush1.bf16.msra.mxu0 %v5941
  %6429 = vmatprep.subr.bf16.mxu0 %v5940
  %6430 = vmatpush1.bf16.msra.mxu0 %v5939
  %6431 = vmatprep.subr.bf16.mxu0 %v5938
  %6432 = vmatpush1.bf16.msra.mxu0 %v5937
  %6433 = vmatprep.subr.bf16.mxu0 %v5936
  %6434 = vmatpush1.bf16.msra.mxu0 %v5935
  %6435 = vmatprep.subr.bf16.mxu0 %v5934
  %6436 = vmatpush1.bf16.msra.mxu0 %v5933
  %6437 = vmatprep.subr.bf16.mxu0 %v5932
  %6438 = vmatpush1.bf16.msra.mxu0 %v5931
  %6439 = vmatprep.subr.bf16.mxu0 %v5930
  %6440 = vmatpush1.bf16.msra.mxu0 %v5929
  %6441 = vmatprep.subr.bf16.mxu0 0
  %6442 = vmatpush2.bf16.msra.mxu0 0
  %6443 = vmatprep.subr.bf16.mxu0 0
  %6444 = vmatpush2.bf16.msra.mxu0 0
  %6445 = vmatprep.subr.bf16.mxu0 0
  %6446 = vmatpush2.bf16.msra.mxu0 0
  %6447 = vmatprep.subr.bf16.mxu0 0
  %6448 = vmatpush2.bf16.msra.mxu0 0
  %6449 = vmatprep.subr.bf16.mxu0 0
  %6450 = vmatpush2.bf16.msra.mxu0 0
  %6451 = vmatprep.subr.bf16.mxu0 0
  %6452 = vmatpush2.bf16.msra.mxu0 0
  %6453 = vmatprep.subr.bf16.mxu0 0
  %6454 = vmatpush2.bf16.msra.mxu0 0
  %6455 = vmatprep.subr.bf16.mxu0 0
  %6456 = vmatpush2.bf16.msra.mxu0 0
  %6457 = vmatprep.mubr.bf16.mxu0 0
  %6458 = vmatmul.mubr.bf16.gmra.mxu0 %v6424
  %v6459 = vpop.f32.mrf.mxu0
  %v6460 = vadd.f32 0.0, %v6459
  %v6461 = vpop.f32.mrf.mxu0
  %v6462 = vadd.f32 0.0, %v6461
  %v6463 = vpop.f32.mrf.mxu0
  %v6464 = vpop.f32.mrf.mxu0
  %6465 = vdwg.mxu0
  %s6466 = scalar_lea.vmem %s7, 16
  %v6467 = vld [vmem:[%s6466] sm:$0x3]
  %v6469 = vlaneseq
  %v6470 = vshrl.u32 %v6469, 7
  %v6471 = vsub.s32 0, %v6470
  %v6472 = vrot.slane %v6467, %v6471
  %v6473 = vlaneseq
  %v6474 = vshrl.u32 %v6473, 7
  %v6475 = vsub.s32 1, %v6474
  %v6476 = vrot.slane %v6467, %v6475
  %v6479 = vmul.f32 %v6460, %v6472
  %v6480 = vmul.f32 %v6462, %v6476
  %v6481 = vadd.f32 %v6421, %v6479
  %v6482 = vadd.f32 %v6422, %v6480
  %v6483 = vsel %vm1373, %v6481, 0.0
  %v6484 = vsel %vm1373, %v6482, 0.0
  %v6485 = vadd.f32 %v6483, %v6484
  %6486 = vadd.xlane.f32.xlu0 %v6485
  %v6487 = vpop.xlane.xlu0 %6486
  %v6488 = vld [vmem:[#allocation2] sm:$0x1]
  %v6490 = vlaneseq
  %v6491 = vshrl.u32 %v6490, 7
  %v6492 = vsub.s32 0, %v6491
  %v6493 = vrot.slane %v6488, %v6492
  %v6495 = vadd.f32 %v6487, %v6493
  %vm6496 = vcmask 1024
  %6497 = vst.msk [vmem:[%s9] sm:$0x3] %vm6496, %v6495
  // Predicated region
  $region38: #{qnet_forward.1} parent=0 // pred_check
    _
  $region39: #{qnet_forward.1} parent=0 // pred_check_branch
    %6499 = sbr.rel (0) target = $region41
  $region40: #{qnet_forward.1} parent=0 // pred_region
    _
  $region41: #{qnet_forward.1} parent=0 // pred_fallthru
    _
  // Predicated region
  $region42: #{qnet_forward.1} parent=0 // pred_check
    _
  $region43: #{qnet_forward.1} parent=0 // pred_check_branch
    %6501 = sbr.rel (0) target = $region45
  $region44: #{qnet_forward.1} parent=0 // pred_region
    _
  $region45: #{qnet_forward.1} parent=0 // pred_fallthru
    _

</llo_original>
